<compile_context>
chip_gen: v7x
topology: tpu7x:2x2x1
jax: 0.10.0
libtpu: 0.0.40
codegen_flags: <defaults>
</compile_context>

<pallas_src>
import functools

import jax
import jax.numpy as jnp
from jax.experimental import pallas as pl
from jax.experimental.pallas import tpu as pltpu


def _round_up(v, m):
    return ((v + m - 1) // m) * m


def _pick_b_tile(n):
    # Batch several images per grid step to amortize the ~0.35us per-step overhead,
    # but keep the grid length >= 2 so both v7x TensorCores get work.
    for bt in (4, 2, 1):
        if n % bt == 0 and n // bt >= 2:
            return bt
    return 1


def _make_fused_kernel(B_TILE, KH, KW, OH, OW, PH, OWF, sh, ph, pw,
                       Cin_p, K_used, Kp, Cp, Hrows, Wcols):
    """conv (single im2col matmul) + folded bias/BN + ReLU + HxW max-pool, B_TILE imgs/step."""
    M_img = OH * OW

    def kernel(xp_ref, w_ref, shift_ref, out_ref, im2col_ref, hpad_ref, wpad_ref):
        # ---- build the im2col patch in a bf16 VMEM scratch: Cin_p lanes per tap ----
        if Kp > K_used:  # zero the K-padding lanes (matching weight rows are zero too)
            im2col_ref[:, K_used:] = jnp.zeros((B_TILE * M_img, Kp - K_used), jnp.bfloat16)
        for b in range(B_TILE):
            r0 = b * M_img
            for kh in range(KH):
                for kw in range(KW):
                    c0 = (kh * KW + kw) * Cin_p
                    patch = xp_ref[b, kh:kh + OH, kw:kw + OW, :].reshape(M_img, Cin_p)
                    im2col_ref[r0:r0 + M_img, c0:c0 + Cin_p] = patch

        # ---- conv as ONE full-depth MXU matmul (bf16 operands, f32 accumulate) ----
        acc = jnp.dot(im2col_ref[...], w_ref[...], preferred_element_type=jnp.float32)

        # ---- -inf only on the pool-scratch borders (interiors are rewritten per image) ----
        if ph > 0:
            hpad_ref[:ph, :, :] = jnp.full((ph, OW, Cp), -jnp.inf, jnp.float32)
        if Hrows - ph - OH > 0:
            hpad_ref[ph + OH:, :, :] = jnp.full((Hrows - ph - OH, OW, Cp), -jnp.inf,
                                                jnp.float32)
        if pw > 0:
            wpad_ref[:, :pw, :] = jnp.full((PH, pw, Cp), -jnp.inf, jnp.float32)
        if Wcols - pw - OW > 0:
            wpad_ref[:, pw + OW:, :] = jnp.full((PH, Wcols - pw - OW, Cp), -jnp.inf,
                                                jnp.float32)

        # ---- per-image epilogue + pooling (bounds live vregs to one image slab) ----
        for b in range(B_TILE):
            r0 = b * M_img
            y = acc[r0:r0 + M_img, :] + shift_ref[...]     # folded conv-bias + BN shift
            relu = jnp.maximum(y, 0.0).reshape(OH, OW, Cp)

            # H-direction max-pool: unrolled VPU maxima; the stride-sh subsample is a
            # free reshape/index on a major (non-layout) axis.
            hpad_ref[ph:ph + OH, :, :] = relu
            rowpool = None
            for kh in range(KH):
                v = hpad_ref[kh:kh + PH * sh, :, :].reshape(PH, sh, OW, Cp)[:, 0]
                rowpool = v if rowpool is None else jnp.maximum(rowpool, v)

            # W-direction max at stride 1 over -inf padded columns (contiguous sublane
            # slices only); the stride-sw subsample of the OWF columns is done in XLA.
            wpad_ref[:, pw:pw + OW, :] = rowpool
            wmax = None
            for kw in range(KW):
                v = wpad_ref[:, kw:kw + OWF, :]
                wmax = v if wmax is None else jnp.maximum(wmax, v)
            out_ref[b, :, :, :] = wmax                      # lane-dense (Cp=128) store

    return kernel


def conv_layer_forward(x_nchw, params, conv_size, stride, eps=1e-5):
    w, b, gamma, beta, running_mean, running_var = params
    N, Cin, H, W = x_nchw.shape
    Cout = w.shape[0]
    KH, KW = conv_size
    ph, pw = KH // 2, KW // 2
    sh, sw = stride

    # conv: stride [1,1], padding conv_size//2 (per nn.Conv2d in ConvLayer)
    OH = H + 2 * ph - KH + 1
    OW = W + 2 * pw - KW + 1
    # maxpool: kernel conv_size, stride `stride`, padding conv_size//2
    PH = (OH + 2 * ph - KH) // sh + 1
    PW = (OW + 2 * pw - KW) // sw + 1
    OWF = OW + 2 * pw - KW + 1        # stride-1 W-pool width; PW strided cols of it

    # TPU-friendly paddings, confined to the pallas_call boundary
    Cin_p = _round_up(Cin, 8)
    Cp = _round_up(max(Cout, 128), 128)
    K_used = KH * KW * Cin_p
    Kp = _round_up(max(K_used, 128), 128)
    Hp = H + 2 * ph
    Wp = _round_up(W + 2 * pw, 8)
    Hrows = max(OH + 2 * ph, KH - 1 + PH * sh)
    Wcols = OW + 2 * pw

    B_TILE = _pick_b_tile(N)
    M_img = OH * OW

    # input: NCHW -> NHWC, spatial + channel zero-pad, single bf16 cast at the boundary
    x = jnp.transpose(x_nchw, (0, 2, 3, 1)).astype(jnp.float32)
    xp = jnp.pad(x, ((0, 0), (ph, ph), (pw, Wp - W - pw),
                     (0, Cin_p - Cin))).astype(jnp.bfloat16)

    # weights: torch (Cout, Cin, KH, KW) -> im2col-ordered (Kp, Cp) slab with the
    # eval-mode BN scale folded in (fold in f32, then cast to bf16)
    scale = gamma / jnp.sqrt(running_var + eps)
    shift = scale * (b - running_mean) + beta
    w_t = jnp.transpose(w, (2, 3, 1, 0)) * scale[None, None, None, :]   # (KH,KW,Cin,Cout)
    w_t = jnp.pad(w_t, ((0, 0), (0, 0), (0, Cin_p - Cin), (0, Cp - Cout)))
    w_mat = jnp.pad(w_t.reshape(K_used, Cp),
                    ((0, Kp - K_used), (0, 0))).astype(jnp.bfloat16)
    shift_p = jnp.pad(shift, (0, Cp - Cout)).reshape(1, Cp).astype(jnp.float32)

    kernel = _make_fused_kernel(B_TILE, KH, KW, OH, OW, PH, OWF, sh, ph, pw,
                                Cin_p, K_used, Kp, Cp, Hrows, Wcols)

    out_full = pl.pallas_call(
        kernel,
        out_shape=jax.ShapeDtypeStruct((N, PH, OWF, Cp), jnp.float32),
        grid=(N // B_TILE,),
        in_specs=[
            pl.BlockSpec((B_TILE, Hp, Wp, Cin_p), lambda n: (n, 0, 0, 0)),
            pl.BlockSpec((Kp, Cp), lambda n: (0, 0)),        # resident weights
            pl.BlockSpec((1, Cp), lambda n: (0, 0)),         # resident shift
        ],
        out_specs=pl.BlockSpec((B_TILE, PH, OWF, Cp), lambda n: (n, 0, 0, 0)),
        scratch_shapes=[
            pltpu.VMEM((B_TILE * M_img, Kp), jnp.bfloat16),  # im2col patch
            pltpu.VMEM((Hrows, OW, Cp), jnp.float32),        # -inf bordered rows (H pool)
            pltpu.VMEM((PH, Wcols, Cp), jnp.float32),        # -inf bordered cols (W pool)
        ],
        compiler_params=pltpu.CompilerParams(
            dimension_semantics=("parallel",),
            vmem_limit_bytes=32 * 1024 * 1024),
    )(xp, w_mat, shift_p)

    # cheap XLA tail: stride-sw W subsample, drop channel lane-padding, back to NCHW
    pooled = out_full[:, :, ::sw, :Cout]              # (N, PH, PW, Cout)
    # dropout: eval mode -> identity
    return jnp.transpose(pooled, (0, 3, 1, 2))        # (N, Cout, PH, PW)


def _reference_forward(x, params, conv_size, stride, eps=1e-5):
    """Pure-JAX/XLA reference of the ConvLayer forward (eval mode)."""
    w, b, gamma, beta, mean, var = params
    KH, KW = conv_size
    ph, pw = KH // 2, KW // 2
    sh, sw = stride
    conv = jax.lax.conv_general_dilated(
        x, w, window_strides=(1, 1), padding=[(ph, ph), (pw, pw)],
        dimension_numbers=("NCHW", "OIHW", "NCHW"),
        precision=jax.lax.Precision.HIGHEST)
    conv = conv + b[None, :, None, None]
    bn = (conv - mean[None, :, None, None]) / jnp.sqrt(var[None, :, None, None] + eps)
    bn = bn * gamma[None, :, None, None] + beta[None, :, None, None]
    relu = jnp.maximum(bn, 0.0)
    pooled = jax.lax.reduce_window(
        relu, -jnp.inf, jax.lax.max,
        window_dimensions=(1, 1, KH, KW), window_strides=(1, 1, sh, sw),
        padding=((0, 0), (0, 0), (ph, ph), (pw, pw)))
    return pooled


if __name__ == "__main__":
    key = jax.random.PRNGKey(0)
    N, Cin, H, W = 2, 4, 16, 16
    Cout = 8
    conv_size = [3, 3]
    stride = [2, 2]

    ks = jax.random.split(key, 7)
    x = jax.random.normal(ks[0], (N, Cin, H, W), jnp.float32)

    # deterministic parameter init (shapes from nn.Conv2d / nn.BatchNorm2d)
    fan_in = Cin * conv_size[0] * conv_size[1]
    bound = 1.0 / (fan_in ** 0.5)
    w = jax.random.uniform(ks[1], (Cout, Cin, conv_size[0], conv_size[1]),
                           jnp.float32, -bound, bound)
    b = jax.random.uniform(ks[2], (Cout,), jnp.float32, -bound, bound)
    gamma = jax.random.uniform(ks[3], (Cout,), jnp.float32, 0.5, 1.5)
    beta = 0.1 * jax.random.normal(ks[4], (Cout,), jnp.float32)
    running_mean = 0.1 * jax.random.normal(ks[5], (Cout,), jnp.float32)
    running_var = 0.5 + jax.random.uniform(ks[6], (Cout,), jnp.float32)
    params = (w, b, gamma, beta, running_mean, running_var)

    fwd = jax.jit(functools.partial(conv_layer_forward,
                                    conv_size=conv_size, stride=stride))
    out = fwd(x, params)
    jax.block_until_ready(out)

    # conv keeps 16x16 (stride 1, same padding); maxpool(3, stride 2, pad 1) -> 8x8
    assert out.shape == (N, Cout, 8, 8), out.shape

    # numerical check vs pure-JAX reference
    # (relaxed tol: bf16 MXU operands with f32 accumulate; BN scale folded into weights)
    ref = _reference_forward(x, params, conv_size, stride)
    max_err = float(jnp.max(jnp.abs(out - ref)))
    assert max_err < 1e-1, f"max abs error vs reference: {max_err}"
    print("KERNEL_OK")
</pallas_src>

<mosaic_0001>
module attributes {stable_mosaic.version = 11 : i64} {
  func.func @kernel(%arg0: i32, %arg1: memref<1x18x24x8xbf16, #tpu.memory_space<vmem>>, %arg2: memref<128x128xbf16, #tpu.memory_space<vmem>>, %arg3: memref<1x128xf32, #tpu.memory_space<vmem>>, %arg4: memref<1x8x16x128xf32, #tpu.memory_space<vmem>>, %arg5: memref<256x128xbf16, #tpu.memory_space<vmem>>, %arg6: memref<18x16x128xf32, #tpu.memory_space<vmem>>, %arg7: memref<8x18x128xf32, #tpu.memory_space<vmem>>) attributes {dimension_semantics = [#tpu.dimension_semantics<parallel>], iteration_bounds = array<i64: 2>, scalar_prefetch = 0 : i64, scratch_operands = 3 : i64, tpu.core_type = #tpu.core_type<tc>, window_params = [{transform_indices = @transform_0, window_bounds = array<i64: 1, 18, 24, 8>}, {pipeline_mode = #tpu.pipeline_mode<synchronous>, transform_indices = @transform_1, window_bounds = array<i64: 128, 128>}, {pipeline_mode = #tpu.pipeline_mode<synchronous>, transform_indices = @transform_2, window_bounds = array<i64: 1, 128>}, {transform_indices = @transform_3, window_bounds = array<i64: 1, 8, 16, 128>}]} {
    %cst = arith.constant 0.000000e+00 : bf16
    %0 = vector.broadcast %cst : bf16 to vector<256x56xbf16>
    %c0 = arith.constant 0 : index
    %c72 = arith.constant 72 : index
    %1 = vector.load %arg5[%c0, %c72] : memref<256x128xbf16, #tpu.memory_space<vmem>>, vector<256x56xbf16>
    tpu.vector_store %arg5[%c0, %c72], %0 {strides = array<i32>} : memref<256x128xbf16, #tpu.memory_space<vmem>>, vector<256x56xbf16>,
    %c0_0 = arith.constant 0 : index
    %c0_1 = arith.constant 0 : index
    %c0_2 = arith.constant 0 : index
    %c0_3 = arith.constant 0 : index
    %2 = vector.load %arg1[%c0_0, %c0_1, %c0_2, %c0_3] : memref<1x18x24x8xbf16, #tpu.memory_space<vmem>>, vector<1x16x16x8xbf16>
    %3 = vector.shape_cast %2 : vector<1x16x16x8xbf16> to vector<16x16x8xbf16>
    %4 = vector.shape_cast %3 : vector<16x16x8xbf16> to vector<256x8xbf16>
    %c0_4 = arith.constant 0 : index
    %c0_5 = arith.constant 0 : index
    %5 = vector.load %arg5[%c0_4, %c0_5] : memref<256x128xbf16, #tpu.memory_space<vmem>>, vector<256x8xbf16>
    tpu.vector_store %arg5[%c0_4, %c0_5], %4 {strides = array<i32>} : memref<256x128xbf16, #tpu.memory_space<vmem>>, vector<256x8xbf16>,
    %c0_6 = arith.constant 0 : index
    %c0_7 = arith.constant 0 : index
    %c1 = arith.constant 1 : index
    %c0_8 = arith.constant 0 : index
    %6 = vector.load %arg1[%c0_6, %c0_7, %c1, %c0_8] : memref<1x18x24x8xbf16, #tpu.memory_space<vmem>>, vector<1x16x16x8xbf16>
    %7 = vector.shape_cast %6 : vector<1x16x16x8xbf16> to vector<16x16x8xbf16>
    %8 = vector.shape_cast %7 : vector<16x16x8xbf16> to vector<256x8xbf16>
    %c0_9 = arith.constant 0 : index
    %c8 = arith.constant 8 : index
    %9 = vector.load %arg5[%c0_9, %c8] : memref<256x128xbf16, #tpu.memory_space<vmem>>, vector<256x8xbf16>
    tpu.vector_store %arg5[%c0_9, %c8], %8 {strides = array<i32>} : memref<256x128xbf16, #tpu.memory_space<vmem>>, vector<256x8xbf16>,
    %c0_10 = arith.constant 0 : index
    %c0_11 = arith.constant 0 : index
    %c2 = arith.constant 2 : index
    %c0_12 = arith.constant 0 : index
    %10 = vector.load %arg1[%c0_10, %c0_11, %c2, %c0_12] : memref<1x18x24x8xbf16, #tpu.memory_space<vmem>>, vector<1x16x16x8xbf16>
    %11 = vector.shape_cast %10 : vector<1x16x16x8xbf16> to vector<16x16x8xbf16>
    %12 = vector.shape_cast %11 : vector<16x16x8xbf16> to vector<256x8xbf16>
    %c0_13 = arith.constant 0 : index
    %c16 = arith.constant 16 : index
    %13 = vector.load %arg5[%c0_13, %c16] : memref<256x128xbf16, #tpu.memory_space<vmem>>, vector<256x8xbf16>
    tpu.vector_store %arg5[%c0_13, %c16], %12 {strides = array<i32>} : memref<256x128xbf16, #tpu.memory_space<vmem>>, vector<256x8xbf16>,
    %c0_14 = arith.constant 0 : index
    %c1_15 = arith.constant 1 : index
    %c0_16 = arith.constant 0 : index
    %c0_17 = arith.constant 0 : index
    %14 = vector.load %arg1[%c0_14, %c1_15, %c0_16, %c0_17] : memref<1x18x24x8xbf16, #tpu.memory_space<vmem>>, vector<1x16x16x8xbf16>
    %15 = vector.shape_cast %14 : vector<1x16x16x8xbf16> to vector<16x16x8xbf16>
    %16 = vector.shape_cast %15 : vector<16x16x8xbf16> to vector<256x8xbf16>
    %c0_18 = arith.constant 0 : index
    %c24 = arith.constant 24 : index
    %17 = vector.load %arg5[%c0_18, %c24] : memref<256x128xbf16, #tpu.memory_space<vmem>>, vector<256x8xbf16>
    tpu.vector_store %arg5[%c0_18, %c24], %16 {strides = array<i32>} : memref<256x128xbf16, #tpu.memory_space<vmem>>, vector<256x8xbf16>,
    %c0_19 = arith.constant 0 : index
    %c1_20 = arith.constant 1 : index
    %c1_21 = arith.constant 1 : index
    %c0_22 = arith.constant 0 : index
    %18 = vector.load %arg1[%c0_19, %c1_20, %c1_21, %c0_22] : memref<1x18x24x8xbf16, #tpu.memory_space<vmem>>, vector<1x16x16x8xbf16>
    %19 = vector.shape_cast %18 : vector<1x16x16x8xbf16> to vector<16x16x8xbf16>
    %20 = vector.shape_cast %19 : vector<16x16x8xbf16> to vector<256x8xbf16>
    %c0_23 = arith.constant 0 : index
    %c32 = arith.constant 32 : index
    %21 = vector.load %arg5[%c0_23, %c32] : memref<256x128xbf16, #tpu.memory_space<vmem>>, vector<256x8xbf16>
    tpu.vector_store %arg5[%c0_23, %c32], %20 {strides = array<i32>} : memref<256x128xbf16, #tpu.memory_space<vmem>>, vector<256x8xbf16>,
    %c0_24 = arith.constant 0 : index
    %c1_25 = arith.constant 1 : index
    %c2_26 = arith.constant 2 : index
    %c0_27 = arith.constant 0 : index
    %22 = vector.load %arg1[%c0_24, %c1_25, %c2_26, %c0_27] : memref<1x18x24x8xbf16, #tpu.memory_space<vmem>>, vector<1x16x16x8xbf16>
    %23 = vector.shape_cast %22 : vector<1x16x16x8xbf16> to vector<16x16x8xbf16>
    %24 = vector.shape_cast %23 : vector<16x16x8xbf16> to vector<256x8xbf16>
    %c0_28 = arith.constant 0 : index
    %c40 = arith.constant 40 : index
    %25 = vector.load %arg5[%c0_28, %c40] : memref<256x128xbf16, #tpu.memory_space<vmem>>, vector<256x8xbf16>
    tpu.vector_store %arg5[%c0_28, %c40], %24 {strides = array<i32>} : memref<256x128xbf16, #tpu.memory_space<vmem>>, vector<256x8xbf16>,
    %c0_29 = arith.constant 0 : index
    %c2_30 = arith.constant 2 : index
    %c0_31 = arith.constant 0 : index
    %c0_32 = arith.constant 0 : index
    %26 = vector.load %arg1[%c0_29, %c2_30, %c0_31, %c0_32] : memref<1x18x24x8xbf16, #tpu.memory_space<vmem>>, vector<1x16x16x8xbf16>
    %27 = vector.shape_cast %26 : vector<1x16x16x8xbf16> to vector<16x16x8xbf16>
    %28 = vector.shape_cast %27 : vector<16x16x8xbf16> to vector<256x8xbf16>
    %c0_33 = arith.constant 0 : index
    %c48 = arith.constant 48 : index
    %29 = vector.load %arg5[%c0_33, %c48] : memref<256x128xbf16, #tpu.memory_space<vmem>>, vector<256x8xbf16>
    tpu.vector_store %arg5[%c0_33, %c48], %28 {strides = array<i32>} : memref<256x128xbf16, #tpu.memory_space<vmem>>, vector<256x8xbf16>,
    %c0_34 = arith.constant 0 : index
    %c2_35 = arith.constant 2 : index
    %c1_36 = arith.constant 1 : index
    %c0_37 = arith.constant 0 : index
    %30 = vector.load %arg1[%c0_34, %c2_35, %c1_36, %c0_37] : memref<1x18x24x8xbf16, #tpu.memory_space<vmem>>, vector<1x16x16x8xbf16>
    %31 = vector.shape_cast %30 : vector<1x16x16x8xbf16> to vector<16x16x8xbf16>
    %32 = vector.shape_cast %31 : vector<16x16x8xbf16> to vector<256x8xbf16>
    %c0_38 = arith.constant 0 : index
    %c56 = arith.constant 56 : index
    %33 = vector.load %arg5[%c0_38, %c56] : memref<256x128xbf16, #tpu.memory_space<vmem>>, vector<256x8xbf16>
    tpu.vector_store %arg5[%c0_38, %c56], %32 {strides = array<i32>} : memref<256x128xbf16, #tpu.memory_space<vmem>>, vector<256x8xbf16>,
    %c0_39 = arith.constant 0 : index
    %c2_40 = arith.constant 2 : index
    %c2_41 = arith.constant 2 : index
    %c0_42 = arith.constant 0 : index
    %34 = vector.load %arg1[%c0_39, %c2_40, %c2_41, %c0_42] : memref<1x18x24x8xbf16, #tpu.memory_space<vmem>>, vector<1x16x16x8xbf16>
    %35 = vector.shape_cast %34 : vector<1x16x16x8xbf16> to vector<16x16x8xbf16>
    %36 = vector.shape_cast %35 : vector<16x16x8xbf16> to vector<256x8xbf16>
    %c0_43 = arith.constant 0 : index
    %c64 = arith.constant 64 : index
    %37 = vector.load %arg5[%c0_43, %c64] : memref<256x128xbf16, #tpu.memory_space<vmem>>, vector<256x8xbf16>
    tpu.vector_store %arg5[%c0_43, %c64], %36 {strides = array<i32>} : memref<256x128xbf16, #tpu.memory_space<vmem>>, vector<256x8xbf16>,
    %c0_44 = arith.constant 0 : index
    %c0_45 = arith.constant 0 : index
    %38 = vector.load %arg5[%c0_44, %c0_45] : memref<256x128xbf16, #tpu.memory_space<vmem>>, vector<256x128xbf16>
    %c0_46 = arith.constant 0 : index
    %c0_47 = arith.constant 0 : index
    %39 = vector.load %arg2[%c0_46, %c0_47] : memref<128x128xbf16, #tpu.memory_space<vmem>>, vector<128x128xbf16>
    %cst_48 = arith.constant dense<0.000000e+00> : vector<256x128xf32>
    %40 = tpu.matmul %38, %39, %cst_48 {dimension_numbers = #tpu.dot_dimension_numbers<[1], [0], [0], [1], [0, 0, 1, 1], [], []>} : vector<256x128xbf16>, vector<128x128xbf16>, vector<256x128xf32> -> vector<256x128xf32>
    %cst_49 = arith.constant 0xFF800000 : f32
    %41 = vector.broadcast %cst_49 : f32 to vector<1x16x128xf32>
    %c0_50 = arith.constant 0 : index
    %c0_51 = arith.constant 0 : index
    %c0_52 = arith.constant 0 : index
    %42 = vector.load %arg6[%c0_50, %c0_51, %c0_52] : memref<18x16x128xf32, #tpu.memory_space<vmem>>, vector<1x16x128xf32>
    tpu.vector_store %arg6[%c0_50, %c0_51, %c0_52], %41 {strides = array<i32>} : memref<18x16x128xf32, #tpu.memory_space<vmem>>, vector<1x16x128xf32>,
    %cst_53 = arith.constant 0xFF800000 : f32
    %43 = vector.broadcast %cst_53 : f32 to vector<1x16x128xf32>
    %c17 = arith.constant 17 : index
    %c0_54 = arith.constant 0 : index
    %c0_55 = arith.constant 0 : index
    %44 = vector.load %arg6[%c17, %c0_54, %c0_55] : memref<18x16x128xf32, #tpu.memory_space<vmem>>, vector<1x16x128xf32>
    tpu.vector_store %arg6[%c17, %c0_54, %c0_55], %43 {strides = array<i32>} : memref<18x16x128xf32, #tpu.memory_space<vmem>>, vector<1x16x128xf32>,
    %cst_56 = arith.constant 0xFF800000 : f32
    %45 = vector.broadcast %cst_56 : f32 to vector<8x1x128xf32>
    %c0_57 = arith.constant 0 : index
    %c0_58 = arith.constant 0 : index
    %c0_59 = arith.constant 0 : index
    %46 = vector.load %arg7[%c0_57, %c0_58, %c0_59] : memref<8x18x128xf32, #tpu.memory_space<vmem>>, vector<8x1x128xf32>
    tpu.vector_store %arg7[%c0_57, %c0_58, %c0_59], %45 {strides = array<i32>} : memref<8x18x128xf32, #tpu.memory_space<vmem>>, vector<8x1x128xf32>,
    %cst_60 = arith.constant 0xFF800000 : f32
    %47 = vector.broadcast %cst_60 : f32 to vector<8x1x128xf32>
    %c0_61 = arith.constant 0 : index
    %c17_62 = arith.constant 17 : index
    %c0_63 = arith.constant 0 : index
    %48 = vector.load %arg7[%c0_61, %c17_62, %c0_63] : memref<8x18x128xf32, #tpu.memory_space<vmem>>, vector<8x1x128xf32>
    tpu.vector_store %arg7[%c0_61, %c17_62, %c0_63], %47 {strides = array<i32>} : memref<8x18x128xf32, #tpu.memory_space<vmem>>, vector<8x1x128xf32>,
    %c0_64 = arith.constant 0 : index
    %c0_65 = arith.constant 0 : index
    %49 = vector.load %arg3[%c0_64, %c0_65] : memref<1x128xf32, #tpu.memory_space<vmem>>, vector<1x128xf32>
    %50 = vector.broadcast %49 : vector<1x128xf32> to vector<256x128xf32>
    %51 = arith.addf %40, %50 : vector<256x128xf32>
    %cst_66 = arith.constant 0.000000e+00 : f32
    %52 = vector.broadcast %cst_66 : f32 to vector<256x128xf32>
    %53 = arith.maximumf %51, %52 : vector<256x128xf32>
    %54 = vector.shape_cast %53 : vector<256x128xf32> to vector<16x16x128xf32>
    %c1_67 = arith.constant 1 : index
    %c0_68 = arith.constant 0 : index
    %c0_69 = arith.constant 0 : index
    %55 = vector.load %arg6[%c1_67, %c0_68, %c0_69] : memref<18x16x128xf32, #tpu.memory_space<vmem>>, vector<16x16x128xf32>
    tpu.vector_store %arg6[%c1_67, %c0_68, %c0_69], %54 {strides = array<i32>} : memref<18x16x128xf32, #tpu.memory_space<vmem>>, vector<16x16x128xf32>,
    %c0_70 = arith.constant 0 : index
    %c0_71 = arith.constant 0 : index
    %c0_72 = arith.constant 0 : index
    %56 = vector.load %arg6[%c0_70, %c0_71, %c0_72] : memref<18x16x128xf32, #tpu.memory_space<vmem>>, vector<16x16x128xf32>
    %57 = vector.shape_cast %56 : vector<16x16x128xf32> to vector<8x2x16x128xf32>
    %58 = vector.extract_strided_slice %57 {offsets = [0, 0, 0, 0], sizes = [8, 1, 16, 128], strides = [1, 1, 1, 1]} : vector<8x2x16x128xf32> to vector<8x1x16x128xf32>
    %59 = vector.shape_cast %58 : vector<8x1x16x128xf32> to vector<8x16x128xf32>
    %c1_73 = arith.constant 1 : index
    %c0_74 = arith.constant 0 : index
    %c0_75 = arith.constant 0 : index
    %60 = vector.load %arg6[%c1_73, %c0_74, %c0_75] : memref<18x16x128xf32, #tpu.memory_space<vmem>>, vector<16x16x128xf32>
    %61 = vector.shape_cast %60 : vector<16x16x128xf32> to vector<8x2x16x128xf32>
    %62 = vector.extract_strided_slice %61 {offsets = [0, 0, 0, 0], sizes = [8, 1, 16, 128], strides = [1, 1, 1, 1]} : vector<8x2x16x128xf32> to vector<8x1x16x128xf32>
    %63 = vector.shape_cast %62 : vector<8x1x16x128xf32> to vector<8x16x128xf32>
    %64 = arith.maximumf %59, %63 : vector<8x16x128xf32>
    %c2_76 = arith.constant 2 : index
    %c0_77 = arith.constant 0 : index
    %c0_78 = arith.constant 0 : index
    %65 = vector.load %arg6[%c2_76, %c0_77, %c0_78] : memref<18x16x128xf32, #tpu.memory_space<vmem>>, vector<16x16x128xf32>
    %66 = vector.shape_cast %65 : vector<16x16x128xf32> to vector<8x2x16x128xf32>
    %67 = vector.extract_strided_slice %66 {offsets = [0, 0, 0, 0], sizes = [8, 1, 16, 128], strides = [1, 1, 1, 1]} : vector<8x2x16x128xf32> to vector<8x1x16x128xf32>
    %68 = vector.shape_cast %67 : vector<8x1x16x128xf32> to vector<8x16x128xf32>
    %69 = arith.maximumf %64, %68 : vector<8x16x128xf32>
    %c0_79 = arith.constant 0 : index
    %c1_80 = arith.constant 1 : index
    %c0_81 = arith.constant 0 : index
    %70 = vector.load %arg7[%c0_79, %c1_80, %c0_81] : memref<8x18x128xf32, #tpu.memory_space<vmem>>, vector<8x16x128xf32>
    tpu.vector_store %arg7[%c0_79, %c1_80, %c0_81], %69 {strides = array<i32>} : memref<8x18x128xf32, #tpu.memory_space<vmem>>, vector<8x16x128xf32>,
    %c0_82 = arith.constant 0 : index
    %c0_83 = arith.constant 0 : index
    %c0_84 = arith.constant 0 : index
    %71 = vector.load %arg7[%c0_82, %c0_83, %c0_84] : memref<8x18x128xf32, #tpu.memory_space<vmem>>, vector<8x16x128xf32>
    %c0_85 = arith.constant 0 : index
    %c1_86 = arith.constant 1 : index
    %c0_87 = arith.constant 0 : index
    %72 = vector.load %arg7[%c0_85, %c1_86, %c0_87] : memref<8x18x128xf32, #tpu.memory_space<vmem>>, vector<8x16x128xf32>
    %73 = arith.maximumf %71, %72 : vector<8x16x128xf32>
    %c0_88 = arith.constant 0 : index
    %c2_89 = arith.constant 2 : index
    %c0_90 = arith.constant 0 : index
    %74 = vector.load %arg7[%c0_88, %c2_89, %c0_90] : memref<8x18x128xf32, #tpu.memory_space<vmem>>, vector<8x16x128xf32>
    %75 = arith.maximumf %73, %74 : vector<8x16x128xf32>
    %c0_91 = arith.constant 0 : index
    %c0_92 = arith.constant 0 : index
    %c0_93 = arith.constant 0 : index
    %c0_94 = arith.constant 0 : index
    %76 = vector.load %arg4[%c0_91, %c0_92, %c0_93, %c0_94] : memref<1x8x16x128xf32, #tpu.memory_space<vmem>>, vector<1x8x16x128xf32>
    %77 = vector.shape_cast %76 : vector<1x8x16x128xf32> to vector<8x16x128xf32>
    %78 = vector.shape_cast %75 : vector<8x16x128xf32> to vector<1x8x16x128xf32>
    tpu.vector_store %arg4[%c0_91, %c0_92, %c0_93, %c0_94], %78 {strides = array<i32>} : memref<1x8x16x128xf32, #tpu.memory_space<vmem>>, vector<1x8x16x128xf32>,
    return
  }
  func.func @transform_0(%arg0: i32) -> (i32, i32, i32, i32) {
    %c0_i32 = arith.constant 0 : i32
    %c0_i32_0 = arith.constant 0 : i32
    %c0_i32_1 = arith.constant 0 : i32
    %c0_i32_2 = arith.constant 0 : i32
    return %arg0, %c0_i32, %c0_i32_0, %c0_i32_1 : i32, i32, i32, i32
  }
  func.func @transform_1(%arg0: i32) -> (i32, i32) {
    %c0_i32 = arith.constant 0 : i32
    %c0_i32_0 = arith.constant 0 : i32
    %c0_i32_1 = arith.constant 0 : i32
    return %c0_i32, %c0_i32_0 : i32, i32
  }
  func.func @transform_2(%arg0: i32) -> (i32, i32) {
    %c0_i32 = arith.constant 0 : i32
    %c0_i32_0 = arith.constant 0 : i32
    %c0_i32_1 = arith.constant 0 : i32
    return %c0_i32, %c0_i32_0 : i32, i32
  }
  func.func @transform_3(%arg0: i32) -> (i32, i32, i32, i32) {
    %c0_i32 = arith.constant 0 : i32
    %c0_i32_0 = arith.constant 0 : i32
    %c0_i32_1 = arith.constant 0 : i32
    %c0_i32_2 = arith.constant 0 : i32
    return %arg0, %c0_i32, %c0_i32_0, %c0_i32_1 : i32, i32, i32, i32
  }
}

</mosaic_0001>

<llo_original>
// kernel: conv_layer_forward.1
$region0: #{conv_layer_forward.1}
  #allocation0 [shape = 'u32[]', space=smem, size = 0x4, offset = 0x4, fixed_abs, tag = 'smem constant byte address 0x4 - core index']
  #allocation1 [shape = 'u32[144,128]{1,0:T(1,128)}', space=vmem, size = 0x12000, scoped, tag = 'internal scratch']
  #allocation2 [shape = 'bf16[256,128]{1,0:T(16,128)(2,1)}', space=vmem, size = 0x10000, scoped, tag = 'scratch operand']
  #allocation3 [shape = 'f32[18,16,128]{2,1,0:T(8,128)}', space=vmem, size = 0x24000, scoped, tag = 'scratch operand']
  #allocation4 [shape = 'f32[8,18,128]{2,1,0:T(8,128)}', space=vmem, size = 0x18000, scoped, tag = 'scratch operand']
  %s0 = inlined_call_operand.vmem [shape: bf16[2,18,24,8], index: 0, kind: input, shape index: {}]
  %s1 = inlined_call_operand.vmem [shape: bf16[128,128], index: 1, kind: input, shape index: {}]
  %s2 = inlined_call_operand.vmem [shape: f32[1,128], index: 2, kind: input, shape index: {}]
  %s3 = inlined_call_operand.vmem [shape: f32[2,8,16,128], index: 3, kind: output, shape index: {}]
  %s4 = sld [smem:[#allocation0]]
  $region45: #{conv_layer_forward.1} parent=0
    _
  %s6 = ssub.s32 1, %s4
  %s7 = scalar_select 0, %s6, %s4
  loop: start=0, step=1, limit=4
  $region2: #{conv_layer_forward.1} parent=0 // loop_pre_header
    _
  $region3: #{conv_layer_forward.1} parent=0 // loop_header
    %s9 = sphi 0, %s13
    %p10 = scmp.ge.s32.totalorder %s9, 4
    %s19 = sphi 0, %s21
    %s22 = sphi 0, %s19
    %s23 = sphi 0, %s22
    %s39 = sphi 0, %s23
    %s43 = sphi 0, %s43
    %s45 = sphi 0, %s43
    %s46 = sphi 0, %s45
    %s60 = sphi 0, %s46
    %s64 = sphi 0, %s64
    %s66 = sphi 0, %s64
    %s67 = sphi 0, %s66
    %s81 = sphi 0, %s67
    %s87 = sphi 0, %s89
    %s90 = sphi 0, %s87
    %s91 = sphi 0, %s90
    %s107 = sphi 0, %s91
  $region4: #{conv_layer_forward.1} parent=0 // loop_header_branch
    %12 = sbr.rel (%p10) target = $region8
  $region5: #{conv_layer_forward.1} parent=0 // loop_body
    %s14 = ssub.s32 %s9, 1
    %s15 = ssub.s32 %s9, 2
    %s16 = sadd.s32 %s9, 1
    %s17 = ssub.s32 %s9, %s16
    %p18 = scmp.eq.s32.totalorder %s17, 0
    %s20 = sadd.s32 %s19, 1
    %s21 = scalar_select %p18, %s19, %s20
    %p24 = pneg %p18
    %p25 = scmp.eq.s32.totalorder %s9, 1
    %p26 = por %p24, %p25
    %p27 = scmp.ne.s32.totalorder %s19, %s22
    %p28 = scmp.eq.s32.totalorder %s9, 0
    %p29 = por %p27, %p28
    %p30 = scmp.ne.s32.totalorder %s19, %s22
    %p31 = scmp.eq.s32.totalorder %s14, 1
    %p32 = por %p30, %p31
    %p33 = scmp.ne.s32.totalorder %s22, %s23
    %p34 = scmp.eq.s32.totalorder %s14, 0
    %p35 = por %p33, %p34
    %p36 = scmp.ne.s32.totalorder %s22, %s23
    %p37 = scmp.eq.s32.totalorder %s15, 1
    %p38 = por %p36, %p37
    %p40 = scmp.ne.s32.totalorder %s23, %s39
    %p41 = scmp.eq.s32.totalorder %s15, 0
    %p42 = por %p40, %p41
    %s44 = sadd.s32 %s43, 1
    %p47 = scmp.eq.s32.totalorder %s9, 1
    %p48 = scmp.ne.s32.totalorder %s43, %s45
    %p49 = scmp.eq.s32.totalorder %s9, 0
    %p50 = por %p48, %p49
    %p51 = scmp.ne.s32.totalorder %s43, %s45
    %p52 = scmp.eq.s32.totalorder %s14, 1
    %p53 = por %p51, %p52
    %p54 = scmp.ne.s32.totalorder %s45, %s46
    %p55 = scmp.eq.s32.totalorder %s14, 0
    %p56 = por %p54, %p55
    %p57 = scmp.ne.s32.totalorder %s45, %s46
    %p58 = scmp.eq.s32.totalorder %s15, 1
    %p59 = por %p57, %p58
    %p61 = scmp.ne.s32.totalorder %s46, %s60
    %p62 = scmp.eq.s32.totalorder %s15, 0
    %p63 = por %p61, %p62
    %s65 = sadd.s32 %s64, 1
    %p68 = scmp.eq.s32.totalorder %s9, 1
    %p69 = scmp.ne.s32.totalorder %s64, %s66
    %p70 = scmp.eq.s32.totalorder %s9, 0
    %p71 = por %p69, %p70
    %p72 = scmp.ne.s32.totalorder %s64, %s66
    %p73 = scmp.eq.s32.totalorder %s14, 1
    %p74 = por %p72, %p73
    %p75 = scmp.ne.s32.totalorder %s66, %s67
    %p76 = scmp.eq.s32.totalorder %s14, 0
    %p77 = por %p75, %p76
    %p78 = scmp.ne.s32.totalorder %s66, %s67
    %p79 = scmp.eq.s32.totalorder %s15, 1
    %p80 = por %p78, %p79
    %p82 = scmp.ne.s32.totalorder %s67, %s81
    %p83 = scmp.eq.s32.totalorder %s15, 0
    %p84 = por %p82, %p83
    %s85 = ssub.s32 %s9, %s16
    %p86 = scmp.eq.s32.totalorder %s85, 0
    %s88 = sadd.s32 %s87, 1
    %s89 = scalar_select %p86, %s87, %s88
    %p92 = pneg %p86
    %p93 = scmp.eq.s32.totalorder %s9, 1
    %p94 = por %p92, %p93
    %p95 = scmp.ne.s32.totalorder %s87, %s90
    %p96 = scmp.eq.s32.totalorder %s9, 0
    %p97 = por %p95, %p96
    %p98 = scmp.ne.s32.totalorder %s87, %s90
    %p99 = scmp.eq.s32.totalorder %s14, 1
    %p100 = por %p98, %p99
    %p101 = scmp.ne.s32.totalorder %s90, %s91
    %p102 = scmp.eq.s32.totalorder %s14, 0
    %p103 = por %p101, %p102
    %p104 = scmp.ne.s32.totalorder %s90, %s91
    %p105 = scmp.eq.s32.totalorder %s15, 1
    %p106 = por %p104, %p105
    %p108 = scmp.ne.s32.totalorder %s91, %s107
    %p109 = scmp.eq.s32.totalorder %s15, 0
    %p110 = por %p108, %p109
    %p111 = scmp.le.s32.totalorder 1, %s9
    %p112 = scmp.lt.s32.totalorder %s9, 3
    %p113 = pnand %p111, %p112
    %p114 = pneg %p113
    // Predicated region
    $region9: #{conv_layer_forward.1} parent=5 // pred_check
      _
    $region10: #{conv_layer_forward.1} parent=5 // pred_check_branch
      %116 = sbr.rel (%p113) target = $region12
    $region11: #{conv_layer_forward.1} parent=5 // pred_region
      %s117 = ssub.s32 %s9, 1
      // Predicated region
      $region13: #{conv_layer_forward.1} parent=11 // pred_check
        %p118 = pneg %p56
      $region14: #{conv_layer_forward.1} parent=11 // pred_check_branch
        %120 = sbr.rel (%p118) target = $region16
      $region15: #{conv_layer_forward.1} parent=11 // pred_region
        _
      $region16: #{conv_layer_forward.1} parent=11 // pred_fallthru
        _
      // Predicated region
      $region17: #{conv_layer_forward.1} parent=11 // pred_check
        %p121 = pneg %p77
      $region18: #{conv_layer_forward.1} parent=11 // pred_check_branch
        %123 = sbr.rel (%p121) target = $region20
      $region19: #{conv_layer_forward.1} parent=11 // pred_region
        _
      $region20: #{conv_layer_forward.1} parent=11 // pred_fallthru
        _
    $region12: #{conv_layer_forward.1} parent=5 // pred_fallthru
      _
    %p124 = scmp.lt.s32.totalorder %s9, 2
    // Predicated region
    $region21: #{conv_layer_forward.1} parent=5 // pred_check
      %p125 = pneg %p124
    $region22: #{conv_layer_forward.1} parent=5 // pred_check_branch
      %127 = sbr.rel (%p125) target = $region24
    $region23: #{conv_layer_forward.1} parent=5 // pred_region
      // Predicated region
      $region25: #{conv_layer_forward.1} parent=23 // pred_check
        %p128 = pneg %p29
      $region26: #{conv_layer_forward.1} parent=23 // pred_check_branch
        %130 = sbr.rel (%p128) target = $region28
      $region27: #{conv_layer_forward.1} parent=23 // pred_region
        %p131 = scmp.lt.s32.totalorder %s9, 1
        %s132 = scalar_select %p131, %s9, 1
        %s133 = smul.addr %s132, 54
        %s134 = smul.addr %s133, 4
        %s135 = scalar_lea.vmem %s0, %s134
      $region28: #{conv_layer_forward.1} parent=23 // pred_fallthru
        _
    $region24: #{conv_layer_forward.1} parent=5 // pred_fallthru
      _
    %p136 = scmp.le.s32.totalorder 1, %s9
    %p137 = scmp.lt.s32.totalorder %s9, 3
    %p138 = pnand %p136, %p137
    %p139 = pneg %p138
    // Predicated region
    $region29: #{conv_layer_forward.1} parent=5 // pred_check
      _
    $region30: #{conv_layer_forward.1} parent=5 // pred_check_branch
      %141 = sbr.rel (%p138) target = $region32
    $region31: #{conv_layer_forward.1} parent=5 // pred_region
      %s142 = ssub.s32 %s9, 1
      %p143 = scmp.lt.s32.totalorder %s14, 1
      %s144 = scalar_select %p143, %s14, 1
      %s145 = smul.addr %s144, 54
      %s146 = smul.addr %s145, 4
      %s147 = scalar_lea.vmem %s0, %s146
      %p148 = pneg %p35
      %p149 = pneg %p32
      %p150 = pneg %p56
      %p151 = pneg %p53
      %p152 = pneg %p77
      %p153 = pneg %p74
      %p154 = pneg %p103
      %p155 = pneg %p100
      %p156 = scmp.lt.s32.totalorder %s14, 1
      %s157 = scalar_select %p156, %s14, 1
      %s158 = smul.addr %s157, 16
      %s159 = smul.addr %s158, 8
      %s160 = scalar_lea.vmem %s3, %s159
      %p161 = scmp.lt.s32.totalorder %s14, 1
      %s162 = scalar_select %p161, %s14, 1
      %s163 = smul.addr %s162, 54
      %s164 = smul.addr %s163, 4
      %s165 = scalar_lea.vmem %s0, %s164
      %p166 = scmp.lt.s32.totalorder %s14, 1
      %s167 = scalar_select %p166, %s14, 1
      %s168 = smul.addr %s167, 16
      %s169 = smul.addr %s168, 8
      %s170 = scalar_lea.vmem %s3, %s169
      %vm172 = vcmask 1048128
      %173 = vst.msk [vmem:[#allocation2] sm:$0xff] %vm172, 0
      %174 = vst.msk [vmem:[#allocation2 + $0x8] sm:$0xff] %vm172, 0
      %175 = vst.msk [vmem:[#allocation2 + $0x10] sm:$0xff] %vm172, 0
      %176 = vst.msk [vmem:[#allocation2 + $0x18] sm:$0xff] %vm172, 0
      %177 = vst.msk [vmem:[#allocation2 + $0x20] sm:$0xff] %vm172, 0
      %178 = vst.msk [vmem:[#allocation2 + $0x28] sm:$0xff] %vm172, 0
      %179 = vst.msk [vmem:[#allocation2 + $0x30] sm:$0xff] %vm172, 0
      %180 = vst.msk [vmem:[#allocation2 + $0x38] sm:$0xff] %vm172, 0
      %181 = vst.msk [vmem:[#allocation2 + $0x40] sm:$0xff] %vm172, 0
      %182 = vst.msk [vmem:[#allocation2 + $0x48] sm:$0xff] %vm172, 0
      %183 = vst.msk [vmem:[#allocation2 + $0x50] sm:$0xff] %vm172, 0
      %184 = vst.msk [vmem:[#allocation2 + $0x58] sm:$0xff] %vm172, 0
      %185 = vst.msk [vmem:[#allocation2 + $0x60] sm:$0xff] %vm172, 0
      %186 = vst.msk [vmem:[#allocation2 + $0x68] sm:$0xff] %vm172, 0
      %187 = vst.msk [vmem:[#allocation2 + $0x70] sm:$0xff] %vm172, 0
      %188 = vst.msk [vmem:[#allocation2 + $0x78] sm:$0xff] %vm172, 0
      %v189 = vld [vmem:[%s165] sm:$0xf]
      %v190 = vld [vmem:[%s165 + $0x4] sm:$0xf]
      %v191 = vld [vmem:[%s165 + $0xc] sm:$0xf]
      %v192 = vld [vmem:[%s165 + $0x10] sm:$0xf]
      %v193 = vld [vmem:[%s165 + $0x18] sm:$0xf]
      %v194 = vld [vmem:[%s165 + $0x1c] sm:$0xf]
      %v195 = vld [vmem:[%s165 + $0x24] sm:$0xf]
      %v196 = vld [vmem:[%s165 + $0x28] sm:$0xf]
      %v197 = vld [vmem:[%s165 + $0x30] sm:$0xf]
      %v198 = vld [vmem:[%s165 + $0x34] sm:$0xf]
      %v199 = vld [vmem:[%s165 + $0x3c] sm:$0xf]
      %v200 = vld [vmem:[%s165 + $0x40] sm:$0xf]
      %v201 = vld [vmem:[%s165 + $0x48] sm:$0xf]
      %v202 = vld [vmem:[%s165 + $0x4c] sm:$0xf]
      %v203 = vld [vmem:[%s165 + $0x54] sm:$0xf]
      %v204 = vld [vmem:[%s165 + $0x58] sm:$0xf]
      %v205 = vld [vmem:[%s165 + $0x60] sm:$0xf]
      %v206 = vld [vmem:[%s165 + $0x64] sm:$0xf]
      %v207 = vld [vmem:[%s165 + $0x6c] sm:$0xf]
      %v208 = vld [vmem:[%s165 + $0x70] sm:$0xf]
      %v209 = vld [vmem:[%s165 + $0x78] sm:$0xf]
      %v210 = vld [vmem:[%s165 + $0x7c] sm:$0xf]
      %v211 = vld [vmem:[%s165 + $0x84] sm:$0xf]
      %v212 = vld [vmem:[%s165 + $0x88] sm:$0xf]
      %v213 = vld [vmem:[%s165 + $0x90] sm:$0xf]
      %v214 = vld [vmem:[%s165 + $0x94] sm:$0xf]
      %v215 = vld [vmem:[%s165 + $0x9c] sm:$0xf]
      %v216 = vld [vmem:[%s165 + $0xa0] sm:$0xf]
      %v217 = vld [vmem:[%s165 + $0xa8] sm:$0xf]
      %v218 = vld [vmem:[%s165 + $0xac] sm:$0xf]
      %v219 = vld [vmem:[%s165 + $0xb4] sm:$0xf]
      %v220 = vld [vmem:[%s165 + $0xb8] sm:$0xf]
      %v253 = vunpack.c.l.b16 %v189
      %v254 = vunpack.c.l.b16 %v190
      %v255 = vunpack.c.l.b16 %v191
      %v256 = vunpack.c.l.b16 %v192
      %v257 = vunpack.c.l.b16 %v193
      %v258 = vunpack.c.l.b16 %v194
      %v259 = vunpack.c.l.b16 %v195
      %v260 = vunpack.c.l.b16 %v196
      %v261 = vunpack.c.l.b16 %v197
      %v262 = vunpack.c.l.b16 %v198
      %v263 = vunpack.c.l.b16 %v199
      %v264 = vunpack.c.l.b16 %v200
      %v265 = vunpack.c.l.b16 %v201
      %v266 = vunpack.c.l.b16 %v202
      %v267 = vunpack.c.l.b16 %v203
      %v268 = vunpack.c.l.b16 %v204
      %v269 = vunpack.c.l.b16 %v205
      %v270 = vunpack.c.l.b16 %v206
      %v271 = vunpack.c.l.b16 %v207
      %v272 = vunpack.c.l.b16 %v208
      %v273 = vunpack.c.l.b16 %v209
      %v274 = vunpack.c.l.b16 %v210
      %v275 = vunpack.c.l.b16 %v211
      %v276 = vunpack.c.l.b16 %v212
      %v277 = vunpack.c.l.b16 %v213
      %v278 = vunpack.c.l.b16 %v214
      %v279 = vunpack.c.l.b16 %v215
      %v280 = vunpack.c.l.b16 %v216
      %v281 = vunpack.c.l.b16 %v217
      %v282 = vunpack.c.l.b16 %v218
      %v283 = vunpack.c.l.b16 %v219
      %v284 = vunpack.c.l.b16 %v220
      %v285 = vpack.c.b16 %v254, %v253
      %v286 = vpack.c.b16 %v256, %v255
      %v287 = vpack.c.b16 %v258, %v257
      %v288 = vpack.c.b16 %v260, %v259
      %v289 = vpack.c.b16 %v262, %v261
      %v290 = vpack.c.b16 %v264, %v263
      %v291 = vpack.c.b16 %v266, %v265
      %v292 = vpack.c.b16 %v268, %v267
      %v293 = vpack.c.b16 %v270, %v269
      %v294 = vpack.c.b16 %v272, %v271
      %v295 = vpack.c.b16 %v274, %v273
      %v296 = vpack.c.b16 %v276, %v275
      %v297 = vpack.c.b16 %v278, %v277
      %v298 = vpack.c.b16 %v280, %v279
      %v299 = vpack.c.b16 %v282, %v281
      %v300 = vpack.c.b16 %v284, %v283
      %vm317 = vcmask 64512
      %318 = vst.msk [vmem:[#allocation2] sm:$0xff] %vm317, %v285
      %319 = vst.msk [vmem:[#allocation2 + $0x8] sm:$0xff] %vm317, %v286
      %320 = vst.msk [vmem:[#allocation2 + $0x10] sm:$0xff] %vm317, %v287
      %321 = vst.msk [vmem:[#allocation2 + $0x18] sm:$0xff] %vm317, %v288
      %322 = vst.msk [vmem:[#allocation2 + $0x20] sm:$0xff] %vm317, %v289
      %323 = vst.msk [vmem:[#allocation2 + $0x28] sm:$0xff] %vm317, %v290
      %324 = vst.msk [vmem:[#allocation2 + $0x30] sm:$0xff] %vm317, %v291
      %325 = vst.msk [vmem:[#allocation2 + $0x38] sm:$0xff] %vm317, %v292
      %326 = vst.msk [vmem:[#allocation2 + $0x40] sm:$0xff] %vm317, %v293
      %327 = vst.msk [vmem:[#allocation2 + $0x48] sm:$0xff] %vm317, %v294
      %328 = vst.msk [vmem:[#allocation2 + $0x50] sm:$0xff] %vm317, %v295
      %329 = vst.msk [vmem:[#allocation2 + $0x58] sm:$0xff] %vm317, %v296
      %330 = vst.msk [vmem:[#allocation2 + $0x60] sm:$0xff] %vm317, %v297
      %331 = vst.msk [vmem:[#allocation2 + $0x68] sm:$0xff] %vm317, %v298
      %332 = vst.msk [vmem:[#allocation2 + $0x70] sm:$0xff] %vm317, %v299
      %333 = vst.msk [vmem:[#allocation2 + $0x78] sm:$0xff] %vm317, %v300
      %v334 = vld [vmem:[%s165] sm:$0xf]
      %v335 = vld [vmem:[%s165 + $0x4] sm:$0xf]
      %v336 = vld [vmem:[%s165 + $0x8] sm:$0x1]
      %v337 = vld [vmem:[%s165 + $0xc] sm:$0xf]
      %v338 = vld [vmem:[%s165 + $0x10] sm:$0xf]
      %v339 = vld [vmem:[%s165 + $0x14] sm:$0x1]
      %v340 = vld [vmem:[%s165 + $0x18] sm:$0xf]
      %v341 = vld [vmem:[%s165 + $0x1c] sm:$0xf]
      %v342 = vld [vmem:[%s165 + $0x20] sm:$0x1]
      %v343 = vld [vmem:[%s165 + $0x24] sm:$0xf]
      %v344 = vld [vmem:[%s165 + $0x28] sm:$0xf]
      %v345 = vld [vmem:[%s165 + $0x2c] sm:$0x1]
      %v346 = vld [vmem:[%s165 + $0x30] sm:$0xf]
      %v347 = vld [vmem:[%s165 + $0x34] sm:$0xf]
      %v348 = vld [vmem:[%s165 + $0x38] sm:$0x1]
      %v349 = vld [vmem:[%s165 + $0x3c] sm:$0xf]
      %v350 = vld [vmem:[%s165 + $0x40] sm:$0xf]
      %v351 = vld [vmem:[%s165 + $0x44] sm:$0x1]
      %v352 = vld [vmem:[%s165 + $0x48] sm:$0xf]
      %v353 = vld [vmem:[%s165 + $0x4c] sm:$0xf]
      %v354 = vld [vmem:[%s165 + $0x50] sm:$0x1]
      %v355 = vld [vmem:[%s165 + $0x54] sm:$0xf]
      %v356 = vld [vmem:[%s165 + $0x58] sm:$0xf]
      %v357 = vld [vmem:[%s165 + $0x5c] sm:$0x1]
      %v358 = vld [vmem:[%s165 + $0x60] sm:$0xf]
      %v359 = vld [vmem:[%s165 + $0x64] sm:$0xf]
      %v360 = vld [vmem:[%s165 + $0x68] sm:$0x1]
      %v361 = vld [vmem:[%s165 + $0x6c] sm:$0xf]
      %v362 = vld [vmem:[%s165 + $0x70] sm:$0xf]
      %v363 = vld [vmem:[%s165 + $0x74] sm:$0x1]
      %v364 = vld [vmem:[%s165 + $0x78] sm:$0xf]
      %v365 = vld [vmem:[%s165 + $0x7c] sm:$0xf]
      %v366 = vld [vmem:[%s165 + $0x80] sm:$0x1]
      %v367 = vld [vmem:[%s165 + $0x84] sm:$0xf]
      %v368 = vld [vmem:[%s165 + $0x88] sm:$0xf]
      %v369 = vld [vmem:[%s165 + $0x8c] sm:$0x1]
      %v370 = vld [vmem:[%s165 + $0x90] sm:$0xf]
      %v371 = vld [vmem:[%s165 + $0x94] sm:$0xf]
      %v372 = vld [vmem:[%s165 + $0x98] sm:$0x1]
      %v373 = vld [vmem:[%s165 + $0x9c] sm:$0xf]
      %v374 = vld [vmem:[%s165 + $0xa0] sm:$0xf]
      %v375 = vld [vmem:[%s165 + $0xa4] sm:$0x1]
      %v376 = vld [vmem:[%s165 + $0xa8] sm:$0xf]
      %v377 = vld [vmem:[%s165 + $0xac] sm:$0xf]
      %v378 = vld [vmem:[%s165 + $0xb0] sm:$0x1]
      %v379 = vld [vmem:[%s165 + $0xb4] sm:$0xf]
      %v380 = vld [vmem:[%s165 + $0xb8] sm:$0xf]
      %v381 = vld [vmem:[%s165 + $0xbc] sm:$0x1]
      %vm382 = vsmask.f32 3328
      %vm383 = vsmask.f32 7440
      %vm384 = vmor %vm382, %vm383
      %v386 = vshrl.u32 %v334, 16
      %v388 = vrot.slane %v386, 4
      %v389 = vshll.u32 %v334, 16
      %v391 = vrot.slane %v389, 5
      %v392 = vor.u32 %v388, %v391
      %v393 = vrot.slane %v392, 4
      %v395 = vshll.u32 %v335, 16
      %v397 = vrot.slane %v395, 5
      %v398 = vsel %vm384, %v393, %v397
      %v399 = vshrl.u32 %v335, 16
      %v401 = vrot.slane %v399, 4
      %v402 = vor.u32 %v401, %v397
      %v403 = vrot.slane %v402, 4
      %v405 = vshll.u32 %v336, 16
      %v407 = vrot.slane %v405, 5
      %v408 = vsel %vm384, %v403, %v407
      %v410 = vshrl.u32 %v337, 16
      %v412 = vrot.slane %v410, 4
      %v413 = vshll.u32 %v337, 16
      %v415 = vrot.slane %v413, 5
      %v416 = vor.u32 %v412, %v415
      %v417 = vrot.slane %v416, 4
      %v419 = vshll.u32 %v338, 16
      %v421 = vrot.slane %v419, 5
      %v422 = vsel %vm384, %v417, %v421
      %v423 = vshrl.u32 %v338, 16
      %v425 = vrot.slane %v423, 4
      %v426 = vor.u32 %v425, %v421
      %v427 = vrot.slane %v426, 4
      %v429 = vshll.u32 %v339, 16
      %v431 = vrot.slane %v429, 5
      %v432 = vsel %vm384, %v427, %v431
      %v434 = vshrl.u32 %v340, 16
      %v436 = vrot.slane %v434, 4
      %v437 = vshll.u32 %v340, 16
      %v439 = vrot.slane %v437, 5
      %v440 = vor.u32 %v436, %v439
      %v441 = vrot.slane %v440, 4
      %v443 = vshll.u32 %v341, 16
      %v445 = vrot.slane %v443, 5
      %v446 = vsel %vm384, %v441, %v445
      %v447 = vshrl.u32 %v341, 16
      %v449 = vrot.slane %v447, 4
      %v450 = vor.u32 %v449, %v445
      %v451 = vrot.slane %v450, 4
      %v453 = vshll.u32 %v342, 16
      %v455 = vrot.slane %v453, 5
      %v456 = vsel %vm384, %v451, %v455
      %v458 = vshrl.u32 %v343, 16
      %v460 = vrot.slane %v458, 4
      %v461 = vshll.u32 %v343, 16
      %v463 = vrot.slane %v461, 5
      %v464 = vor.u32 %v460, %v463
      %v465 = vrot.slane %v464, 4
      %v467 = vshll.u32 %v344, 16
      %v469 = vrot.slane %v467, 5
      %v470 = vsel %vm384, %v465, %v469
      %v471 = vshrl.u32 %v344, 16
      %v473 = vrot.slane %v471, 4
      %v474 = vor.u32 %v473, %v469
      %v475 = vrot.slane %v474, 4
      %v477 = vshll.u32 %v345, 16
      %v479 = vrot.slane %v477, 5
      %v480 = vsel %vm384, %v475, %v479
      %v482 = vshrl.u32 %v346, 16
      %v484 = vrot.slane %v482, 4
      %v485 = vshll.u32 %v346, 16
      %v487 = vrot.slane %v485, 5
      %v488 = vor.u32 %v484, %v487
      %v489 = vrot.slane %v488, 4
      %v491 = vshll.u32 %v347, 16
      %v493 = vrot.slane %v491, 5
      %v494 = vsel %vm384, %v489, %v493
      %v495 = vshrl.u32 %v347, 16
      %v497 = vrot.slane %v495, 4
      %v498 = vor.u32 %v497, %v493
      %v499 = vrot.slane %v498, 4
      %v501 = vshll.u32 %v348, 16
      %v503 = vrot.slane %v501, 5
      %v504 = vsel %vm384, %v499, %v503
      %v506 = vshrl.u32 %v349, 16
      %v508 = vrot.slane %v506, 4
      %v509 = vshll.u32 %v349, 16
      %v511 = vrot.slane %v509, 5
      %v512 = vor.u32 %v508, %v511
      %v513 = vrot.slane %v512, 4
      %v515 = vshll.u32 %v350, 16
      %v517 = vrot.slane %v515, 5
      %v518 = vsel %vm384, %v513, %v517
      %v519 = vshrl.u32 %v350, 16
      %v521 = vrot.slane %v519, 4
      %v522 = vor.u32 %v521, %v517
      %v523 = vrot.slane %v522, 4
      %v525 = vshll.u32 %v351, 16
      %v527 = vrot.slane %v525, 5
      %v528 = vsel %vm384, %v523, %v527
      %v530 = vshrl.u32 %v352, 16
      %v532 = vrot.slane %v530, 4
      %v533 = vshll.u32 %v352, 16
      %v535 = vrot.slane %v533, 5
      %v536 = vor.u32 %v532, %v535
      %v537 = vrot.slane %v536, 4
      %v539 = vshll.u32 %v353, 16
      %v541 = vrot.slane %v539, 5
      %v542 = vsel %vm384, %v537, %v541
      %v543 = vshrl.u32 %v353, 16
      %v545 = vrot.slane %v543, 4
      %v546 = vor.u32 %v545, %v541
      %v547 = vrot.slane %v546, 4
      %v549 = vshll.u32 %v354, 16
      %v551 = vrot.slane %v549, 5
      %v552 = vsel %vm384, %v547, %v551
      %v554 = vshrl.u32 %v355, 16
      %v556 = vrot.slane %v554, 4
      %v557 = vshll.u32 %v355, 16
      %v559 = vrot.slane %v557, 5
      %v560 = vor.u32 %v556, %v559
      %v561 = vrot.slane %v560, 4
      %v563 = vshll.u32 %v356, 16
      %v565 = vrot.slane %v563, 5
      %v566 = vsel %vm384, %v561, %v565
      %v567 = vshrl.u32 %v356, 16
      %v569 = vrot.slane %v567, 4
      %v570 = vor.u32 %v569, %v565
      %v571 = vrot.slane %v570, 4
      %v573 = vshll.u32 %v357, 16
      %v575 = vrot.slane %v573, 5
      %v576 = vsel %vm384, %v571, %v575
      %v578 = vshrl.u32 %v358, 16
      %v580 = vrot.slane %v578, 4
      %v581 = vshll.u32 %v358, 16
      %v583 = vrot.slane %v581, 5
      %v584 = vor.u32 %v580, %v583
      %v585 = vrot.slane %v584, 4
      %v587 = vshll.u32 %v359, 16
      %v589 = vrot.slane %v587, 5
      %v590 = vsel %vm384, %v585, %v589
      %v591 = vshrl.u32 %v359, 16
      %v593 = vrot.slane %v591, 4
      %v594 = vor.u32 %v593, %v589
      %v595 = vrot.slane %v594, 4
      %v597 = vshll.u32 %v360, 16
      %v599 = vrot.slane %v597, 5
      %v600 = vsel %vm384, %v595, %v599
      %v602 = vshrl.u32 %v361, 16
      %v604 = vrot.slane %v602, 4
      %v605 = vshll.u32 %v361, 16
      %v607 = vrot.slane %v605, 5
      %v608 = vor.u32 %v604, %v607
      %v609 = vrot.slane %v608, 4
      %v611 = vshll.u32 %v362, 16
      %v613 = vrot.slane %v611, 5
      %v614 = vsel %vm384, %v609, %v613
      %v615 = vshrl.u32 %v362, 16
      %v617 = vrot.slane %v615, 4
      %v618 = vor.u32 %v617, %v613
      %v619 = vrot.slane %v618, 4
      %v621 = vshll.u32 %v363, 16
      %v623 = vrot.slane %v621, 5
      %v624 = vsel %vm384, %v619, %v623
      %v626 = vshrl.u32 %v364, 16
      %v628 = vrot.slane %v626, 4
      %v629 = vshll.u32 %v364, 16
      %v631 = vrot.slane %v629, 5
      %v632 = vor.u32 %v628, %v631
      %v633 = vrot.slane %v632, 4
      %v635 = vshll.u32 %v365, 16
      %v637 = vrot.slane %v635, 5
      %v638 = vsel %vm384, %v633, %v637
      %v639 = vshrl.u32 %v365, 16
      %v641 = vrot.slane %v639, 4
      %v642 = vor.u32 %v641, %v637
      %v643 = vrot.slane %v642, 4
      %v645 = vshll.u32 %v366, 16
      %v647 = vrot.slane %v645, 5
      %v648 = vsel %vm384, %v643, %v647
      %v650 = vshrl.u32 %v367, 16
      %v652 = vrot.slane %v650, 4
      %v653 = vshll.u32 %v367, 16
      %v655 = vrot.slane %v653, 5
      %v656 = vor.u32 %v652, %v655
      %v657 = vrot.slane %v656, 4
      %v659 = vshll.u32 %v368, 16
      %v661 = vrot.slane %v659, 5
      %v662 = vsel %vm384, %v657, %v661
      %v663 = vshrl.u32 %v368, 16
      %v665 = vrot.slane %v663, 4
      %v666 = vor.u32 %v665, %v661
      %v667 = vrot.slane %v666, 4
      %v669 = vshll.u32 %v369, 16
      %v671 = vrot.slane %v669, 5
      %v672 = vsel %vm384, %v667, %v671
      %v674 = vshrl.u32 %v370, 16
      %v676 = vrot.slane %v674, 4
      %v677 = vshll.u32 %v370, 16
      %v679 = vrot.slane %v677, 5
      %v680 = vor.u32 %v676, %v679
      %v681 = vrot.slane %v680, 4
      %v683 = vshll.u32 %v371, 16
      %v685 = vrot.slane %v683, 5
      %v686 = vsel %vm384, %v681, %v685
      %v687 = vshrl.u32 %v371, 16
      %v689 = vrot.slane %v687, 4
      %v690 = vor.u32 %v689, %v685
      %v691 = vrot.slane %v690, 4
      %v693 = vshll.u32 %v372, 16
      %v695 = vrot.slane %v693, 5
      %v696 = vsel %vm384, %v691, %v695
      %v698 = vshrl.u32 %v373, 16
      %v700 = vrot.slane %v698, 4
      %v701 = vshll.u32 %v373, 16
      %v703 = vrot.slane %v701, 5
      %v704 = vor.u32 %v700, %v703
      %v705 = vrot.slane %v704, 4
      %v707 = vshll.u32 %v374, 16
      %v709 = vrot.slane %v707, 5
      %v710 = vsel %vm384, %v705, %v709
      %v711 = vshrl.u32 %v374, 16
      %v713 = vrot.slane %v711, 4
      %v714 = vor.u32 %v713, %v709
      %v715 = vrot.slane %v714, 4
      %v717 = vshll.u32 %v375, 16
      %v719 = vrot.slane %v717, 5
      %v720 = vsel %vm384, %v715, %v719
      %v722 = vshrl.u32 %v376, 16
      %v724 = vrot.slane %v722, 4
      %v725 = vshll.u32 %v376, 16
      %v727 = vrot.slane %v725, 5
      %v728 = vor.u32 %v724, %v727
      %v729 = vrot.slane %v728, 4
      %v731 = vshll.u32 %v377, 16
      %v733 = vrot.slane %v731, 5
      %v734 = vsel %vm384, %v729, %v733
      %v735 = vshrl.u32 %v377, 16
      %v737 = vrot.slane %v735, 4
      %v738 = vor.u32 %v737, %v733
      %v739 = vrot.slane %v738, 4
      %v741 = vshll.u32 %v378, 16
      %v743 = vrot.slane %v741, 5
      %v744 = vsel %vm384, %v739, %v743
      %v746 = vshrl.u32 %v379, 16
      %v748 = vrot.slane %v746, 4
      %v749 = vshll.u32 %v379, 16
      %v751 = vrot.slane %v749, 5
      %v752 = vor.u32 %v748, %v751
      %v753 = vrot.slane %v752, 4
      %v755 = vshll.u32 %v380, 16
      %v757 = vrot.slane %v755, 5
      %v758 = vsel %vm384, %v753, %v757
      %v759 = vshrl.u32 %v380, 16
      %v761 = vrot.slane %v759, 4
      %v762 = vor.u32 %v761, %v757
      %v763 = vrot.slane %v762, 4
      %v765 = vshll.u32 %v381, 16
      %v767 = vrot.slane %v765, 5
      %v768 = vsel %vm384, %v763, %v767
      %v769 = vunpack.c.l.b16 %v398
      %v770 = vunpack.c.l.b16 %v408
      %v771 = vunpack.c.l.b16 %v422
      %v772 = vunpack.c.l.b16 %v432
      %v773 = vunpack.c.l.b16 %v446
      %v774 = vunpack.c.l.b16 %v456
      %v775 = vunpack.c.l.b16 %v470
      %v776 = vunpack.c.l.b16 %v480
      %v777 = vunpack.c.l.b16 %v494
      %v778 = vunpack.c.l.b16 %v504
      %v779 = vunpack.c.l.b16 %v518
      %v780 = vunpack.c.l.b16 %v528
      %v781 = vunpack.c.l.b16 %v542
      %v782 = vunpack.c.l.b16 %v552
      %v783 = vunpack.c.l.b16 %v566
      %v784 = vunpack.c.l.b16 %v576
      %v785 = vunpack.c.l.b16 %v590
      %v786 = vunpack.c.l.b16 %v600
      %v787 = vunpack.c.l.b16 %v614
      %v788 = vunpack.c.l.b16 %v624
      %v789 = vunpack.c.l.b16 %v638
      %v790 = vunpack.c.l.b16 %v648
      %v791 = vunpack.c.l.b16 %v662
      %v792 = vunpack.c.l.b16 %v672
      %v793 = vunpack.c.l.b16 %v686
      %v794 = vunpack.c.l.b16 %v696
      %v795 = vunpack.c.l.b16 %v710
      %v796 = vunpack.c.l.b16 %v720
      %v797 = vunpack.c.l.b16 %v734
      %v798 = vunpack.c.l.b16 %v744
      %v799 = vunpack.c.l.b16 %v758
      %v800 = vunpack.c.l.b16 %v768
      %v801 = vpack.c.b16 %v770, %v769
      %v802 = vpack.c.b16 %v772, %v771
      %v803 = vpack.c.b16 %v774, %v773
      %v804 = vpack.c.b16 %v776, %v775
      %v805 = vpack.c.b16 %v778, %v777
      %v806 = vpack.c.b16 %v780, %v779
      %v807 = vpack.c.b16 %v782, %v781
      %v808 = vpack.c.b16 %v784, %v783
      %v809 = vpack.c.b16 %v786, %v785
      %v810 = vpack.c.b16 %v788, %v787
      %v811 = vpack.c.b16 %v790, %v789
      %v812 = vpack.c.b16 %v792, %v791
      %v813 = vpack.c.b16 %v794, %v793
      %v814 = vpack.c.b16 %v796, %v795
      %v815 = vpack.c.b16 %v798, %v797
      %v816 = vpack.c.b16 %v800, %v799
      %817 = vrot.lane.b32.xlu0 %v801, 8
      %v818 = vpop.permute.xlu0 %817
      %819 = vrot.lane.b32.xlu0 %v802, 8
      %v820 = vpop.permute.xlu0 %819
      %821 = vrot.lane.b32.xlu0 %v803, 8
      %v822 = vpop.permute.xlu0 %821
      %823 = vrot.lane.b32.xlu0 %v804, 8
      %v824 = vpop.permute.xlu0 %823
      %825 = vrot.lane.b32.xlu0 %v805, 8
      %v826 = vpop.permute.xlu0 %825
      %827 = vrot.lane.b32.xlu0 %v806, 8
      %v828 = vpop.permute.xlu0 %827
      %829 = vrot.lane.b32.xlu0 %v807, 8
      %v830 = vpop.permute.xlu0 %829
      %831 = vrot.lane.b32.xlu0 %v808, 8
      %v832 = vpop.permute.xlu0 %831
      %833 = vrot.lane.b32.xlu0 %v809, 8
      %v834 = vpop.permute.xlu0 %833
      %835 = vrot.lane.b32.xlu0 %v810, 8
      %v836 = vpop.permute.xlu0 %835
      %837 = vrot.lane.b32.xlu0 %v811, 8
      %v838 = vpop.permute.xlu0 %837
      %839 = vrot.lane.b32.xlu0 %v812, 8
      %v840 = vpop.permute.xlu0 %839
      %841 = vrot.lane.b32.xlu0 %v813, 8
      %v842 = vpop.permute.xlu0 %841
      %843 = vrot.lane.b32.xlu0 %v814, 8
      %v844 = vpop.permute.xlu0 %843
      %845 = vrot.lane.b32.xlu0 %v815, 8
      %v846 = vpop.permute.xlu0 %845
      %847 = vrot.lane.b32.xlu0 %v816, 8
      %v848 = vpop.permute.xlu0 %847
      %vm865 = vcmask 130112
      %866 = vst.msk [vmem:[#allocation2] sm:$0xff] %vm865, %v818
      %867 = vst.msk [vmem:[#allocation2 + $0x8] sm:$0xff] %vm865, %v820
      %868 = vst.msk [vmem:[#allocation2 + $0x10] sm:$0xff] %vm865, %v822
      %869 = vst.msk [vmem:[#allocation2 + $0x18] sm:$0xff] %vm865, %v824
      %870 = vst.msk [vmem:[#allocation2 + $0x20] sm:$0xff] %vm865, %v826
      %871 = vst.msk [vmem:[#allocation2 + $0x28] sm:$0xff] %vm865, %v828
      %872 = vst.msk [vmem:[#allocation2 + $0x30] sm:$0xff] %vm865, %v830
      %873 = vst.msk [vmem:[#allocation2 + $0x38] sm:$0xff] %vm865, %v832
      %874 = vst.msk [vmem:[#allocation2 + $0x40] sm:$0xff] %vm865, %v834
      %875 = vst.msk [vmem:[#allocation2 + $0x48] sm:$0xff] %vm865, %v836
      %876 = vst.msk [vmem:[#allocation2 + $0x50] sm:$0xff] %vm865, %v838
      %877 = vst.msk [vmem:[#allocation2 + $0x58] sm:$0xff] %vm865, %v840
      %878 = vst.msk [vmem:[#allocation2 + $0x60] sm:$0xff] %vm865, %v842
      %879 = vst.msk [vmem:[#allocation2 + $0x68] sm:$0xff] %vm865, %v844
      %880 = vst.msk [vmem:[#allocation2 + $0x70] sm:$0xff] %vm865, %v846
      %881 = vst.msk [vmem:[#allocation2 + $0x78] sm:$0xff] %vm865, %v848
      %v882 = vld [vmem:[%s165] sm:$0xe]
      %v883 = vld [vmem:[%s165 + $0x4] sm:$0xf]
      %v884 = vld [vmem:[%s165 + $0x8] sm:$0x1]
      %v885 = vld [vmem:[%s165 + $0xc] sm:$0xe]
      %v886 = vld [vmem:[%s165 + $0x10] sm:$0xf]
      %v887 = vld [vmem:[%s165 + $0x14] sm:$0x1]
      %v888 = vld [vmem:[%s165 + $0x18] sm:$0xe]
      %v889 = vld [vmem:[%s165 + $0x1c] sm:$0xf]
      %v890 = vld [vmem:[%s165 + $0x20] sm:$0x1]
      %v891 = vld [vmem:[%s165 + $0x24] sm:$0xe]
      %v892 = vld [vmem:[%s165 + $0x28] sm:$0xf]
      %v893 = vld [vmem:[%s165 + $0x2c] sm:$0x1]
      %v894 = vld [vmem:[%s165 + $0x30] sm:$0xe]
      %v895 = vld [vmem:[%s165 + $0x34] sm:$0xf]
      %v896 = vld [vmem:[%s165 + $0x38] sm:$0x1]
      %v897 = vld [vmem:[%s165 + $0x3c] sm:$0xe]
      %v898 = vld [vmem:[%s165 + $0x40] sm:$0xf]
      %v899 = vld [vmem:[%s165 + $0x44] sm:$0x1]
      %v900 = vld [vmem:[%s165 + $0x48] sm:$0xe]
      %v901 = vld [vmem:[%s165 + $0x4c] sm:$0xf]
      %v902 = vld [vmem:[%s165 + $0x50] sm:$0x1]
      %v903 = vld [vmem:[%s165 + $0x54] sm:$0xe]
      %v904 = vld [vmem:[%s165 + $0x58] sm:$0xf]
      %v905 = vld [vmem:[%s165 + $0x5c] sm:$0x1]
      %v906 = vld [vmem:[%s165 + $0x60] sm:$0xe]
      %v907 = vld [vmem:[%s165 + $0x64] sm:$0xf]
      %v908 = vld [vmem:[%s165 + $0x68] sm:$0x1]
      %v909 = vld [vmem:[%s165 + $0x6c] sm:$0xe]
      %v910 = vld [vmem:[%s165 + $0x70] sm:$0xf]
      %v911 = vld [vmem:[%s165 + $0x74] sm:$0x1]
      %v912 = vld [vmem:[%s165 + $0x78] sm:$0xe]
      %v913 = vld [vmem:[%s165 + $0x7c] sm:$0xf]
      %v914 = vld [vmem:[%s165 + $0x80] sm:$0x1]
      %v915 = vld [vmem:[%s165 + $0x84] sm:$0xe]
      %v916 = vld [vmem:[%s165 + $0x88] sm:$0xf]
      %v917 = vld [vmem:[%s165 + $0x8c] sm:$0x1]
      %v918 = vld [vmem:[%s165 + $0x90] sm:$0xe]
      %v919 = vld [vmem:[%s165 + $0x94] sm:$0xf]
      %v920 = vld [vmem:[%s165 + $0x98] sm:$0x1]
      %v921 = vld [vmem:[%s165 + $0x9c] sm:$0xe]
      %v922 = vld [vmem:[%s165 + $0xa0] sm:$0xf]
      %v923 = vld [vmem:[%s165 + $0xa4] sm:$0x1]
      %v924 = vld [vmem:[%s165 + $0xa8] sm:$0xe]
      %v925 = vld [vmem:[%s165 + $0xac] sm:$0xf]
      %v926 = vld [vmem:[%s165 + $0xb0] sm:$0x1]
      %v927 = vld [vmem:[%s165 + $0xb4] sm:$0xe]
      %v928 = vld [vmem:[%s165 + $0xb8] sm:$0xf]
      %v929 = vld [vmem:[%s165 + $0xbc] sm:$0x1]
      %vm978 = vcmask 1042432
      %vm979 = vcmask 1046532
      %vm980 = vmor %vm978, %vm979
      %v981 = vrot.slane %v882, 5
      %v982 = vrot.slane %v981, 4
      %v983 = vrot.slane %v883, 5
      %v984 = vsel %vm980, %v982, %v983
      %v985 = vrot.slane %v983, 4
      %v986 = vrot.slane %v884, 5
      %v987 = vsel %vm980, %v985, %v986
      %v988 = vrot.slane %v885, 5
      %v989 = vrot.slane %v988, 4
      %v990 = vrot.slane %v886, 5
      %v991 = vsel %vm980, %v989, %v990
      %v992 = vrot.slane %v990, 4
      %v993 = vrot.slane %v887, 5
      %v994 = vsel %vm980, %v992, %v993
      %v995 = vrot.slane %v888, 5
      %v996 = vrot.slane %v995, 4
      %v997 = vrot.slane %v889, 5
      %v998 = vsel %vm980, %v996, %v997
      %v999 = vrot.slane %v997, 4
      %v1000 = vrot.slane %v890, 5
      %v1001 = vsel %vm980, %v999, %v1000
      %v1002 = vrot.slane %v891, 5
      %v1003 = vrot.slane %v1002, 4
      %v1004 = vrot.slane %v892, 5
      %v1005 = vsel %vm980, %v1003, %v1004
      %v1006 = vrot.slane %v1004, 4
      %v1007 = vrot.slane %v893, 5
      %v1008 = vsel %vm980, %v1006, %v1007
      %v1009 = vrot.slane %v894, 5
      %v1010 = vrot.slane %v1009, 4
      %v1011 = vrot.slane %v895, 5
      %v1012 = vsel %vm980, %v1010, %v1011
      %v1013 = vrot.slane %v1011, 4
      %v1014 = vrot.slane %v896, 5
      %v1015 = vsel %vm980, %v1013, %v1014
      %v1016 = vrot.slane %v897, 5
      %v1017 = vrot.slane %v1016, 4
      %v1018 = vrot.slane %v898, 5
      %v1019 = vsel %vm980, %v1017, %v1018
      %v1020 = vrot.slane %v1018, 4
      %v1021 = vrot.slane %v899, 5
      %v1022 = vsel %vm980, %v1020, %v1021
      %v1023 = vrot.slane %v900, 5
      %v1024 = vrot.slane %v1023, 4
      %v1025 = vrot.slane %v901, 5
      %v1026 = vsel %vm980, %v1024, %v1025
      %v1027 = vrot.slane %v1025, 4
      %v1028 = vrot.slane %v902, 5
      %v1029 = vsel %vm980, %v1027, %v1028
      %v1030 = vrot.slane %v903, 5
      %v1031 = vrot.slane %v1030, 4
      %v1032 = vrot.slane %v904, 5
      %v1033 = vsel %vm980, %v1031, %v1032
      %v1034 = vrot.slane %v1032, 4
      %v1035 = vrot.slane %v905, 5
      %v1036 = vsel %vm980, %v1034, %v1035
      %v1037 = vrot.slane %v906, 5
      %v1038 = vrot.slane %v1037, 4
      %v1039 = vrot.slane %v907, 5
      %v1040 = vsel %vm980, %v1038, %v1039
      %v1041 = vrot.slane %v1039, 4
      %v1042 = vrot.slane %v908, 5
      %v1043 = vsel %vm980, %v1041, %v1042
      %v1044 = vrot.slane %v909, 5
      %v1045 = vrot.slane %v1044, 4
      %v1046 = vrot.slane %v910, 5
      %v1047 = vsel %vm980, %v1045, %v1046
      %v1048 = vrot.slane %v1046, 4
      %v1049 = vrot.slane %v911, 5
      %v1050 = vsel %vm980, %v1048, %v1049
      %v1051 = vrot.slane %v912, 5
      %v1052 = vrot.slane %v1051, 4
      %v1053 = vrot.slane %v913, 5
      %v1054 = vsel %vm980, %v1052, %v1053
      %v1055 = vrot.slane %v1053, 4
      %v1056 = vrot.slane %v914, 5
      %v1057 = vsel %vm980, %v1055, %v1056
      %v1058 = vrot.slane %v915, 5
      %v1059 = vrot.slane %v1058, 4
      %v1060 = vrot.slane %v916, 5
      %v1061 = vsel %vm980, %v1059, %v1060
      %v1062 = vrot.slane %v1060, 4
      %v1063 = vrot.slane %v917, 5
      %v1064 = vsel %vm980, %v1062, %v1063
      %v1065 = vrot.slane %v918, 5
      %v1066 = vrot.slane %v1065, 4
      %v1067 = vrot.slane %v919, 5
      %v1068 = vsel %vm980, %v1066, %v1067
      %v1069 = vrot.slane %v1067, 4
      %v1070 = vrot.slane %v920, 5
      %v1071 = vsel %vm980, %v1069, %v1070
      %v1072 = vrot.slane %v921, 5
      %v1073 = vrot.slane %v1072, 4
      %v1074 = vrot.slane %v922, 5
      %v1075 = vsel %vm980, %v1073, %v1074
      %v1076 = vrot.slane %v1074, 4
      %v1077 = vrot.slane %v923, 5
      %v1078 = vsel %vm980, %v1076, %v1077
      %v1079 = vrot.slane %v924, 5
      %v1080 = vrot.slane %v1079, 4
      %v1081 = vrot.slane %v925, 5
      %v1082 = vsel %vm980, %v1080, %v1081
      %v1083 = vrot.slane %v1081, 4
      %v1084 = vrot.slane %v926, 5
      %v1085 = vsel %vm980, %v1083, %v1084
      %v1086 = vrot.slane %v927, 5
      %v1087 = vrot.slane %v1086, 4
      %v1088 = vrot.slane %v928, 5
      %v1089 = vsel %vm980, %v1087, %v1088
      %v1090 = vrot.slane %v1088, 4
      %v1091 = vrot.slane %v929, 5
      %v1092 = vsel %vm980, %v1090, %v1091
      %v1093 = vunpack.c.l.b16 %v984
      %v1094 = vunpack.c.l.b16 %v987
      %v1095 = vunpack.c.l.b16 %v991
      %v1096 = vunpack.c.l.b16 %v994
      %v1097 = vunpack.c.l.b16 %v998
      %v1098 = vunpack.c.l.b16 %v1001
      %v1099 = vunpack.c.l.b16 %v1005
      %v1100 = vunpack.c.l.b16 %v1008
      %v1101 = vunpack.c.l.b16 %v1012
      %v1102 = vunpack.c.l.b16 %v1015
      %v1103 = vunpack.c.l.b16 %v1019
      %v1104 = vunpack.c.l.b16 %v1022
      %v1105 = vunpack.c.l.b16 %v1026
      %v1106 = vunpack.c.l.b16 %v1029
      %v1107 = vunpack.c.l.b16 %v1033
      %v1108 = vunpack.c.l.b16 %v1036
      %v1109 = vunpack.c.l.b16 %v1040
      %v1110 = vunpack.c.l.b16 %v1043
      %v1111 = vunpack.c.l.b16 %v1047
      %v1112 = vunpack.c.l.b16 %v1050
      %v1113 = vunpack.c.l.b16 %v1054
      %v1114 = vunpack.c.l.b16 %v1057
      %v1115 = vunpack.c.l.b16 %v1061
      %v1116 = vunpack.c.l.b16 %v1064
      %v1117 = vunpack.c.l.b16 %v1068
      %v1118 = vunpack.c.l.b16 %v1071
      %v1119 = vunpack.c.l.b16 %v1075
      %v1120 = vunpack.c.l.b16 %v1078
      %v1121 = vunpack.c.l.b16 %v1082
      %v1122 = vunpack.c.l.b16 %v1085
      %v1123 = vunpack.c.l.b16 %v1089
      %v1124 = vunpack.c.l.b16 %v1092
      %v1125 = vpack.c.b16 %v1094, %v1093
      %v1126 = vpack.c.b16 %v1096, %v1095
      %v1127 = vpack.c.b16 %v1098, %v1097
      %v1128 = vpack.c.b16 %v1100, %v1099
      %v1129 = vpack.c.b16 %v1102, %v1101
      %v1130 = vpack.c.b16 %v1104, %v1103
      %v1131 = vpack.c.b16 %v1106, %v1105
      %v1132 = vpack.c.b16 %v1108, %v1107
      %v1133 = vpack.c.b16 %v1110, %v1109
      %v1134 = vpack.c.b16 %v1112, %v1111
      %v1135 = vpack.c.b16 %v1114, %v1113
      %v1136 = vpack.c.b16 %v1116, %v1115
      %v1137 = vpack.c.b16 %v1118, %v1117
      %v1138 = vpack.c.b16 %v1120, %v1119
      %v1139 = vpack.c.b16 %v1122, %v1121
      %v1140 = vpack.c.b16 %v1124, %v1123
      %1141 = vrot.lane.b32.xlu0 %v1125, 16
      %v1142 = vpop.permute.xlu0 %1141
      %1143 = vrot.lane.b32.xlu0 %v1126, 16
      %v1144 = vpop.permute.xlu0 %1143
      %1145 = vrot.lane.b32.xlu0 %v1127, 16
      %v1146 = vpop.permute.xlu0 %1145
      %1147 = vrot.lane.b32.xlu0 %v1128, 16
      %v1148 = vpop.permute.xlu0 %1147
      %1149 = vrot.lane.b32.xlu0 %v1129, 16
      %v1150 = vpop.permute.xlu0 %1149
      %1151 = vrot.lane.b32.xlu0 %v1130, 16
      %v1152 = vpop.permute.xlu0 %1151
      %1153 = vrot.lane.b32.xlu0 %v1131, 16
      %v1154 = vpop.permute.xlu0 %1153
      %1155 = vrot.lane.b32.xlu0 %v1132, 16
      %v1156 = vpop.permute.xlu0 %1155
      %1157 = vrot.lane.b32.xlu0 %v1133, 16
      %v1158 = vpop.permute.xlu0 %1157
      %1159 = vrot.lane.b32.xlu0 %v1134, 16
      %v1160 = vpop.permute.xlu0 %1159
      %1161 = vrot.lane.b32.xlu0 %v1135, 16
      %v1162 = vpop.permute.xlu0 %1161
      %1163 = vrot.lane.b32.xlu0 %v1136, 16
      %v1164 = vpop.permute.xlu0 %1163
      %1165 = vrot.lane.b32.xlu0 %v1137, 16
      %v1166 = vpop.permute.xlu0 %1165
      %1167 = vrot.lane.b32.xlu0 %v1138, 16
      %v1168 = vpop.permute.xlu0 %1167
      %1169 = vrot.lane.b32.xlu0 %v1139, 16
      %v1170 = vpop.permute.xlu0 %1169
      %1171 = vrot.lane.b32.xlu0 %v1140, 16
      %v1172 = vpop.permute.xlu0 %1171
      %vm1189 = vcmask 195712
      %1190 = vst.msk [vmem:[#allocation2] sm:$0xff] %vm1189, %v1142
      %1191 = vst.msk [vmem:[#allocation2 + $0x8] sm:$0xff] %vm1189, %v1144
      %1192 = vst.msk [vmem:[#allocation2 + $0x10] sm:$0xff] %vm1189, %v1146
      %1193 = vst.msk [vmem:[#allocation2 + $0x18] sm:$0xff] %vm1189, %v1148
      %1194 = vst.msk [vmem:[#allocation2 + $0x20] sm:$0xff] %vm1189, %v1150
      %1195 = vst.msk [vmem:[#allocation2 + $0x28] sm:$0xff] %vm1189, %v1152
      %1196 = vst.msk [vmem:[#allocation2 + $0x30] sm:$0xff] %vm1189, %v1154
      %1197 = vst.msk [vmem:[#allocation2 + $0x38] sm:$0xff] %vm1189, %v1156
      %1198 = vst.msk [vmem:[#allocation2 + $0x40] sm:$0xff] %vm1189, %v1158
      %1199 = vst.msk [vmem:[#allocation2 + $0x48] sm:$0xff] %vm1189, %v1160
      %1200 = vst.msk [vmem:[#allocation2 + $0x50] sm:$0xff] %vm1189, %v1162
      %1201 = vst.msk [vmem:[#allocation2 + $0x58] sm:$0xff] %vm1189, %v1164
      %1202 = vst.msk [vmem:[#allocation2 + $0x60] sm:$0xff] %vm1189, %v1166
      %1203 = vst.msk [vmem:[#allocation2 + $0x68] sm:$0xff] %vm1189, %v1168
      %1204 = vst.msk [vmem:[#allocation2 + $0x70] sm:$0xff] %vm1189, %v1170
      %1205 = vst.msk [vmem:[#allocation2 + $0x78] sm:$0xff] %vm1189, %v1172
      %s1206 = scalar_lea.vmem %s165, 12
      %v1207 = vld [vmem:[%s1206] sm:$0xf]
      %v1208 = vld [vmem:[%s1206 + $0x4] sm:$0xf]
      %v1209 = vld [vmem:[%s1206 + $0xc] sm:$0xf]
      %v1210 = vld [vmem:[%s1206 + $0x10] sm:$0xf]
      %v1211 = vld [vmem:[%s1206 + $0x18] sm:$0xf]
      %v1212 = vld [vmem:[%s1206 + $0x1c] sm:$0xf]
      %v1213 = vld [vmem:[%s1206 + $0x24] sm:$0xf]
      %v1214 = vld [vmem:[%s1206 + $0x28] sm:$0xf]
      %v1215 = vld [vmem:[%s1206 + $0x30] sm:$0xf]
      %v1216 = vld [vmem:[%s1206 + $0x34] sm:$0xf]
      %v1217 = vld [vmem:[%s1206 + $0x3c] sm:$0xf]
      %v1218 = vld [vmem:[%s1206 + $0x40] sm:$0xf]
      %v1219 = vld [vmem:[%s1206 + $0x48] sm:$0xf]
      %v1220 = vld [vmem:[%s1206 + $0x4c] sm:$0xf]
      %v1221 = vld [vmem:[%s1206 + $0x54] sm:$0xf]
      %v1222 = vld [vmem:[%s1206 + $0x58] sm:$0xf]
      %v1223 = vld [vmem:[%s1206 + $0x60] sm:$0xf]
      %v1224 = vld [vmem:[%s1206 + $0x64] sm:$0xf]
      %v1225 = vld [vmem:[%s1206 + $0x6c] sm:$0xf]
      %v1226 = vld [vmem:[%s1206 + $0x70] sm:$0xf]
      %v1227 = vld [vmem:[%s1206 + $0x78] sm:$0xf]
      %v1228 = vld [vmem:[%s1206 + $0x7c] sm:$0xf]
      %v1229 = vld [vmem:[%s1206 + $0x84] sm:$0xf]
      %v1230 = vld [vmem:[%s1206 + $0x88] sm:$0xf]
      %v1231 = vld [vmem:[%s1206 + $0x90] sm:$0xf]
      %v1232 = vld [vmem:[%s1206 + $0x94] sm:$0xf]
      %v1233 = vld [vmem:[%s1206 + $0x9c] sm:$0xf]
      %v1234 = vld [vmem:[%s1206 + $0xa0] sm:$0xf]
      %v1235 = vld [vmem:[%s1206 + $0xa8] sm:$0xf]
      %v1236 = vld [vmem:[%s1206 + $0xac] sm:$0xf]
      %v1237 = vld [vmem:[%s1206 + $0xb4] sm:$0xf]
      %v1238 = vld [vmem:[%s1206 + $0xb8] sm:$0xf]
      %v1271 = vunpack.c.l.b16 %v1207
      %v1272 = vunpack.c.l.b16 %v1208
      %v1273 = vunpack.c.l.b16 %v1209
      %v1274 = vunpack.c.l.b16 %v1210
      %v1275 = vunpack.c.l.b16 %v1211
      %v1276 = vunpack.c.l.b16 %v1212
      %v1277 = vunpack.c.l.b16 %v1213
      %v1278 = vunpack.c.l.b16 %v1214
      %v1279 = vunpack.c.l.b16 %v1215
      %v1280 = vunpack.c.l.b16 %v1216
      %v1281 = vunpack.c.l.b16 %v1217
      %v1282 = vunpack.c.l.b16 %v1218
      %v1283 = vunpack.c.l.b16 %v1219
      %v1284 = vunpack.c.l.b16 %v1220
      %v1285 = vunpack.c.l.b16 %v1221
      %v1286 = vunpack.c.l.b16 %v1222
      %v1287 = vunpack.c.l.b16 %v1223
      %v1288 = vunpack.c.l.b16 %v1224
      %v1289 = vunpack.c.l.b16 %v1225
      %v1290 = vunpack.c.l.b16 %v1226
      %v1291 = vunpack.c.l.b16 %v1227
      %v1292 = vunpack.c.l.b16 %v1228
      %v1293 = vunpack.c.l.b16 %v1229
      %v1294 = vunpack.c.l.b16 %v1230
      %v1295 = vunpack.c.l.b16 %v1231
      %v1296 = vunpack.c.l.b16 %v1232
      %v1297 = vunpack.c.l.b16 %v1233
      %v1298 = vunpack.c.l.b16 %v1234
      %v1299 = vunpack.c.l.b16 %v1235
      %v1300 = vunpack.c.l.b16 %v1236
      %v1301 = vunpack.c.l.b16 %v1237
      %v1302 = vunpack.c.l.b16 %v1238
      %v1303 = vpack.c.b16 %v1272, %v1271
      %v1304 = vpack.c.b16 %v1274, %v1273
      %v1305 = vpack.c.b16 %v1276, %v1275
      %v1306 = vpack.c.b16 %v1278, %v1277
      %v1307 = vpack.c.b16 %v1280, %v1279
      %v1308 = vpack.c.b16 %v1282, %v1281
      %v1309 = vpack.c.b16 %v1284, %v1283
      %v1310 = vpack.c.b16 %v1286, %v1285
      %v1311 = vpack.c.b16 %v1288, %v1287
      %v1312 = vpack.c.b16 %v1290, %v1289
      %v1313 = vpack.c.b16 %v1292, %v1291
      %v1314 = vpack.c.b16 %v1294, %v1293
      %v1315 = vpack.c.b16 %v1296, %v1295
      %v1316 = vpack.c.b16 %v1298, %v1297
      %v1317 = vpack.c.b16 %v1300, %v1299
      %v1318 = vpack.c.b16 %v1302, %v1301
      %1319 = vrot.lane.b32.xlu0 %v1303, 24
      %v1320 = vpop.permute.xlu0 %1319
      %1321 = vrot.lane.b32.xlu0 %v1304, 24
      %v1322 = vpop.permute.xlu0 %1321
      %1323 = vrot.lane.b32.xlu0 %v1305, 24
      %v1324 = vpop.permute.xlu0 %1323
      %1325 = vrot.lane.b32.xlu0 %v1306, 24
      %v1326 = vpop.permute.xlu0 %1325
      %1327 = vrot.lane.b32.xlu0 %v1307, 24
      %v1328 = vpop.permute.xlu0 %1327
      %1329 = vrot.lane.b32.xlu0 %v1308, 24
      %v1330 = vpop.permute.xlu0 %1329
      %1331 = vrot.lane.b32.xlu0 %v1309, 24
      %v1332 = vpop.permute.xlu0 %1331
      %1333 = vrot.lane.b32.xlu0 %v1310, 24
      %v1334 = vpop.permute.xlu0 %1333
      %1335 = vrot.lane.b32.xlu0 %v1311, 24
      %v1336 = vpop.permute.xlu0 %1335
      %1337 = vrot.lane.b32.xlu0 %v1312, 24
      %v1338 = vpop.permute.xlu0 %1337
      %1339 = vrot.lane.b32.xlu0 %v1313, 24
      %v1340 = vpop.permute.xlu0 %1339
      %1341 = vrot.lane.b32.xlu0 %v1314, 24
      %v1342 = vpop.permute.xlu0 %1341
      %1343 = vrot.lane.b32.xlu0 %v1315, 24
      %v1344 = vpop.permute.xlu0 %1343
      %1345 = vrot.lane.b32.xlu0 %v1316, 24
      %v1346 = vpop.permute.xlu0 %1345
      %1347 = vrot.lane.b32.xlu0 %v1317, 24
      %v1348 = vpop.permute.xlu0 %1347
      %1349 = vrot.lane.b32.xlu0 %v1318, 24
      %v1350 = vpop.permute.xlu0 %1349
      %vm1367 = vcmask 261312
      %1368 = vst.msk [vmem:[#allocation2] sm:$0xff] %vm1367, %v1320
      %1369 = vst.msk [vmem:[#allocation2 + $0x8] sm:$0xff] %vm1367, %v1322
      %1370 = vst.msk [vmem:[#allocation2 + $0x10] sm:$0xff] %vm1367, %v1324
      %1371 = vst.msk [vmem:[#allocation2 + $0x18] sm:$0xff] %vm1367, %v1326
      %1372 = vst.msk [vmem:[#allocation2 + $0x20] sm:$0xff] %vm1367, %v1328
      %1373 = vst.msk [vmem:[#allocation2 + $0x28] sm:$0xff] %vm1367, %v1330
      %1374 = vst.msk [vmem:[#allocation2 + $0x30] sm:$0xff] %vm1367, %v1332
      %1375 = vst.msk [vmem:[#allocation2 + $0x38] sm:$0xff] %vm1367, %v1334
      %1376 = vst.msk [vmem:[#allocation2 + $0x40] sm:$0xff] %vm1367, %v1336
      %1377 = vst.msk [vmem:[#allocation2 + $0x48] sm:$0xff] %vm1367, %v1338
      %1378 = vst.msk [vmem:[#allocation2 + $0x50] sm:$0xff] %vm1367, %v1340
      %1379 = vst.msk [vmem:[#allocation2 + $0x58] sm:$0xff] %vm1367, %v1342
      %1380 = vst.msk [vmem:[#allocation2 + $0x60] sm:$0xff] %vm1367, %v1344
      %1381 = vst.msk [vmem:[#allocation2 + $0x68] sm:$0xff] %vm1367, %v1346
      %1382 = vst.msk [vmem:[#allocation2 + $0x70] sm:$0xff] %vm1367, %v1348
      %1383 = vst.msk [vmem:[#allocation2 + $0x78] sm:$0xff] %vm1367, %v1350
      %v1384 = vld [vmem:[%s1206] sm:$0xf]
      %v1385 = vld [vmem:[%s1206 + $0x4] sm:$0xf]
      %v1386 = vld [vmem:[%s1206 + $0x8] sm:$0x1]
      %v1387 = vld [vmem:[%s1206 + $0xc] sm:$0xf]
      %v1388 = vld [vmem:[%s1206 + $0x10] sm:$0xf]
      %v1389 = vld [vmem:[%s1206 + $0x14] sm:$0x1]
      %v1390 = vld [vmem:[%s1206 + $0x18] sm:$0xf]
      %v1391 = vld [vmem:[%s1206 + $0x1c] sm:$0xf]
      %v1392 = vld [vmem:[%s1206 + $0x20] sm:$0x1]
      %v1393 = vld [vmem:[%s1206 + $0x24] sm:$0xf]
      %v1394 = vld [vmem:[%s1206 + $0x28] sm:$0xf]
      %v1395 = vld [vmem:[%s1206 + $0x2c] sm:$0x1]
      %v1396 = vld [vmem:[%s1206 + $0x30] sm:$0xf]
      %v1397 = vld [vmem:[%s1206 + $0x34] sm:$0xf]
      %v1398 = vld [vmem:[%s1206 + $0x38] sm:$0x1]
      %v1399 = vld [vmem:[%s1206 + $0x3c] sm:$0xf]
      %v1400 = vld [vmem:[%s1206 + $0x40] sm:$0xf]
      %v1401 = vld [vmem:[%s1206 + $0x44] sm:$0x1]
      %v1402 = vld [vmem:[%s1206 + $0x48] sm:$0xf]
      %v1403 = vld [vmem:[%s1206 + $0x4c] sm:$0xf]
      %v1404 = vld [vmem:[%s1206 + $0x50] sm:$0x1]
      %v1405 = vld [vmem:[%s1206 + $0x54] sm:$0xf]
      %v1406 = vld [vmem:[%s1206 + $0x58] sm:$0xf]
      %v1407 = vld [vmem:[%s1206 + $0x5c] sm:$0x1]
      %v1408 = vld [vmem:[%s1206 + $0x60] sm:$0xf]
      %v1409 = vld [vmem:[%s1206 + $0x64] sm:$0xf]
      %v1410 = vld [vmem:[%s1206 + $0x68] sm:$0x1]
      %v1411 = vld [vmem:[%s1206 + $0x6c] sm:$0xf]
      %v1412 = vld [vmem:[%s1206 + $0x70] sm:$0xf]
      %v1413 = vld [vmem:[%s1206 + $0x74] sm:$0x1]
      %v1414 = vld [vmem:[%s1206 + $0x78] sm:$0xf]
      %v1415 = vld [vmem:[%s1206 + $0x7c] sm:$0xf]
      %v1416 = vld [vmem:[%s1206 + $0x80] sm:$0x1]
      %v1417 = vld [vmem:[%s1206 + $0x84] sm:$0xf]
      %v1418 = vld [vmem:[%s1206 + $0x88] sm:$0xf]
      %v1419 = vld [vmem:[%s1206 + $0x8c] sm:$0x1]
      %v1420 = vld [vmem:[%s1206 + $0x90] sm:$0xf]
      %v1421 = vld [vmem:[%s1206 + $0x94] sm:$0xf]
      %v1422 = vld [vmem:[%s1206 + $0x98] sm:$0x1]
      %v1423 = vld [vmem:[%s1206 + $0x9c] sm:$0xf]
      %v1424 = vld [vmem:[%s1206 + $0xa0] sm:$0xf]
      %v1425 = vld [vmem:[%s1206 + $0xa4] sm:$0x1]
      %v1426 = vld [vmem:[%s1206 + $0xa8] sm:$0xf]
      %v1427 = vld [vmem:[%s1206 + $0xac] sm:$0xf]
      %v1428 = vld [vmem:[%s1206 + $0xb0] sm:$0x1]
      %v1429 = vld [vmem:[%s1206 + $0xb4] sm:$0xf]
      %v1430 = vld [vmem:[%s1206 + $0xb8] sm:$0xf]
      %v1431 = vld [vmem:[%s1206 + $0xbc] sm:$0x1]
      %v1433 = vshrl.u32 %v1384, 16
      %v1435 = vrot.slane %v1433, 4
      %v1436 = vshll.u32 %v1384, 16
      %v1438 = vrot.slane %v1436, 5
      %v1439 = vor.u32 %v1435, %v1438
      %v1440 = vrot.slane %v1439, 4
      %v1442 = vshll.u32 %v1385, 16
      %v1444 = vrot.slane %v1442, 5
      %v1445 = vsel %vm384, %v1440, %v1444
      %v1446 = vshrl.u32 %v1385, 16
      %v1448 = vrot.slane %v1446, 4
      %v1449 = vor.u32 %v1448, %v1444
      %v1450 = vrot.slane %v1449, 4
      %v1452 = vshll.u32 %v1386, 16
      %v1454 = vrot.slane %v1452, 5
      %v1455 = vsel %vm384, %v1450, %v1454
      %v1457 = vshrl.u32 %v1387, 16
      %v1459 = vrot.slane %v1457, 4
      %v1460 = vshll.u32 %v1387, 16
      %v1462 = vrot.slane %v1460, 5
      %v1463 = vor.u32 %v1459, %v1462
      %v1464 = vrot.slane %v1463, 4
      %v1466 = vshll.u32 %v1388, 16
      %v1468 = vrot.slane %v1466, 5
      %v1469 = vsel %vm384, %v1464, %v1468
      %v1470 = vshrl.u32 %v1388, 16
      %v1472 = vrot.slane %v1470, 4
      %v1473 = vor.u32 %v1472, %v1468
      %v1474 = vrot.slane %v1473, 4
      %v1476 = vshll.u32 %v1389, 16
      %v1478 = vrot.slane %v1476, 5
      %v1479 = vsel %vm384, %v1474, %v1478
      %v1481 = vshrl.u32 %v1390, 16
      %v1483 = vrot.slane %v1481, 4
      %v1484 = vshll.u32 %v1390, 16
      %v1486 = vrot.slane %v1484, 5
      %v1487 = vor.u32 %v1483, %v1486
      %v1488 = vrot.slane %v1487, 4
      %v1490 = vshll.u32 %v1391, 16
      %v1492 = vrot.slane %v1490, 5
      %v1493 = vsel %vm384, %v1488, %v1492
      %v1494 = vshrl.u32 %v1391, 16
      %v1496 = vrot.slane %v1494, 4
      %v1497 = vor.u32 %v1496, %v1492
      %v1498 = vrot.slane %v1497, 4
      %v1500 = vshll.u32 %v1392, 16
      %v1502 = vrot.slane %v1500, 5
      %v1503 = vsel %vm384, %v1498, %v1502
      %v1505 = vshrl.u32 %v1393, 16
      %v1507 = vrot.slane %v1505, 4
      %v1508 = vshll.u32 %v1393, 16
      %v1510 = vrot.slane %v1508, 5
      %v1511 = vor.u32 %v1507, %v1510
      %v1512 = vrot.slane %v1511, 4
      %v1514 = vshll.u32 %v1394, 16
      %v1516 = vrot.slane %v1514, 5
      %v1517 = vsel %vm384, %v1512, %v1516
      %v1518 = vshrl.u32 %v1394, 16
      %v1520 = vrot.slane %v1518, 4
      %v1521 = vor.u32 %v1520, %v1516
      %v1522 = vrot.slane %v1521, 4
      %v1524 = vshll.u32 %v1395, 16
      %v1526 = vrot.slane %v1524, 5
      %v1527 = vsel %vm384, %v1522, %v1526
      %v1529 = vshrl.u32 %v1396, 16
      %v1531 = vrot.slane %v1529, 4
      %v1532 = vshll.u32 %v1396, 16
      %v1534 = vrot.slane %v1532, 5
      %v1535 = vor.u32 %v1531, %v1534
      %v1536 = vrot.slane %v1535, 4
      %v1538 = vshll.u32 %v1397, 16
      %v1540 = vrot.slane %v1538, 5
      %v1541 = vsel %vm384, %v1536, %v1540
      %v1542 = vshrl.u32 %v1397, 16
      %v1544 = vrot.slane %v1542, 4
      %v1545 = vor.u32 %v1544, %v1540
      %v1546 = vrot.slane %v1545, 4
      %v1548 = vshll.u32 %v1398, 16
      %v1550 = vrot.slane %v1548, 5
      %v1551 = vsel %vm384, %v1546, %v1550
      %v1553 = vshrl.u32 %v1399, 16
      %v1555 = vrot.slane %v1553, 4
      %v1556 = vshll.u32 %v1399, 16
      %v1558 = vrot.slane %v1556, 5
      %v1559 = vor.u32 %v1555, %v1558
      %v1560 = vrot.slane %v1559, 4
      %v1562 = vshll.u32 %v1400, 16
      %v1564 = vrot.slane %v1562, 5
      %v1565 = vsel %vm384, %v1560, %v1564
      %v1566 = vshrl.u32 %v1400, 16
      %v1568 = vrot.slane %v1566, 4
      %v1569 = vor.u32 %v1568, %v1564
      %v1570 = vrot.slane %v1569, 4
      %v1572 = vshll.u32 %v1401, 16
      %v1574 = vrot.slane %v1572, 5
      %v1575 = vsel %vm384, %v1570, %v1574
      %v1577 = vshrl.u32 %v1402, 16
      %v1579 = vrot.slane %v1577, 4
      %v1580 = vshll.u32 %v1402, 16
      %v1582 = vrot.slane %v1580, 5
      %v1583 = vor.u32 %v1579, %v1582
      %v1584 = vrot.slane %v1583, 4
      %v1586 = vshll.u32 %v1403, 16
      %v1588 = vrot.slane %v1586, 5
      %v1589 = vsel %vm384, %v1584, %v1588
      %v1590 = vshrl.u32 %v1403, 16
      %v1592 = vrot.slane %v1590, 4
      %v1593 = vor.u32 %v1592, %v1588
      %v1594 = vrot.slane %v1593, 4
      %v1596 = vshll.u32 %v1404, 16
      %v1598 = vrot.slane %v1596, 5
      %v1599 = vsel %vm384, %v1594, %v1598
      %v1601 = vshrl.u32 %v1405, 16
      %v1603 = vrot.slane %v1601, 4
      %v1604 = vshll.u32 %v1405, 16
      %v1606 = vrot.slane %v1604, 5
      %v1607 = vor.u32 %v1603, %v1606
      %v1608 = vrot.slane %v1607, 4
      %v1610 = vshll.u32 %v1406, 16
      %v1612 = vrot.slane %v1610, 5
      %v1613 = vsel %vm384, %v1608, %v1612
      %v1614 = vshrl.u32 %v1406, 16
      %v1616 = vrot.slane %v1614, 4
      %v1617 = vor.u32 %v1616, %v1612
      %v1618 = vrot.slane %v1617, 4
      %v1620 = vshll.u32 %v1407, 16
      %v1622 = vrot.slane %v1620, 5
      %v1623 = vsel %vm384, %v1618, %v1622
      %v1625 = vshrl.u32 %v1408, 16
      %v1627 = vrot.slane %v1625, 4
      %v1628 = vshll.u32 %v1408, 16
      %v1630 = vrot.slane %v1628, 5
      %v1631 = vor.u32 %v1627, %v1630
      %v1632 = vrot.slane %v1631, 4
      %v1634 = vshll.u32 %v1409, 16
      %v1636 = vrot.slane %v1634, 5
      %v1637 = vsel %vm384, %v1632, %v1636
      %v1638 = vshrl.u32 %v1409, 16
      %v1640 = vrot.slane %v1638, 4
      %v1641 = vor.u32 %v1640, %v1636
      %v1642 = vrot.slane %v1641, 4
      %v1644 = vshll.u32 %v1410, 16
      %v1646 = vrot.slane %v1644, 5
      %v1647 = vsel %vm384, %v1642, %v1646
      %v1649 = vshrl.u32 %v1411, 16
      %v1651 = vrot.slane %v1649, 4
      %v1652 = vshll.u32 %v1411, 16
      %v1654 = vrot.slane %v1652, 5
      %v1655 = vor.u32 %v1651, %v1654
      %v1656 = vrot.slane %v1655, 4
      %v1658 = vshll.u32 %v1412, 16
      %v1660 = vrot.slane %v1658, 5
      %v1661 = vsel %vm384, %v1656, %v1660
      %v1662 = vshrl.u32 %v1412, 16
      %v1664 = vrot.slane %v1662, 4
      %v1665 = vor.u32 %v1664, %v1660
      %v1666 = vrot.slane %v1665, 4
      %v1668 = vshll.u32 %v1413, 16
      %v1670 = vrot.slane %v1668, 5
      %v1671 = vsel %vm384, %v1666, %v1670
      %v1673 = vshrl.u32 %v1414, 16
      %v1675 = vrot.slane %v1673, 4
      %v1676 = vshll.u32 %v1414, 16
      %v1678 = vrot.slane %v1676, 5
      %v1679 = vor.u32 %v1675, %v1678
      %v1680 = vrot.slane %v1679, 4
      %v1682 = vshll.u32 %v1415, 16
      %v1684 = vrot.slane %v1682, 5
      %v1685 = vsel %vm384, %v1680, %v1684
      %v1686 = vshrl.u32 %v1415, 16
      %v1688 = vrot.slane %v1686, 4
      %v1689 = vor.u32 %v1688, %v1684
      %v1690 = vrot.slane %v1689, 4
      %v1692 = vshll.u32 %v1416, 16
      %v1694 = vrot.slane %v1692, 5
      %v1695 = vsel %vm384, %v1690, %v1694
      %v1697 = vshrl.u32 %v1417, 16
      %v1699 = vrot.slane %v1697, 4
      %v1700 = vshll.u32 %v1417, 16
      %v1702 = vrot.slane %v1700, 5
      %v1703 = vor.u32 %v1699, %v1702
      %v1704 = vrot.slane %v1703, 4
      %v1706 = vshll.u32 %v1418, 16
      %v1708 = vrot.slane %v1706, 5
      %v1709 = vsel %vm384, %v1704, %v1708
      %v1710 = vshrl.u32 %v1418, 16
      %v1712 = vrot.slane %v1710, 4
      %v1713 = vor.u32 %v1712, %v1708
      %v1714 = vrot.slane %v1713, 4
      %v1716 = vshll.u32 %v1419, 16
      %v1718 = vrot.slane %v1716, 5
      %v1719 = vsel %vm384, %v1714, %v1718
      %v1721 = vshrl.u32 %v1420, 16
      %v1723 = vrot.slane %v1721, 4
      %v1724 = vshll.u32 %v1420, 16
      %v1726 = vrot.slane %v1724, 5
      %v1727 = vor.u32 %v1723, %v1726
      %v1728 = vrot.slane %v1727, 4
      %v1730 = vshll.u32 %v1421, 16
      %v1732 = vrot.slane %v1730, 5
      %v1733 = vsel %vm384, %v1728, %v1732
      %v1734 = vshrl.u32 %v1421, 16
      %v1736 = vrot.slane %v1734, 4
      %v1737 = vor.u32 %v1736, %v1732
      %v1738 = vrot.slane %v1737, 4
      %v1740 = vshll.u32 %v1422, 16
      %v1742 = vrot.slane %v1740, 5
      %v1743 = vsel %vm384, %v1738, %v1742
      %v1745 = vshrl.u32 %v1423, 16
      %v1747 = vrot.slane %v1745, 4
      %v1748 = vshll.u32 %v1423, 16
      %v1750 = vrot.slane %v1748, 5
      %v1751 = vor.u32 %v1747, %v1750
      %v1752 = vrot.slane %v1751, 4
      %v1754 = vshll.u32 %v1424, 16
      %v1756 = vrot.slane %v1754, 5
      %v1757 = vsel %vm384, %v1752, %v1756
      %v1758 = vshrl.u32 %v1424, 16
      %v1760 = vrot.slane %v1758, 4
      %v1761 = vor.u32 %v1760, %v1756
      %v1762 = vrot.slane %v1761, 4
      %v1764 = vshll.u32 %v1425, 16
      %v1766 = vrot.slane %v1764, 5
      %v1767 = vsel %vm384, %v1762, %v1766
      %v1769 = vshrl.u32 %v1426, 16
      %v1771 = vrot.slane %v1769, 4
      %v1772 = vshll.u32 %v1426, 16
      %v1774 = vrot.slane %v1772, 5
      %v1775 = vor.u32 %v1771, %v1774
      %v1776 = vrot.slane %v1775, 4
      %v1778 = vshll.u32 %v1427, 16
      %v1780 = vrot.slane %v1778, 5
      %v1781 = vsel %vm384, %v1776, %v1780
      %v1782 = vshrl.u32 %v1427, 16
      %v1784 = vrot.slane %v1782, 4
      %v1785 = vor.u32 %v1784, %v1780
      %v1786 = vrot.slane %v1785, 4
      %v1788 = vshll.u32 %v1428, 16
      %v1790 = vrot.slane %v1788, 5
      %v1791 = vsel %vm384, %v1786, %v1790
      %v1793 = vshrl.u32 %v1429, 16
      %v1795 = vrot.slane %v1793, 4
      %v1796 = vshll.u32 %v1429, 16
      %v1798 = vrot.slane %v1796, 5
      %v1799 = vor.u32 %v1795, %v1798
      %v1800 = vrot.slane %v1799, 4
      %v1802 = vshll.u32 %v1430, 16
      %v1804 = vrot.slane %v1802, 5
      %v1805 = vsel %vm384, %v1800, %v1804
      %v1806 = vshrl.u32 %v1430, 16
      %v1808 = vrot.slane %v1806, 4
      %v1809 = vor.u32 %v1808, %v1804
      %v1810 = vrot.slane %v1809, 4
      %v1812 = vshll.u32 %v1431, 16
      %v1814 = vrot.slane %v1812, 5
      %v1815 = vsel %vm384, %v1810, %v1814
      %v1816 = vunpack.c.l.b16 %v1445
      %v1817 = vunpack.c.l.b16 %v1455
      %v1818 = vunpack.c.l.b16 %v1469
      %v1819 = vunpack.c.l.b16 %v1479
      %v1820 = vunpack.c.l.b16 %v1493
      %v1821 = vunpack.c.l.b16 %v1503
      %v1822 = vunpack.c.l.b16 %v1517
      %v1823 = vunpack.c.l.b16 %v1527
      %v1824 = vunpack.c.l.b16 %v1541
      %v1825 = vunpack.c.l.b16 %v1551
      %v1826 = vunpack.c.l.b16 %v1565
      %v1827 = vunpack.c.l.b16 %v1575
      %v1828 = vunpack.c.l.b16 %v1589
      %v1829 = vunpack.c.l.b16 %v1599
      %v1830 = vunpack.c.l.b16 %v1613
      %v1831 = vunpack.c.l.b16 %v1623
      %v1832 = vunpack.c.l.b16 %v1637
      %v1833 = vunpack.c.l.b16 %v1647
      %v1834 = vunpack.c.l.b16 %v1661
      %v1835 = vunpack.c.l.b16 %v1671
      %v1836 = vunpack.c.l.b16 %v1685
      %v1837 = vunpack.c.l.b16 %v1695
      %v1838 = vunpack.c.l.b16 %v1709
      %v1839 = vunpack.c.l.b16 %v1719
      %v1840 = vunpack.c.l.b16 %v1733
      %v1841 = vunpack.c.l.b16 %v1743
      %v1842 = vunpack.c.l.b16 %v1757
      %v1843 = vunpack.c.l.b16 %v1767
      %v1844 = vunpack.c.l.b16 %v1781
      %v1845 = vunpack.c.l.b16 %v1791
      %v1846 = vunpack.c.l.b16 %v1805
      %v1847 = vunpack.c.l.b16 %v1815
      %v1848 = vpack.c.b16 %v1817, %v1816
      %v1849 = vpack.c.b16 %v1819, %v1818
      %v1850 = vpack.c.b16 %v1821, %v1820
      %v1851 = vpack.c.b16 %v1823, %v1822
      %v1852 = vpack.c.b16 %v1825, %v1824
      %v1853 = vpack.c.b16 %v1827, %v1826
      %v1854 = vpack.c.b16 %v1829, %v1828
      %v1855 = vpack.c.b16 %v1831, %v1830
      %v1856 = vpack.c.b16 %v1833, %v1832
      %v1857 = vpack.c.b16 %v1835, %v1834
      %v1858 = vpack.c.b16 %v1837, %v1836
      %v1859 = vpack.c.b16 %v1839, %v1838
      %v1860 = vpack.c.b16 %v1841, %v1840
      %v1861 = vpack.c.b16 %v1843, %v1842
      %v1862 = vpack.c.b16 %v1845, %v1844
      %v1863 = vpack.c.b16 %v1847, %v1846
      %1864 = vrot.lane.b32.xlu0 %v1848, 32
      %v1865 = vpop.permute.xlu0 %1864
      %1866 = vrot.lane.b32.xlu0 %v1849, 32
      %v1867 = vpop.permute.xlu0 %1866
      %1868 = vrot.lane.b32.xlu0 %v1850, 32
      %v1869 = vpop.permute.xlu0 %1868
      %1870 = vrot.lane.b32.xlu0 %v1851, 32
      %v1871 = vpop.permute.xlu0 %1870
      %1872 = vrot.lane.b32.xlu0 %v1852, 32
      %v1873 = vpop.permute.xlu0 %1872
      %1874 = vrot.lane.b32.xlu0 %v1853, 32
      %v1875 = vpop.permute.xlu0 %1874
      %1876 = vrot.lane.b32.xlu0 %v1854, 32
      %v1877 = vpop.permute.xlu0 %1876
      %1878 = vrot.lane.b32.xlu0 %v1855, 32
      %v1879 = vpop.permute.xlu0 %1878
      %1880 = vrot.lane.b32.xlu0 %v1856, 32
      %v1881 = vpop.permute.xlu0 %1880
      %1882 = vrot.lane.b32.xlu0 %v1857, 32
      %v1883 = vpop.permute.xlu0 %1882
      %1884 = vrot.lane.b32.xlu0 %v1858, 32
      %v1885 = vpop.permute.xlu0 %1884
      %1886 = vrot.lane.b32.xlu0 %v1859, 32
      %v1887 = vpop.permute.xlu0 %1886
      %1888 = vrot.lane.b32.xlu0 %v1860, 32
      %v1889 = vpop.permute.xlu0 %1888
      %1890 = vrot.lane.b32.xlu0 %v1861, 32
      %v1891 = vpop.permute.xlu0 %1890
      %1892 = vrot.lane.b32.xlu0 %v1862, 32
      %v1893 = vpop.permute.xlu0 %1892
      %1894 = vrot.lane.b32.xlu0 %v1863, 32
      %v1895 = vpop.permute.xlu0 %1894
      %vm1912 = vcmask 326912
      %1913 = vst.msk [vmem:[#allocation2] sm:$0xff] %vm1912, %v1865
      %1914 = vst.msk [vmem:[#allocation2 + $0x8] sm:$0xff] %vm1912, %v1867
      %1915 = vst.msk [vmem:[#allocation2 + $0x10] sm:$0xff] %vm1912, %v1869
      %1916 = vst.msk [vmem:[#allocation2 + $0x18] sm:$0xff] %vm1912, %v1871
      %1917 = vst.msk [vmem:[#allocation2 + $0x20] sm:$0xff] %vm1912, %v1873
      %1918 = vst.msk [vmem:[#allocation2 + $0x28] sm:$0xff] %vm1912, %v1875
      %1919 = vst.msk [vmem:[#allocation2 + $0x30] sm:$0xff] %vm1912, %v1877
      %1920 = vst.msk [vmem:[#allocation2 + $0x38] sm:$0xff] %vm1912, %v1879
      %1921 = vst.msk [vmem:[#allocation2 + $0x40] sm:$0xff] %vm1912, %v1881
      %1922 = vst.msk [vmem:[#allocation2 + $0x48] sm:$0xff] %vm1912, %v1883
      %1923 = vst.msk [vmem:[#allocation2 + $0x50] sm:$0xff] %vm1912, %v1885
      %1924 = vst.msk [vmem:[#allocation2 + $0x58] sm:$0xff] %vm1912, %v1887
      %1925 = vst.msk [vmem:[#allocation2 + $0x60] sm:$0xff] %vm1912, %v1889
      %1926 = vst.msk [vmem:[#allocation2 + $0x68] sm:$0xff] %vm1912, %v1891
      %1927 = vst.msk [vmem:[#allocation2 + $0x70] sm:$0xff] %vm1912, %v1893
      %1928 = vst.msk [vmem:[#allocation2 + $0x78] sm:$0xff] %vm1912, %v1895
      %v1929 = vld [vmem:[%s1206] sm:$0xe]
      %v1930 = vld [vmem:[%s1206 + $0x4] sm:$0xf]
      %v1931 = vld [vmem:[%s1206 + $0x8] sm:$0x1]
      %v1932 = vld [vmem:[%s1206 + $0xc] sm:$0xe]
      %v1933 = vld [vmem:[%s1206 + $0x10] sm:$0xf]
      %v1934 = vld [vmem:[%s1206 + $0x14] sm:$0x1]
      %v1935 = vld [vmem:[%s1206 + $0x18] sm:$0xe]
      %v1936 = vld [vmem:[%s1206 + $0x1c] sm:$0xf]
      %v1937 = vld [vmem:[%s1206 + $0x20] sm:$0x1]
      %v1938 = vld [vmem:[%s1206 + $0x24] sm:$0xe]
      %v1939 = vld [vmem:[%s1206 + $0x28] sm:$0xf]
      %v1940 = vld [vmem:[%s1206 + $0x2c] sm:$0x1]
      %v1941 = vld [vmem:[%s1206 + $0x30] sm:$0xe]
      %v1942 = vld [vmem:[%s1206 + $0x34] sm:$0xf]
      %v1943 = vld [vmem:[%s1206 + $0x38] sm:$0x1]
      %v1944 = vld [vmem:[%s1206 + $0x3c] sm:$0xe]
      %v1945 = vld [vmem:[%s1206 + $0x40] sm:$0xf]
      %v1946 = vld [vmem:[%s1206 + $0x44] sm:$0x1]
      %v1947 = vld [vmem:[%s1206 + $0x48] sm:$0xe]
      %v1948 = vld [vmem:[%s1206 + $0x4c] sm:$0xf]
      %v1949 = vld [vmem:[%s1206 + $0x50] sm:$0x1]
      %v1950 = vld [vmem:[%s1206 + $0x54] sm:$0xe]
      %v1951 = vld [vmem:[%s1206 + $0x58] sm:$0xf]
      %v1952 = vld [vmem:[%s1206 + $0x5c] sm:$0x1]
      %v1953 = vld [vmem:[%s1206 + $0x60] sm:$0xe]
      %v1954 = vld [vmem:[%s1206 + $0x64] sm:$0xf]
      %v1955 = vld [vmem:[%s1206 + $0x68] sm:$0x1]
      %v1956 = vld [vmem:[%s1206 + $0x6c] sm:$0xe]
      %v1957 = vld [vmem:[%s1206 + $0x70] sm:$0xf]
      %v1958 = vld [vmem:[%s1206 + $0x74] sm:$0x1]
      %v1959 = vld [vmem:[%s1206 + $0x78] sm:$0xe]
      %v1960 = vld [vmem:[%s1206 + $0x7c] sm:$0xf]
      %v1961 = vld [vmem:[%s1206 + $0x80] sm:$0x1]
      %v1962 = vld [vmem:[%s1206 + $0x84] sm:$0xe]
      %v1963 = vld [vmem:[%s1206 + $0x88] sm:$0xf]
      %v1964 = vld [vmem:[%s1206 + $0x8c] sm:$0x1]
      %v1965 = vld [vmem:[%s1206 + $0x90] sm:$0xe]
      %v1966 = vld [vmem:[%s1206 + $0x94] sm:$0xf]
      %v1967 = vld [vmem:[%s1206 + $0x98] sm:$0x1]
      %v1968 = vld [vmem:[%s1206 + $0x9c] sm:$0xe]
      %v1969 = vld [vmem:[%s1206 + $0xa0] sm:$0xf]
      %v1970 = vld [vmem:[%s1206 + $0xa4] sm:$0x1]
      %v1971 = vld [vmem:[%s1206 + $0xa8] sm:$0xe]
      %v1972 = vld [vmem:[%s1206 + $0xac] sm:$0xf]
      %v1973 = vld [vmem:[%s1206 + $0xb0] sm:$0x1]
      %v1974 = vld [vmem:[%s1206 + $0xb4] sm:$0xe]
      %v1975 = vld [vmem:[%s1206 + $0xb8] sm:$0xf]
      %v1976 = vld [vmem:[%s1206 + $0xbc] sm:$0x1]
      %v2025 = vrot.slane %v1929, 5
      %v2026 = vrot.slane %v2025, 4
      %v2027 = vrot.slane %v1930, 5
      %v2028 = vsel %vm980, %v2026, %v2027
      %v2029 = vrot.slane %v2027, 4
      %v2030 = vrot.slane %v1931, 5
      %v2031 = vsel %vm980, %v2029, %v2030
      %v2032 = vrot.slane %v1932, 5
      %v2033 = vrot.slane %v2032, 4
      %v2034 = vrot.slane %v1933, 5
      %v2035 = vsel %vm980, %v2033, %v2034
      %v2036 = vrot.slane %v2034, 4
      %v2037 = vrot.slane %v1934, 5
      %v2038 = vsel %vm980, %v2036, %v2037
      %v2039 = vrot.slane %v1935, 5
      %v2040 = vrot.slane %v2039, 4
      %v2041 = vrot.slane %v1936, 5
      %v2042 = vsel %vm980, %v2040, %v2041
      %v2043 = vrot.slane %v2041, 4
      %v2044 = vrot.slane %v1937, 5
      %v2045 = vsel %vm980, %v2043, %v2044
      %v2046 = vrot.slane %v1938, 5
      %v2047 = vrot.slane %v2046, 4
      %v2048 = vrot.slane %v1939, 5
      %v2049 = vsel %vm980, %v2047, %v2048
      %v2050 = vrot.slane %v2048, 4
      %v2051 = vrot.slane %v1940, 5
      %v2052 = vsel %vm980, %v2050, %v2051
      %v2053 = vrot.slane %v1941, 5
      %v2054 = vrot.slane %v2053, 4
      %v2055 = vrot.slane %v1942, 5
      %v2056 = vsel %vm980, %v2054, %v2055
      %v2057 = vrot.slane %v2055, 4
      %v2058 = vrot.slane %v1943, 5
      %v2059 = vsel %vm980, %v2057, %v2058
      %v2060 = vrot.slane %v1944, 5
      %v2061 = vrot.slane %v2060, 4
      %v2062 = vrot.slane %v1945, 5
      %v2063 = vsel %vm980, %v2061, %v2062
      %v2064 = vrot.slane %v2062, 4
      %v2065 = vrot.slane %v1946, 5
      %v2066 = vsel %vm980, %v2064, %v2065
      %v2067 = vrot.slane %v1947, 5
      %v2068 = vrot.slane %v2067, 4
      %v2069 = vrot.slane %v1948, 5
      %v2070 = vsel %vm980, %v2068, %v2069
      %v2071 = vrot.slane %v2069, 4
      %v2072 = vrot.slane %v1949, 5
      %v2073 = vsel %vm980, %v2071, %v2072
      %v2074 = vrot.slane %v1950, 5
      %v2075 = vrot.slane %v2074, 4
      %v2076 = vrot.slane %v1951, 5
      %v2077 = vsel %vm980, %v2075, %v2076
      %v2078 = vrot.slane %v2076, 4
      %v2079 = vrot.slane %v1952, 5
      %v2080 = vsel %vm980, %v2078, %v2079
      %v2081 = vrot.slane %v1953, 5
      %v2082 = vrot.slane %v2081, 4
      %v2083 = vrot.slane %v1954, 5
      %v2084 = vsel %vm980, %v2082, %v2083
      %v2085 = vrot.slane %v2083, 4
      %v2086 = vrot.slane %v1955, 5
      %v2087 = vsel %vm980, %v2085, %v2086
      %v2088 = vrot.slane %v1956, 5
      %v2089 = vrot.slane %v2088, 4
      %v2090 = vrot.slane %v1957, 5
      %v2091 = vsel %vm980, %v2089, %v2090
      %v2092 = vrot.slane %v2090, 4
      %v2093 = vrot.slane %v1958, 5
      %v2094 = vsel %vm980, %v2092, %v2093
      %v2095 = vrot.slane %v1959, 5
      %v2096 = vrot.slane %v2095, 4
      %v2097 = vrot.slane %v1960, 5
      %v2098 = vsel %vm980, %v2096, %v2097
      %v2099 = vrot.slane %v2097, 4
      %v2100 = vrot.slane %v1961, 5
      %v2101 = vsel %vm980, %v2099, %v2100
      %v2102 = vrot.slane %v1962, 5
      %v2103 = vrot.slane %v2102, 4
      %v2104 = vrot.slane %v1963, 5
      %v2105 = vsel %vm980, %v2103, %v2104
      %v2106 = vrot.slane %v2104, 4
      %v2107 = vrot.slane %v1964, 5
      %v2108 = vsel %vm980, %v2106, %v2107
      %v2109 = vrot.slane %v1965, 5
      %v2110 = vrot.slane %v2109, 4
      %v2111 = vrot.slane %v1966, 5
      %v2112 = vsel %vm980, %v2110, %v2111
      %v2113 = vrot.slane %v2111, 4
      %v2114 = vrot.slane %v1967, 5
      %v2115 = vsel %vm980, %v2113, %v2114
      %v2116 = vrot.slane %v1968, 5
      %v2117 = vrot.slane %v2116, 4
      %v2118 = vrot.slane %v1969, 5
      %v2119 = vsel %vm980, %v2117, %v2118
      %v2120 = vrot.slane %v2118, 4
      %v2121 = vrot.slane %v1970, 5
      %v2122 = vsel %vm980, %v2120, %v2121
      %v2123 = vrot.slane %v1971, 5
      %v2124 = vrot.slane %v2123, 4
      %v2125 = vrot.slane %v1972, 5
      %v2126 = vsel %vm980, %v2124, %v2125
      %v2127 = vrot.slane %v2125, 4
      %v2128 = vrot.slane %v1973, 5
      %v2129 = vsel %vm980, %v2127, %v2128
      %v2130 = vrot.slane %v1974, 5
      %v2131 = vrot.slane %v2130, 4
      %v2132 = vrot.slane %v1975, 5
      %v2133 = vsel %vm980, %v2131, %v2132
      %v2134 = vrot.slane %v2132, 4
      %v2135 = vrot.slane %v1976, 5
      %v2136 = vsel %vm980, %v2134, %v2135
      %v2137 = vunpack.c.l.b16 %v2028
      %v2138 = vunpack.c.l.b16 %v2031
      %v2139 = vunpack.c.l.b16 %v2035
      %v2140 = vunpack.c.l.b16 %v2038
      %v2141 = vunpack.c.l.b16 %v2042
      %v2142 = vunpack.c.l.b16 %v2045
      %v2143 = vunpack.c.l.b16 %v2049
      %v2144 = vunpack.c.l.b16 %v2052
      %v2145 = vunpack.c.l.b16 %v2056
      %v2146 = vunpack.c.l.b16 %v2059
      %v2147 = vunpack.c.l.b16 %v2063
      %v2148 = vunpack.c.l.b16 %v2066
      %v2149 = vunpack.c.l.b16 %v2070
      %v2150 = vunpack.c.l.b16 %v2073
      %v2151 = vunpack.c.l.b16 %v2077
      %v2152 = vunpack.c.l.b16 %v2080
      %v2153 = vunpack.c.l.b16 %v2084
      %v2154 = vunpack.c.l.b16 %v2087
      %v2155 = vunpack.c.l.b16 %v2091
      %v2156 = vunpack.c.l.b16 %v2094
      %v2157 = vunpack.c.l.b16 %v2098
      %v2158 = vunpack.c.l.b16 %v2101
      %v2159 = vunpack.c.l.b16 %v2105
      %v2160 = vunpack.c.l.b16 %v2108
      %v2161 = vunpack.c.l.b16 %v2112
      %v2162 = vunpack.c.l.b16 %v2115
      %v2163 = vunpack.c.l.b16 %v2119
      %v2164 = vunpack.c.l.b16 %v2122
      %v2165 = vunpack.c.l.b16 %v2126
      %v2166 = vunpack.c.l.b16 %v2129
      %v2167 = vunpack.c.l.b16 %v2133
      %v2168 = vunpack.c.l.b16 %v2136
      %v2169 = vpack.c.b16 %v2138, %v2137
      %v2170 = vpack.c.b16 %v2140, %v2139
      %v2171 = vpack.c.b16 %v2142, %v2141
      %v2172 = vpack.c.b16 %v2144, %v2143
      %v2173 = vpack.c.b16 %v2146, %v2145
      %v2174 = vpack.c.b16 %v2148, %v2147
      %v2175 = vpack.c.b16 %v2150, %v2149
      %v2176 = vpack.c.b16 %v2152, %v2151
      %v2177 = vpack.c.b16 %v2154, %v2153
      %v2178 = vpack.c.b16 %v2156, %v2155
      %v2179 = vpack.c.b16 %v2158, %v2157
      %v2180 = vpack.c.b16 %v2160, %v2159
      %v2181 = vpack.c.b16 %v2162, %v2161
      %v2182 = vpack.c.b16 %v2164, %v2163
      %v2183 = vpack.c.b16 %v2166, %v2165
      %v2184 = vpack.c.b16 %v2168, %v2167
      %2185 = vrot.lane.b32.xlu0 %v2169, 40
      %v2186 = vpop.permute.xlu0 %2185
      %2187 = vrot.lane.b32.xlu0 %v2170, 40
      %v2188 = vpop.permute.xlu0 %2187
      %2189 = vrot.lane.b32.xlu0 %v2171, 40
      %v2190 = vpop.permute.xlu0 %2189
      %2191 = vrot.lane.b32.xlu0 %v2172, 40
      %v2192 = vpop.permute.xlu0 %2191
      %2193 = vrot.lane.b32.xlu0 %v2173, 40
      %v2194 = vpop.permute.xlu0 %2193
      %2195 = vrot.lane.b32.xlu0 %v2174, 40
      %v2196 = vpop.permute.xlu0 %2195
      %2197 = vrot.lane.b32.xlu0 %v2175, 40
      %v2198 = vpop.permute.xlu0 %2197
      %2199 = vrot.lane.b32.xlu0 %v2176, 40
      %v2200 = vpop.permute.xlu0 %2199
      %2201 = vrot.lane.b32.xlu0 %v2177, 40
      %v2202 = vpop.permute.xlu0 %2201
      %2203 = vrot.lane.b32.xlu0 %v2178, 40
      %v2204 = vpop.permute.xlu0 %2203
      %2205 = vrot.lane.b32.xlu0 %v2179, 40
      %v2206 = vpop.permute.xlu0 %2205
      %2207 = vrot.lane.b32.xlu0 %v2180, 40
      %v2208 = vpop.permute.xlu0 %2207
      %2209 = vrot.lane.b32.xlu0 %v2181, 40
      %v2210 = vpop.permute.xlu0 %2209
      %2211 = vrot.lane.b32.xlu0 %v2182, 40
      %v2212 = vpop.permute.xlu0 %2211
      %2213 = vrot.lane.b32.xlu0 %v2183, 40
      %v2214 = vpop.permute.xlu0 %2213
      %2215 = vrot.lane.b32.xlu0 %v2184, 40
      %v2216 = vpop.permute.xlu0 %2215
      %vm2233 = vcmask 392512
      %2234 = vst.msk [vmem:[#allocation2] sm:$0xff] %vm2233, %v2186
      %2235 = vst.msk [vmem:[#allocation2 + $0x8] sm:$0xff] %vm2233, %v2188
      %2236 = vst.msk [vmem:[#allocation2 + $0x10] sm:$0xff] %vm2233, %v2190
      %2237 = vst.msk [vmem:[#allocation2 + $0x18] sm:$0xff] %vm2233, %v2192
      %2238 = vst.msk [vmem:[#allocation2 + $0x20] sm:$0xff] %vm2233, %v2194
      %2239 = vst.msk [vmem:[#allocation2 + $0x28] sm:$0xff] %vm2233, %v2196
      %2240 = vst.msk [vmem:[#allocation2 + $0x30] sm:$0xff] %vm2233, %v2198
      %2241 = vst.msk [vmem:[#allocation2 + $0x38] sm:$0xff] %vm2233, %v2200
      %2242 = vst.msk [vmem:[#allocation2 + $0x40] sm:$0xff] %vm2233, %v2202
      %2243 = vst.msk [vmem:[#allocation2 + $0x48] sm:$0xff] %vm2233, %v2204
      %2244 = vst.msk [vmem:[#allocation2 + $0x50] sm:$0xff] %vm2233, %v2206
      %2245 = vst.msk [vmem:[#allocation2 + $0x58] sm:$0xff] %vm2233, %v2208
      %2246 = vst.msk [vmem:[#allocation2 + $0x60] sm:$0xff] %vm2233, %v2210
      %2247 = vst.msk [vmem:[#allocation2 + $0x68] sm:$0xff] %vm2233, %v2212
      %2248 = vst.msk [vmem:[#allocation2 + $0x70] sm:$0xff] %vm2233, %v2214
      %2249 = vst.msk [vmem:[#allocation2 + $0x78] sm:$0xff] %vm2233, %v2216
      %s2250 = scalar_lea.vmem %s165, 24
      %v2251 = vld [vmem:[%s2250] sm:$0xf]
      %v2252 = vld [vmem:[%s2250 + $0x4] sm:$0xf]
      %v2253 = vld [vmem:[%s2250 + $0xc] sm:$0xf]
      %v2254 = vld [vmem:[%s2250 + $0x10] sm:$0xf]
      %v2255 = vld [vmem:[%s2250 + $0x18] sm:$0xf]
      %v2256 = vld [vmem:[%s2250 + $0x1c] sm:$0xf]
      %v2257 = vld [vmem:[%s2250 + $0x24] sm:$0xf]
      %v2258 = vld [vmem:[%s2250 + $0x28] sm:$0xf]
      %v2259 = vld [vmem:[%s2250 + $0x30] sm:$0xf]
      %v2260 = vld [vmem:[%s2250 + $0x34] sm:$0xf]
      %v2261 = vld [vmem:[%s2250 + $0x3c] sm:$0xf]
      %v2262 = vld [vmem:[%s2250 + $0x40] sm:$0xf]
      %v2263 = vld [vmem:[%s2250 + $0x48] sm:$0xf]
      %v2264 = vld [vmem:[%s2250 + $0x4c] sm:$0xf]
      %v2265 = vld [vmem:[%s2250 + $0x54] sm:$0xf]
      %v2266 = vld [vmem:[%s2250 + $0x58] sm:$0xf]
      %v2267 = vld [vmem:[%s2250 + $0x60] sm:$0xf]
      %v2268 = vld [vmem:[%s2250 + $0x64] sm:$0xf]
      %v2269 = vld [vmem:[%s2250 + $0x6c] sm:$0xf]
      %v2270 = vld [vmem:[%s2250 + $0x70] sm:$0xf]
      %v2271 = vld [vmem:[%s2250 + $0x78] sm:$0xf]
      %v2272 = vld [vmem:[%s2250 + $0x7c] sm:$0xf]
      %v2273 = vld [vmem:[%s2250 + $0x84] sm:$0xf]
      %v2274 = vld [vmem:[%s2250 + $0x88] sm:$0xf]
      %v2275 = vld [vmem:[%s2250 + $0x90] sm:$0xf]
      %v2276 = vld [vmem:[%s2250 + $0x94] sm:$0xf]
      %v2277 = vld [vmem:[%s2250 + $0x9c] sm:$0xf]
      %v2278 = vld [vmem:[%s2250 + $0xa0] sm:$0xf]
      %v2279 = vld [vmem:[%s2250 + $0xa8] sm:$0xf]
      %v2280 = vld [vmem:[%s2250 + $0xac] sm:$0xf]
      %v2281 = vld [vmem:[%s2250 + $0xb4] sm:$0xf]
      %v2282 = vld [vmem:[%s2250 + $0xb8] sm:$0xf]
      %v2315 = vunpack.c.l.b16 %v2251
      %v2316 = vunpack.c.l.b16 %v2252
      %v2317 = vunpack.c.l.b16 %v2253
      %v2318 = vunpack.c.l.b16 %v2254
      %v2319 = vunpack.c.l.b16 %v2255
      %v2320 = vunpack.c.l.b16 %v2256
      %v2321 = vunpack.c.l.b16 %v2257
      %v2322 = vunpack.c.l.b16 %v2258
      %v2323 = vunpack.c.l.b16 %v2259
      %v2324 = vunpack.c.l.b16 %v2260
      %v2325 = vunpack.c.l.b16 %v2261
      %v2326 = vunpack.c.l.b16 %v2262
      %v2327 = vunpack.c.l.b16 %v2263
      %v2328 = vunpack.c.l.b16 %v2264
      %v2329 = vunpack.c.l.b16 %v2265
      %v2330 = vunpack.c.l.b16 %v2266
      %v2331 = vunpack.c.l.b16 %v2267
      %v2332 = vunpack.c.l.b16 %v2268
      %v2333 = vunpack.c.l.b16 %v2269
      %v2334 = vunpack.c.l.b16 %v2270
      %v2335 = vunpack.c.l.b16 %v2271
      %v2336 = vunpack.c.l.b16 %v2272
      %v2337 = vunpack.c.l.b16 %v2273
      %v2338 = vunpack.c.l.b16 %v2274
      %v2339 = vunpack.c.l.b16 %v2275
      %v2340 = vunpack.c.l.b16 %v2276
      %v2341 = vunpack.c.l.b16 %v2277
      %v2342 = vunpack.c.l.b16 %v2278
      %v2343 = vunpack.c.l.b16 %v2279
      %v2344 = vunpack.c.l.b16 %v2280
      %v2345 = vunpack.c.l.b16 %v2281
      %v2346 = vunpack.c.l.b16 %v2282
      %v2347 = vpack.c.b16 %v2316, %v2315
      %v2348 = vpack.c.b16 %v2318, %v2317
      %v2349 = vpack.c.b16 %v2320, %v2319
      %v2350 = vpack.c.b16 %v2322, %v2321
      %v2351 = vpack.c.b16 %v2324, %v2323
      %v2352 = vpack.c.b16 %v2326, %v2325
      %v2353 = vpack.c.b16 %v2328, %v2327
      %v2354 = vpack.c.b16 %v2330, %v2329
      %v2355 = vpack.c.b16 %v2332, %v2331
      %v2356 = vpack.c.b16 %v2334, %v2333
      %v2357 = vpack.c.b16 %v2336, %v2335
      %v2358 = vpack.c.b16 %v2338, %v2337
      %v2359 = vpack.c.b16 %v2340, %v2339
      %v2360 = vpack.c.b16 %v2342, %v2341
      %v2361 = vpack.c.b16 %v2344, %v2343
      %v2362 = vpack.c.b16 %v2346, %v2345
      %2363 = vrot.lane.b32.xlu0 %v2347, 48
      %v2364 = vpop.permute.xlu0 %2363
      %2365 = vrot.lane.b32.xlu0 %v2348, 48
      %v2366 = vpop.permute.xlu0 %2365
      %2367 = vrot.lane.b32.xlu0 %v2349, 48
      %v2368 = vpop.permute.xlu0 %2367
      %2369 = vrot.lane.b32.xlu0 %v2350, 48
      %v2370 = vpop.permute.xlu0 %2369
      %2371 = vrot.lane.b32.xlu0 %v2351, 48
      %v2372 = vpop.permute.xlu0 %2371
      %2373 = vrot.lane.b32.xlu0 %v2352, 48
      %v2374 = vpop.permute.xlu0 %2373
      %2375 = vrot.lane.b32.xlu0 %v2353, 48
      %v2376 = vpop.permute.xlu0 %2375
      %2377 = vrot.lane.b32.xlu0 %v2354, 48
      %v2378 = vpop.permute.xlu0 %2377
      %2379 = vrot.lane.b32.xlu0 %v2355, 48
      %v2380 = vpop.permute.xlu0 %2379
      %2381 = vrot.lane.b32.xlu0 %v2356, 48
      %v2382 = vpop.permute.xlu0 %2381
      %2383 = vrot.lane.b32.xlu0 %v2357, 48
      %v2384 = vpop.permute.xlu0 %2383
      %2385 = vrot.lane.b32.xlu0 %v2358, 48
      %v2386 = vpop.permute.xlu0 %2385
      %2387 = vrot.lane.b32.xlu0 %v2359, 48
      %v2388 = vpop.permute.xlu0 %2387
      %2389 = vrot.lane.b32.xlu0 %v2360, 48
      %v2390 = vpop.permute.xlu0 %2389
      %2391 = vrot.lane.b32.xlu0 %v2361, 48
      %v2392 = vpop.permute.xlu0 %2391
      %2393 = vrot.lane.b32.xlu0 %v2362, 48
      %v2394 = vpop.permute.xlu0 %2393
      %vm2411 = vcmask 458112
      %2412 = vst.msk [vmem:[#allocation2] sm:$0xff] %vm2411, %v2364
      %2413 = vst.msk [vmem:[#allocation2 + $0x8] sm:$0xff] %vm2411, %v2366
      %2414 = vst.msk [vmem:[#allocation2 + $0x10] sm:$0xff] %vm2411, %v2368
      %2415 = vst.msk [vmem:[#allocation2 + $0x18] sm:$0xff] %vm2411, %v2370
      %2416 = vst.msk [vmem:[#allocation2 + $0x20] sm:$0xff] %vm2411, %v2372
      %2417 = vst.msk [vmem:[#allocation2 + $0x28] sm:$0xff] %vm2411, %v2374
      %2418 = vst.msk [vmem:[#allocation2 + $0x30] sm:$0xff] %vm2411, %v2376
      %2419 = vst.msk [vmem:[#allocation2 + $0x38] sm:$0xff] %vm2411, %v2378
      %2420 = vst.msk [vmem:[#allocation2 + $0x40] sm:$0xff] %vm2411, %v2380
      %2421 = vst.msk [vmem:[#allocation2 + $0x48] sm:$0xff] %vm2411, %v2382
      %2422 = vst.msk [vmem:[#allocation2 + $0x50] sm:$0xff] %vm2411, %v2384
      %2423 = vst.msk [vmem:[#allocation2 + $0x58] sm:$0xff] %vm2411, %v2386
      %2424 = vst.msk [vmem:[#allocation2 + $0x60] sm:$0xff] %vm2411, %v2388
      %2425 = vst.msk [vmem:[#allocation2 + $0x68] sm:$0xff] %vm2411, %v2390
      %2426 = vst.msk [vmem:[#allocation2 + $0x70] sm:$0xff] %vm2411, %v2392
      %2427 = vst.msk [vmem:[#allocation2 + $0x78] sm:$0xff] %vm2411, %v2394
      %v2428 = vld [vmem:[%s2250] sm:$0xf]
      %v2429 = vld [vmem:[%s2250 + $0x4] sm:$0xf]
      %v2430 = vld [vmem:[%s2250 + $0x8] sm:$0x1]
      %v2431 = vld [vmem:[%s2250 + $0xc] sm:$0xf]
      %v2432 = vld [vmem:[%s2250 + $0x10] sm:$0xf]
      %v2433 = vld [vmem:[%s2250 + $0x14] sm:$0x1]
      %v2434 = vld [vmem:[%s2250 + $0x18] sm:$0xf]
      %v2435 = vld [vmem:[%s2250 + $0x1c] sm:$0xf]
      %v2436 = vld [vmem:[%s2250 + $0x20] sm:$0x1]
      %v2437 = vld [vmem:[%s2250 + $0x24] sm:$0xf]
      %v2438 = vld [vmem:[%s2250 + $0x28] sm:$0xf]
      %v2439 = vld [vmem:[%s2250 + $0x2c] sm:$0x1]
      %v2440 = vld [vmem:[%s2250 + $0x30] sm:$0xf]
      %v2441 = vld [vmem:[%s2250 + $0x34] sm:$0xf]
      %v2442 = vld [vmem:[%s2250 + $0x38] sm:$0x1]
      %v2443 = vld [vmem:[%s2250 + $0x3c] sm:$0xf]
      %v2444 = vld [vmem:[%s2250 + $0x40] sm:$0xf]
      %v2445 = vld [vmem:[%s2250 + $0x44] sm:$0x1]
      %v2446 = vld [vmem:[%s2250 + $0x48] sm:$0xf]
      %v2447 = vld [vmem:[%s2250 + $0x4c] sm:$0xf]
      %v2448 = vld [vmem:[%s2250 + $0x50] sm:$0x1]
      %v2449 = vld [vmem:[%s2250 + $0x54] sm:$0xf]
      %v2450 = vld [vmem:[%s2250 + $0x58] sm:$0xf]
      %v2451 = vld [vmem:[%s2250 + $0x5c] sm:$0x1]
      %v2452 = vld [vmem:[%s2250 + $0x60] sm:$0xf]
      %v2453 = vld [vmem:[%s2250 + $0x64] sm:$0xf]
      %v2454 = vld [vmem:[%s2250 + $0x68] sm:$0x1]
      %v2455 = vld [vmem:[%s2250 + $0x6c] sm:$0xf]
      %v2456 = vld [vmem:[%s2250 + $0x70] sm:$0xf]
      %v2457 = vld [vmem:[%s2250 + $0x74] sm:$0x1]
      %v2458 = vld [vmem:[%s2250 + $0x78] sm:$0xf]
      %v2459 = vld [vmem:[%s2250 + $0x7c] sm:$0xf]
      %v2460 = vld [vmem:[%s2250 + $0x80] sm:$0x1]
      %v2461 = vld [vmem:[%s2250 + $0x84] sm:$0xf]
      %v2462 = vld [vmem:[%s2250 + $0x88] sm:$0xf]
      %v2463 = vld [vmem:[%s2250 + $0x8c] sm:$0x1]
      %v2464 = vld [vmem:[%s2250 + $0x90] sm:$0xf]
      %v2465 = vld [vmem:[%s2250 + $0x94] sm:$0xf]
      %v2466 = vld [vmem:[%s2250 + $0x98] sm:$0x1]
      %v2467 = vld [vmem:[%s2250 + $0x9c] sm:$0xf]
      %v2468 = vld [vmem:[%s2250 + $0xa0] sm:$0xf]
      %v2469 = vld [vmem:[%s2250 + $0xa4] sm:$0x1]
      %v2470 = vld [vmem:[%s2250 + $0xa8] sm:$0xf]
      %v2471 = vld [vmem:[%s2250 + $0xac] sm:$0xf]
      %v2472 = vld [vmem:[%s2250 + $0xb0] sm:$0x1]
      %v2473 = vld [vmem:[%s2250 + $0xb4] sm:$0xf]
      %v2474 = vld [vmem:[%s2250 + $0xb8] sm:$0xf]
      %v2475 = vld [vmem:[%s2250 + $0xbc] sm:$0x1]
      %v2477 = vshrl.u32 %v2428, 16
      %v2479 = vrot.slane %v2477, 4
      %v2480 = vshll.u32 %v2428, 16
      %v2482 = vrot.slane %v2480, 5
      %v2483 = vor.u32 %v2479, %v2482
      %v2484 = vrot.slane %v2483, 4
      %v2486 = vshll.u32 %v2429, 16
      %v2488 = vrot.slane %v2486, 5
      %v2489 = vsel %vm384, %v2484, %v2488
      %v2490 = vshrl.u32 %v2429, 16
      %v2492 = vrot.slane %v2490, 4
      %v2493 = vor.u32 %v2492, %v2488
      %v2494 = vrot.slane %v2493, 4
      %v2496 = vshll.u32 %v2430, 16
      %v2498 = vrot.slane %v2496, 5
      %v2499 = vsel %vm384, %v2494, %v2498
      %v2501 = vshrl.u32 %v2431, 16
      %v2503 = vrot.slane %v2501, 4
      %v2504 = vshll.u32 %v2431, 16
      %v2506 = vrot.slane %v2504, 5
      %v2507 = vor.u32 %v2503, %v2506
      %v2508 = vrot.slane %v2507, 4
      %v2510 = vshll.u32 %v2432, 16
      %v2512 = vrot.slane %v2510, 5
      %v2513 = vsel %vm384, %v2508, %v2512
      %v2514 = vshrl.u32 %v2432, 16
      %v2516 = vrot.slane %v2514, 4
      %v2517 = vor.u32 %v2516, %v2512
      %v2518 = vrot.slane %v2517, 4
      %v2520 = vshll.u32 %v2433, 16
      %v2522 = vrot.slane %v2520, 5
      %v2523 = vsel %vm384, %v2518, %v2522
      %v2525 = vshrl.u32 %v2434, 16
      %v2527 = vrot.slane %v2525, 4
      %v2528 = vshll.u32 %v2434, 16
      %v2530 = vrot.slane %v2528, 5
      %v2531 = vor.u32 %v2527, %v2530
      %v2532 = vrot.slane %v2531, 4
      %v2534 = vshll.u32 %v2435, 16
      %v2536 = vrot.slane %v2534, 5
      %v2537 = vsel %vm384, %v2532, %v2536
      %v2538 = vshrl.u32 %v2435, 16
      %v2540 = vrot.slane %v2538, 4
      %v2541 = vor.u32 %v2540, %v2536
      %v2542 = vrot.slane %v2541, 4
      %v2544 = vshll.u32 %v2436, 16
      %v2546 = vrot.slane %v2544, 5
      %v2547 = vsel %vm384, %v2542, %v2546
      %v2549 = vshrl.u32 %v2437, 16
      %v2551 = vrot.slane %v2549, 4
      %v2552 = vshll.u32 %v2437, 16
      %v2554 = vrot.slane %v2552, 5
      %v2555 = vor.u32 %v2551, %v2554
      %v2556 = vrot.slane %v2555, 4
      %v2558 = vshll.u32 %v2438, 16
      %v2560 = vrot.slane %v2558, 5
      %v2561 = vsel %vm384, %v2556, %v2560
      %v2562 = vshrl.u32 %v2438, 16
      %v2564 = vrot.slane %v2562, 4
      %v2565 = vor.u32 %v2564, %v2560
      %v2566 = vrot.slane %v2565, 4
      %v2568 = vshll.u32 %v2439, 16
      %v2570 = vrot.slane %v2568, 5
      %v2571 = vsel %vm384, %v2566, %v2570
      %v2573 = vshrl.u32 %v2440, 16
      %v2575 = vrot.slane %v2573, 4
      %v2576 = vshll.u32 %v2440, 16
      %v2578 = vrot.slane %v2576, 5
      %v2579 = vor.u32 %v2575, %v2578
      %v2580 = vrot.slane %v2579, 4
      %v2582 = vshll.u32 %v2441, 16
      %v2584 = vrot.slane %v2582, 5
      %v2585 = vsel %vm384, %v2580, %v2584
      %v2586 = vshrl.u32 %v2441, 16
      %v2588 = vrot.slane %v2586, 4
      %v2589 = vor.u32 %v2588, %v2584
      %v2590 = vrot.slane %v2589, 4
      %v2592 = vshll.u32 %v2442, 16
      %v2594 = vrot.slane %v2592, 5
      %v2595 = vsel %vm384, %v2590, %v2594
      %v2597 = vshrl.u32 %v2443, 16
      %v2599 = vrot.slane %v2597, 4
      %v2600 = vshll.u32 %v2443, 16
      %v2602 = vrot.slane %v2600, 5
      %v2603 = vor.u32 %v2599, %v2602
      %v2604 = vrot.slane %v2603, 4
      %v2606 = vshll.u32 %v2444, 16
      %v2608 = vrot.slane %v2606, 5
      %v2609 = vsel %vm384, %v2604, %v2608
      %v2610 = vshrl.u32 %v2444, 16
      %v2612 = vrot.slane %v2610, 4
      %v2613 = vor.u32 %v2612, %v2608
      %v2614 = vrot.slane %v2613, 4
      %v2616 = vshll.u32 %v2445, 16
      %v2618 = vrot.slane %v2616, 5
      %v2619 = vsel %vm384, %v2614, %v2618
      %v2621 = vshrl.u32 %v2446, 16
      %v2623 = vrot.slane %v2621, 4
      %v2624 = vshll.u32 %v2446, 16
      %v2626 = vrot.slane %v2624, 5
      %v2627 = vor.u32 %v2623, %v2626
      %v2628 = vrot.slane %v2627, 4
      %v2630 = vshll.u32 %v2447, 16
      %v2632 = vrot.slane %v2630, 5
      %v2633 = vsel %vm384, %v2628, %v2632
      %v2634 = vshrl.u32 %v2447, 16
      %v2636 = vrot.slane %v2634, 4
      %v2637 = vor.u32 %v2636, %v2632
      %v2638 = vrot.slane %v2637, 4
      %v2640 = vshll.u32 %v2448, 16
      %v2642 = vrot.slane %v2640, 5
      %v2643 = vsel %vm384, %v2638, %v2642
      %v2645 = vshrl.u32 %v2449, 16
      %v2647 = vrot.slane %v2645, 4
      %v2648 = vshll.u32 %v2449, 16
      %v2650 = vrot.slane %v2648, 5
      %v2651 = vor.u32 %v2647, %v2650
      %v2652 = vrot.slane %v2651, 4
      %v2654 = vshll.u32 %v2450, 16
      %v2656 = vrot.slane %v2654, 5
      %v2657 = vsel %vm384, %v2652, %v2656
      %v2658 = vshrl.u32 %v2450, 16
      %v2660 = vrot.slane %v2658, 4
      %v2661 = vor.u32 %v2660, %v2656
      %v2662 = vrot.slane %v2661, 4
      %v2664 = vshll.u32 %v2451, 16
      %v2666 = vrot.slane %v2664, 5
      %v2667 = vsel %vm384, %v2662, %v2666
      %v2669 = vshrl.u32 %v2452, 16
      %v2671 = vrot.slane %v2669, 4
      %v2672 = vshll.u32 %v2452, 16
      %v2674 = vrot.slane %v2672, 5
      %v2675 = vor.u32 %v2671, %v2674
      %v2676 = vrot.slane %v2675, 4
      %v2678 = vshll.u32 %v2453, 16
      %v2680 = vrot.slane %v2678, 5
      %v2681 = vsel %vm384, %v2676, %v2680
      %v2682 = vshrl.u32 %v2453, 16
      %v2684 = vrot.slane %v2682, 4
      %v2685 = vor.u32 %v2684, %v2680
      %v2686 = vrot.slane %v2685, 4
      %v2688 = vshll.u32 %v2454, 16
      %v2690 = vrot.slane %v2688, 5
      %v2691 = vsel %vm384, %v2686, %v2690
      %v2693 = vshrl.u32 %v2455, 16
      %v2695 = vrot.slane %v2693, 4
      %v2696 = vshll.u32 %v2455, 16
      %v2698 = vrot.slane %v2696, 5
      %v2699 = vor.u32 %v2695, %v2698
      %v2700 = vrot.slane %v2699, 4
      %v2702 = vshll.u32 %v2456, 16
      %v2704 = vrot.slane %v2702, 5
      %v2705 = vsel %vm384, %v2700, %v2704
      %v2706 = vshrl.u32 %v2456, 16
      %v2708 = vrot.slane %v2706, 4
      %v2709 = vor.u32 %v2708, %v2704
      %v2710 = vrot.slane %v2709, 4
      %v2712 = vshll.u32 %v2457, 16
      %v2714 = vrot.slane %v2712, 5
      %v2715 = vsel %vm384, %v2710, %v2714
      %v2717 = vshrl.u32 %v2458, 16
      %v2719 = vrot.slane %v2717, 4
      %v2720 = vshll.u32 %v2458, 16
      %v2722 = vrot.slane %v2720, 5
      %v2723 = vor.u32 %v2719, %v2722
      %v2724 = vrot.slane %v2723, 4
      %v2726 = vshll.u32 %v2459, 16
      %v2728 = vrot.slane %v2726, 5
      %v2729 = vsel %vm384, %v2724, %v2728
      %v2730 = vshrl.u32 %v2459, 16
      %v2732 = vrot.slane %v2730, 4
      %v2733 = vor.u32 %v2732, %v2728
      %v2734 = vrot.slane %v2733, 4
      %v2736 = vshll.u32 %v2460, 16
      %v2738 = vrot.slane %v2736, 5
      %v2739 = vsel %vm384, %v2734, %v2738
      %v2741 = vshrl.u32 %v2461, 16
      %v2743 = vrot.slane %v2741, 4
      %v2744 = vshll.u32 %v2461, 16
      %v2746 = vrot.slane %v2744, 5
      %v2747 = vor.u32 %v2743, %v2746
      %v2748 = vrot.slane %v2747, 4
      %v2750 = vshll.u32 %v2462, 16
      %v2752 = vrot.slane %v2750, 5
      %v2753 = vsel %vm384, %v2748, %v2752
      %v2754 = vshrl.u32 %v2462, 16
      %v2756 = vrot.slane %v2754, 4
      %v2757 = vor.u32 %v2756, %v2752
      %v2758 = vrot.slane %v2757, 4
      %v2760 = vshll.u32 %v2463, 16
      %v2762 = vrot.slane %v2760, 5
      %v2763 = vsel %vm384, %v2758, %v2762
      %v2765 = vshrl.u32 %v2464, 16
      %v2767 = vrot.slane %v2765, 4
      %v2768 = vshll.u32 %v2464, 16
      %v2770 = vrot.slane %v2768, 5
      %v2771 = vor.u32 %v2767, %v2770
      %v2772 = vrot.slane %v2771, 4
      %v2774 = vshll.u32 %v2465, 16
      %v2776 = vrot.slane %v2774, 5
      %v2777 = vsel %vm384, %v2772, %v2776
      %v2778 = vshrl.u32 %v2465, 16
      %v2780 = vrot.slane %v2778, 4
      %v2781 = vor.u32 %v2780, %v2776
      %v2782 = vrot.slane %v2781, 4
      %v2784 = vshll.u32 %v2466, 16
      %v2786 = vrot.slane %v2784, 5
      %v2787 = vsel %vm384, %v2782, %v2786
      %v2789 = vshrl.u32 %v2467, 16
      %v2791 = vrot.slane %v2789, 4
      %v2792 = vshll.u32 %v2467, 16
      %v2794 = vrot.slane %v2792, 5
      %v2795 = vor.u32 %v2791, %v2794
      %v2796 = vrot.slane %v2795, 4
      %v2798 = vshll.u32 %v2468, 16
      %v2800 = vrot.slane %v2798, 5
      %v2801 = vsel %vm384, %v2796, %v2800
      %v2802 = vshrl.u32 %v2468, 16
      %v2804 = vrot.slane %v2802, 4
      %v2805 = vor.u32 %v2804, %v2800
      %v2806 = vrot.slane %v2805, 4
      %v2808 = vshll.u32 %v2469, 16
      %v2810 = vrot.slane %v2808, 5
      %v2811 = vsel %vm384, %v2806, %v2810
      %v2813 = vshrl.u32 %v2470, 16
      %v2815 = vrot.slane %v2813, 4
      %v2816 = vshll.u32 %v2470, 16
      %v2818 = vrot.slane %v2816, 5
      %v2819 = vor.u32 %v2815, %v2818
      %v2820 = vrot.slane %v2819, 4
      %v2822 = vshll.u32 %v2471, 16
      %v2824 = vrot.slane %v2822, 5
      %v2825 = vsel %vm384, %v2820, %v2824
      %v2826 = vshrl.u32 %v2471, 16
      %v2828 = vrot.slane %v2826, 4
      %v2829 = vor.u32 %v2828, %v2824
      %v2830 = vrot.slane %v2829, 4
      %v2832 = vshll.u32 %v2472, 16
      %v2834 = vrot.slane %v2832, 5
      %v2835 = vsel %vm384, %v2830, %v2834
      %v2837 = vshrl.u32 %v2473, 16
      %v2839 = vrot.slane %v2837, 4
      %v2840 = vshll.u32 %v2473, 16
      %v2842 = vrot.slane %v2840, 5
      %v2843 = vor.u32 %v2839, %v2842
      %v2844 = vrot.slane %v2843, 4
      %v2846 = vshll.u32 %v2474, 16
      %v2848 = vrot.slane %v2846, 5
      %v2849 = vsel %vm384, %v2844, %v2848
      %v2850 = vshrl.u32 %v2474, 16
      %v2852 = vrot.slane %v2850, 4
      %v2853 = vor.u32 %v2852, %v2848
      %v2854 = vrot.slane %v2853, 4
      %v2856 = vshll.u32 %v2475, 16
      %v2858 = vrot.slane %v2856, 5
      %v2859 = vsel %vm384, %v2854, %v2858
      %v2860 = vunpack.c.l.b16 %v2489
      %v2861 = vunpack.c.l.b16 %v2499
      %v2862 = vunpack.c.l.b16 %v2513
      %v2863 = vunpack.c.l.b16 %v2523
      %v2864 = vunpack.c.l.b16 %v2537
      %v2865 = vunpack.c.l.b16 %v2547
      %v2866 = vunpack.c.l.b16 %v2561
      %v2867 = vunpack.c.l.b16 %v2571
      %v2868 = vunpack.c.l.b16 %v2585
      %v2869 = vunpack.c.l.b16 %v2595
      %v2870 = vunpack.c.l.b16 %v2609
      %v2871 = vunpack.c.l.b16 %v2619
      %v2872 = vunpack.c.l.b16 %v2633
      %v2873 = vunpack.c.l.b16 %v2643
      %v2874 = vunpack.c.l.b16 %v2657
      %v2875 = vunpack.c.l.b16 %v2667
      %v2876 = vunpack.c.l.b16 %v2681
      %v2877 = vunpack.c.l.b16 %v2691
      %v2878 = vunpack.c.l.b16 %v2705
      %v2879 = vunpack.c.l.b16 %v2715
      %v2880 = vunpack.c.l.b16 %v2729
      %v2881 = vunpack.c.l.b16 %v2739
      %v2882 = vunpack.c.l.b16 %v2753
      %v2883 = vunpack.c.l.b16 %v2763
      %v2884 = vunpack.c.l.b16 %v2777
      %v2885 = vunpack.c.l.b16 %v2787
      %v2886 = vunpack.c.l.b16 %v2801
      %v2887 = vunpack.c.l.b16 %v2811
      %v2888 = vunpack.c.l.b16 %v2825
      %v2889 = vunpack.c.l.b16 %v2835
      %v2890 = vunpack.c.l.b16 %v2849
      %v2891 = vunpack.c.l.b16 %v2859
      %v2892 = vpack.c.b16 %v2861, %v2860
      %v2893 = vpack.c.b16 %v2863, %v2862
      %v2894 = vpack.c.b16 %v2865, %v2864
      %v2895 = vpack.c.b16 %v2867, %v2866
      %v2896 = vpack.c.b16 %v2869, %v2868
      %v2897 = vpack.c.b16 %v2871, %v2870
      %v2898 = vpack.c.b16 %v2873, %v2872
      %v2899 = vpack.c.b16 %v2875, %v2874
      %v2900 = vpack.c.b16 %v2877, %v2876
      %v2901 = vpack.c.b16 %v2879, %v2878
      %v2902 = vpack.c.b16 %v2881, %v2880
      %v2903 = vpack.c.b16 %v2883, %v2882
      %v2904 = vpack.c.b16 %v2885, %v2884
      %v2905 = vpack.c.b16 %v2887, %v2886
      %v2906 = vpack.c.b16 %v2889, %v2888
      %v2907 = vpack.c.b16 %v2891, %v2890
      %2908 = vrot.lane.b32.xlu0 %v2892, 56
      %v2909 = vpop.permute.xlu0 %2908
      %2910 = vrot.lane.b32.xlu0 %v2893, 56
      %v2911 = vpop.permute.xlu0 %2910
      %2912 = vrot.lane.b32.xlu0 %v2894, 56
      %v2913 = vpop.permute.xlu0 %2912
      %2914 = vrot.lane.b32.xlu0 %v2895, 56
      %v2915 = vpop.permute.xlu0 %2914
      %2916 = vrot.lane.b32.xlu0 %v2896, 56
      %v2917 = vpop.permute.xlu0 %2916
      %2918 = vrot.lane.b32.xlu0 %v2897, 56
      %v2919 = vpop.permute.xlu0 %2918
      %2920 = vrot.lane.b32.xlu0 %v2898, 56
      %v2921 = vpop.permute.xlu0 %2920
      %2922 = vrot.lane.b32.xlu0 %v2899, 56
      %v2923 = vpop.permute.xlu0 %2922
      %2924 = vrot.lane.b32.xlu0 %v2900, 56
      %v2925 = vpop.permute.xlu0 %2924
      %2926 = vrot.lane.b32.xlu0 %v2901, 56
      %v2927 = vpop.permute.xlu0 %2926
      %2928 = vrot.lane.b32.xlu0 %v2902, 56
      %v2929 = vpop.permute.xlu0 %2928
      %2930 = vrot.lane.b32.xlu0 %v2903, 56
      %v2931 = vpop.permute.xlu0 %2930
      %2932 = vrot.lane.b32.xlu0 %v2904, 56
      %v2933 = vpop.permute.xlu0 %2932
      %2934 = vrot.lane.b32.xlu0 %v2905, 56
      %v2935 = vpop.permute.xlu0 %2934
      %2936 = vrot.lane.b32.xlu0 %v2906, 56
      %v2937 = vpop.permute.xlu0 %2936
      %2938 = vrot.lane.b32.xlu0 %v2907, 56
      %v2939 = vpop.permute.xlu0 %2938
      %vm2956 = vcmask 523712
      %2957 = vst.msk [vmem:[#allocation2] sm:$0xff] %vm2956, %v2909
      %2958 = vst.msk [vmem:[#allocation2 + $0x8] sm:$0xff] %vm2956, %v2911
      %2959 = vst.msk [vmem:[#allocation2 + $0x10] sm:$0xff] %vm2956, %v2913
      %2960 = vst.msk [vmem:[#allocation2 + $0x18] sm:$0xff] %vm2956, %v2915
      %2961 = vst.msk [vmem:[#allocation2 + $0x20] sm:$0xff] %vm2956, %v2917
      %2962 = vst.msk [vmem:[#allocation2 + $0x28] sm:$0xff] %vm2956, %v2919
      %2963 = vst.msk [vmem:[#allocation2 + $0x30] sm:$0xff] %vm2956, %v2921
      %2964 = vst.msk [vmem:[#allocation2 + $0x38] sm:$0xff] %vm2956, %v2923
      %2965 = vst.msk [vmem:[#allocation2 + $0x40] sm:$0xff] %vm2956, %v2925
      %2966 = vst.msk [vmem:[#allocation2 + $0x48] sm:$0xff] %vm2956, %v2927
      %2967 = vst.msk [vmem:[#allocation2 + $0x50] sm:$0xff] %vm2956, %v2929
      %2968 = vst.msk [vmem:[#allocation2 + $0x58] sm:$0xff] %vm2956, %v2931
      %2969 = vst.msk [vmem:[#allocation2 + $0x60] sm:$0xff] %vm2956, %v2933
      %2970 = vst.msk [vmem:[#allocation2 + $0x68] sm:$0xff] %vm2956, %v2935
      %2971 = vst.msk [vmem:[#allocation2 + $0x70] sm:$0xff] %vm2956, %v2937
      %2972 = vst.msk [vmem:[#allocation2 + $0x78] sm:$0xff] %vm2956, %v2939
      %v2973 = vld [vmem:[%s2250] sm:$0xe]
      %v2974 = vld [vmem:[%s2250 + $0x4] sm:$0xf]
      %v2975 = vld [vmem:[%s2250 + $0x8] sm:$0x1]
      %v2976 = vld [vmem:[%s2250 + $0xc] sm:$0xe]
      %v2977 = vld [vmem:[%s2250 + $0x10] sm:$0xf]
      %v2978 = vld [vmem:[%s2250 + $0x14] sm:$0x1]
      %v2979 = vld [vmem:[%s2250 + $0x18] sm:$0xe]
      %v2980 = vld [vmem:[%s2250 + $0x1c] sm:$0xf]
      %v2981 = vld [vmem:[%s2250 + $0x20] sm:$0x1]
      %v2982 = vld [vmem:[%s2250 + $0x24] sm:$0xe]
      %v2983 = vld [vmem:[%s2250 + $0x28] sm:$0xf]
      %v2984 = vld [vmem:[%s2250 + $0x2c] sm:$0x1]
      %v2985 = vld [vmem:[%s2250 + $0x30] sm:$0xe]
      %v2986 = vld [vmem:[%s2250 + $0x34] sm:$0xf]
      %v2987 = vld [vmem:[%s2250 + $0x38] sm:$0x1]
      %v2988 = vld [vmem:[%s2250 + $0x3c] sm:$0xe]
      %v2989 = vld [vmem:[%s2250 + $0x40] sm:$0xf]
      %v2990 = vld [vmem:[%s2250 + $0x44] sm:$0x1]
      %v2991 = vld [vmem:[%s2250 + $0x48] sm:$0xe]
      %v2992 = vld [vmem:[%s2250 + $0x4c] sm:$0xf]
      %v2993 = vld [vmem:[%s2250 + $0x50] sm:$0x1]
      %v2994 = vld [vmem:[%s2250 + $0x54] sm:$0xe]
      %v2995 = vld [vmem:[%s2250 + $0x58] sm:$0xf]
      %v2996 = vld [vmem:[%s2250 + $0x5c] sm:$0x1]
      %v2997 = vld [vmem:[%s2250 + $0x60] sm:$0xe]
      %v2998 = vld [vmem:[%s2250 + $0x64] sm:$0xf]
      %v2999 = vld [vmem:[%s2250 + $0x68] sm:$0x1]
      %v3000 = vld [vmem:[%s2250 + $0x6c] sm:$0xe]
      %v3001 = vld [vmem:[%s2250 + $0x70] sm:$0xf]
      %v3002 = vld [vmem:[%s2250 + $0x74] sm:$0x1]
      %v3003 = vld [vmem:[%s2250 + $0x78] sm:$0xe]
      %v3004 = vld [vmem:[%s2250 + $0x7c] sm:$0xf]
      %v3005 = vld [vmem:[%s2250 + $0x80] sm:$0x1]
      %v3006 = vld [vmem:[%s2250 + $0x84] sm:$0xe]
      %v3007 = vld [vmem:[%s2250 + $0x88] sm:$0xf]
      %v3008 = vld [vmem:[%s2250 + $0x8c] sm:$0x1]
      %v3009 = vld [vmem:[%s2250 + $0x90] sm:$0xe]
      %v3010 = vld [vmem:[%s2250 + $0x94] sm:$0xf]
      %v3011 = vld [vmem:[%s2250 + $0x98] sm:$0x1]
      %v3012 = vld [vmem:[%s2250 + $0x9c] sm:$0xe]
      %v3013 = vld [vmem:[%s2250 + $0xa0] sm:$0xf]
      %v3014 = vld [vmem:[%s2250 + $0xa4] sm:$0x1]
      %v3015 = vld [vmem:[%s2250 + $0xa8] sm:$0xe]
      %v3016 = vld [vmem:[%s2250 + $0xac] sm:$0xf]
      %v3017 = vld [vmem:[%s2250 + $0xb0] sm:$0x1]
      %v3018 = vld [vmem:[%s2250 + $0xb4] sm:$0xe]
      %v3019 = vld [vmem:[%s2250 + $0xb8] sm:$0xf]
      %v3020 = vld [vmem:[%s2250 + $0xbc] sm:$0x1]
      %v3069 = vrot.slane %v2973, 5
      %v3070 = vrot.slane %v3069, 4
      %v3071 = vrot.slane %v2974, 5
      %v3072 = vsel %vm980, %v3070, %v3071
      %v3073 = vrot.slane %v3071, 4
      %v3074 = vrot.slane %v2975, 5
      %v3075 = vsel %vm980, %v3073, %v3074
      %v3076 = vrot.slane %v2976, 5
      %v3077 = vrot.slane %v3076, 4
      %v3078 = vrot.slane %v2977, 5
      %v3079 = vsel %vm980, %v3077, %v3078
      %v3080 = vrot.slane %v3078, 4
      %v3081 = vrot.slane %v2978, 5
      %v3082 = vsel %vm980, %v3080, %v3081
      %v3083 = vrot.slane %v2979, 5
      %v3084 = vrot.slane %v3083, 4
      %v3085 = vrot.slane %v2980, 5
      %v3086 = vsel %vm980, %v3084, %v3085
      %v3087 = vrot.slane %v3085, 4
      %v3088 = vrot.slane %v2981, 5
      %v3089 = vsel %vm980, %v3087, %v3088
      %v3090 = vrot.slane %v2982, 5
      %v3091 = vrot.slane %v3090, 4
      %v3092 = vrot.slane %v2983, 5
      %v3093 = vsel %vm980, %v3091, %v3092
      %v3094 = vrot.slane %v3092, 4
      %v3095 = vrot.slane %v2984, 5
      %v3096 = vsel %vm980, %v3094, %v3095
      %v3097 = vrot.slane %v2985, 5
      %v3098 = vrot.slane %v3097, 4
      %v3099 = vrot.slane %v2986, 5
      %v3100 = vsel %vm980, %v3098, %v3099
      %v3101 = vrot.slane %v3099, 4
      %v3102 = vrot.slane %v2987, 5
      %v3103 = vsel %vm980, %v3101, %v3102
      %v3104 = vrot.slane %v2988, 5
      %v3105 = vrot.slane %v3104, 4
      %v3106 = vrot.slane %v2989, 5
      %v3107 = vsel %vm980, %v3105, %v3106
      %v3108 = vrot.slane %v3106, 4
      %v3109 = vrot.slane %v2990, 5
      %v3110 = vsel %vm980, %v3108, %v3109
      %v3111 = vrot.slane %v2991, 5
      %v3112 = vrot.slane %v3111, 4
      %v3113 = vrot.slane %v2992, 5
      %v3114 = vsel %vm980, %v3112, %v3113
      %v3115 = vrot.slane %v3113, 4
      %v3116 = vrot.slane %v2993, 5
      %v3117 = vsel %vm980, %v3115, %v3116
      %v3118 = vrot.slane %v2994, 5
      %v3119 = vrot.slane %v3118, 4
      %v3120 = vrot.slane %v2995, 5
      %v3121 = vsel %vm980, %v3119, %v3120
      %v3122 = vrot.slane %v3120, 4
      %v3123 = vrot.slane %v2996, 5
      %v3124 = vsel %vm980, %v3122, %v3123
      %v3125 = vrot.slane %v2997, 5
      %v3126 = vrot.slane %v3125, 4
      %v3127 = vrot.slane %v2998, 5
      %v3128 = vsel %vm980, %v3126, %v3127
      %v3129 = vrot.slane %v3127, 4
      %v3130 = vrot.slane %v2999, 5
      %v3131 = vsel %vm980, %v3129, %v3130
      %v3132 = vrot.slane %v3000, 5
      %v3133 = vrot.slane %v3132, 4
      %v3134 = vrot.slane %v3001, 5
      %v3135 = vsel %vm980, %v3133, %v3134
      %v3136 = vrot.slane %v3134, 4
      %v3137 = vrot.slane %v3002, 5
      %v3138 = vsel %vm980, %v3136, %v3137
      %v3139 = vrot.slane %v3003, 5
      %v3140 = vrot.slane %v3139, 4
      %v3141 = vrot.slane %v3004, 5
      %v3142 = vsel %vm980, %v3140, %v3141
      %v3143 = vrot.slane %v3141, 4
      %v3144 = vrot.slane %v3005, 5
      %v3145 = vsel %vm980, %v3143, %v3144
      %v3146 = vrot.slane %v3006, 5
      %v3147 = vrot.slane %v3146, 4
      %v3148 = vrot.slane %v3007, 5
      %v3149 = vsel %vm980, %v3147, %v3148
      %v3150 = vrot.slane %v3148, 4
      %v3151 = vrot.slane %v3008, 5
      %v3152 = vsel %vm980, %v3150, %v3151
      %v3153 = vrot.slane %v3009, 5
      %v3154 = vrot.slane %v3153, 4
      %v3155 = vrot.slane %v3010, 5
      %v3156 = vsel %vm980, %v3154, %v3155
      %v3157 = vrot.slane %v3155, 4
      %v3158 = vrot.slane %v3011, 5
      %v3159 = vsel %vm980, %v3157, %v3158
      %v3160 = vrot.slane %v3012, 5
      %v3161 = vrot.slane %v3160, 4
      %v3162 = vrot.slane %v3013, 5
      %v3163 = vsel %vm980, %v3161, %v3162
      %v3164 = vrot.slane %v3162, 4
      %v3165 = vrot.slane %v3014, 5
      %v3166 = vsel %vm980, %v3164, %v3165
      %v3167 = vrot.slane %v3015, 5
      %v3168 = vrot.slane %v3167, 4
      %v3169 = vrot.slane %v3016, 5
      %v3170 = vsel %vm980, %v3168, %v3169
      %v3171 = vrot.slane %v3169, 4
      %v3172 = vrot.slane %v3017, 5
      %v3173 = vsel %vm980, %v3171, %v3172
      %v3174 = vrot.slane %v3018, 5
      %v3175 = vrot.slane %v3174, 4
      %v3176 = vrot.slane %v3019, 5
      %v3177 = vsel %vm980, %v3175, %v3176
      %v3178 = vrot.slane %v3176, 4
      %v3179 = vrot.slane %v3020, 5
      %v3180 = vsel %vm980, %v3178, %v3179
      %v3181 = vunpack.c.l.b16 %v3072
      %v3182 = vunpack.c.l.b16 %v3075
      %v3183 = vunpack.c.l.b16 %v3079
      %v3184 = vunpack.c.l.b16 %v3082
      %v3185 = vunpack.c.l.b16 %v3086
      %v3186 = vunpack.c.l.b16 %v3089
      %v3187 = vunpack.c.l.b16 %v3093
      %v3188 = vunpack.c.l.b16 %v3096
      %v3189 = vunpack.c.l.b16 %v3100
      %v3190 = vunpack.c.l.b16 %v3103
      %v3191 = vunpack.c.l.b16 %v3107
      %v3192 = vunpack.c.l.b16 %v3110
      %v3193 = vunpack.c.l.b16 %v3114
      %v3194 = vunpack.c.l.b16 %v3117
      %v3195 = vunpack.c.l.b16 %v3121
      %v3196 = vunpack.c.l.b16 %v3124
      %v3197 = vunpack.c.l.b16 %v3128
      %v3198 = vunpack.c.l.b16 %v3131
      %v3199 = vunpack.c.l.b16 %v3135
      %v3200 = vunpack.c.l.b16 %v3138
      %v3201 = vunpack.c.l.b16 %v3142
      %v3202 = vunpack.c.l.b16 %v3145
      %v3203 = vunpack.c.l.b16 %v3149
      %v3204 = vunpack.c.l.b16 %v3152
      %v3205 = vunpack.c.l.b16 %v3156
      %v3206 = vunpack.c.l.b16 %v3159
      %v3207 = vunpack.c.l.b16 %v3163
      %v3208 = vunpack.c.l.b16 %v3166
      %v3209 = vunpack.c.l.b16 %v3170
      %v3210 = vunpack.c.l.b16 %v3173
      %v3211 = vunpack.c.l.b16 %v3177
      %v3212 = vunpack.c.l.b16 %v3180
      %v3213 = vpack.c.b16 %v3182, %v3181
      %v3214 = vpack.c.b16 %v3184, %v3183
      %v3215 = vpack.c.b16 %v3186, %v3185
      %v3216 = vpack.c.b16 %v3188, %v3187
      %v3217 = vpack.c.b16 %v3190, %v3189
      %v3218 = vpack.c.b16 %v3192, %v3191
      %v3219 = vpack.c.b16 %v3194, %v3193
      %v3220 = vpack.c.b16 %v3196, %v3195
      %v3221 = vpack.c.b16 %v3198, %v3197
      %v3222 = vpack.c.b16 %v3200, %v3199
      %v3223 = vpack.c.b16 %v3202, %v3201
      %v3224 = vpack.c.b16 %v3204, %v3203
      %v3225 = vpack.c.b16 %v3206, %v3205
      %v3226 = vpack.c.b16 %v3208, %v3207
      %v3227 = vpack.c.b16 %v3210, %v3209
      %v3228 = vpack.c.b16 %v3212, %v3211
      %3229 = vrot.lane.b32.xlu0 %v3213, 64
      %v3230 = vpop.permute.xlu0 %3229
      %3231 = vrot.lane.b32.xlu0 %v3214, 64
      %v3232 = vpop.permute.xlu0 %3231
      %3233 = vrot.lane.b32.xlu0 %v3215, 64
      %v3234 = vpop.permute.xlu0 %3233
      %3235 = vrot.lane.b32.xlu0 %v3216, 64
      %v3236 = vpop.permute.xlu0 %3235
      %3237 = vrot.lane.b32.xlu0 %v3217, 64
      %v3238 = vpop.permute.xlu0 %3237
      %3239 = vrot.lane.b32.xlu0 %v3218, 64
      %v3240 = vpop.permute.xlu0 %3239
      %3241 = vrot.lane.b32.xlu0 %v3219, 64
      %v3242 = vpop.permute.xlu0 %3241
      %3243 = vrot.lane.b32.xlu0 %v3220, 64
      %v3244 = vpop.permute.xlu0 %3243
      %3245 = vrot.lane.b32.xlu0 %v3221, 64
      %v3246 = vpop.permute.xlu0 %3245
      %3247 = vrot.lane.b32.xlu0 %v3222, 64
      %v3248 = vpop.permute.xlu0 %3247
      %3249 = vrot.lane.b32.xlu0 %v3223, 64
      %v3250 = vpop.permute.xlu0 %3249
      %3251 = vrot.lane.b32.xlu0 %v3224, 64
      %v3252 = vpop.permute.xlu0 %3251
      %3253 = vrot.lane.b32.xlu0 %v3225, 64
      %v3254 = vpop.permute.xlu0 %3253
      %3255 = vrot.lane.b32.xlu0 %v3226, 64
      %v3256 = vpop.permute.xlu0 %3255
      %3257 = vrot.lane.b32.xlu0 %v3227, 64
      %v3258 = vpop.permute.xlu0 %3257
      %3259 = vrot.lane.b32.xlu0 %v3228, 64
      %v3260 = vpop.permute.xlu0 %3259
      %vm3277 = vcmask 589312
      %3278 = vst.msk [vmem:[#allocation2] sm:$0xff] %vm3277, %v3230
      %3279 = vst.msk [vmem:[#allocation2 + $0x8] sm:$0xff] %vm3277, %v3232
      %3280 = vst.msk [vmem:[#allocation2 + $0x10] sm:$0xff] %vm3277, %v3234
      %3281 = vst.msk [vmem:[#allocation2 + $0x18] sm:$0xff] %vm3277, %v3236
      %3282 = vst.msk [vmem:[#allocation2 + $0x20] sm:$0xff] %vm3277, %v3238
      %3283 = vst.msk [vmem:[#allocation2 + $0x28] sm:$0xff] %vm3277, %v3240
      %3284 = vst.msk [vmem:[#allocation2 + $0x30] sm:$0xff] %vm3277, %v3242
      %3285 = vst.msk [vmem:[#allocation2 + $0x38] sm:$0xff] %vm3277, %v3244
      %3286 = vst.msk [vmem:[#allocation2 + $0x40] sm:$0xff] %vm3277, %v3246
      %3287 = vst.msk [vmem:[#allocation2 + $0x48] sm:$0xff] %vm3277, %v3248
      %3288 = vst.msk [vmem:[#allocation2 + $0x50] sm:$0xff] %vm3277, %v3250
      %3289 = vst.msk [vmem:[#allocation2 + $0x58] sm:$0xff] %vm3277, %v3252
      %3290 = vst.msk [vmem:[#allocation2 + $0x60] sm:$0xff] %vm3277, %v3254
      %3291 = vst.msk [vmem:[#allocation2 + $0x68] sm:$0xff] %vm3277, %v3256
      %3292 = vst.msk [vmem:[#allocation2 + $0x70] sm:$0xff] %vm3277, %v3258
      %3293 = vst.msk [vmem:[#allocation2 + $0x78] sm:$0xff] %vm3277, %v3260
      %v3294 = vld [vmem:[#allocation2] sm:$0xff]
      %v3295 = vld [vmem:[#allocation2 + $0x8] sm:$0xff]
      %v3296 = vld [vmem:[#allocation2 + $0x10] sm:$0xff]
      %v3297 = vld [vmem:[#allocation2 + $0x18] sm:$0xff]
      %v3298 = vld [vmem:[#allocation2 + $0x20] sm:$0xff]
      %v3299 = vld [vmem:[#allocation2 + $0x28] sm:$0xff]
      %v3300 = vld [vmem:[#allocation2 + $0x30] sm:$0xff]
      %v3301 = vld [vmem:[#allocation2 + $0x38] sm:$0xff]
      %v3302 = vld [vmem:[#allocation2 + $0x40] sm:$0xff]
      %v3303 = vld [vmem:[#allocation2 + $0x48] sm:$0xff]
      %v3304 = vld [vmem:[#allocation2 + $0x50] sm:$0xff]
      %v3305 = vld [vmem:[#allocation2 + $0x58] sm:$0xff]
      %v3306 = vld [vmem:[#allocation2 + $0x60] sm:$0xff]
      %v3307 = vld [vmem:[#allocation2 + $0x68] sm:$0xff]
      %v3308 = vld [vmem:[#allocation2 + $0x70] sm:$0xff]
      %v3309 = vld [vmem:[#allocation2 + $0x78] sm:$0xff]
      %v3310 = vld [vmem:[%s1] sm:$0xf]
      %v3311 = vld [vmem:[%s1 + $0x4] sm:$0xf]
      %v3312 = vld [vmem:[%s1 + $0x8] sm:$0xf]
      %v3313 = vld [vmem:[%s1 + $0xc] sm:$0xf]
      %v3314 = vld [vmem:[%s1 + $0x10] sm:$0xf]
      %v3315 = vld [vmem:[%s1 + $0x14] sm:$0xf]
      %v3316 = vld [vmem:[%s1 + $0x18] sm:$0xf]
      %v3317 = vld [vmem:[%s1 + $0x1c] sm:$0xf]
      %v3318 = vld [vmem:[%s1 + $0x20] sm:$0xf]
      %v3319 = vld [vmem:[%s1 + $0x24] sm:$0xf]
      %v3320 = vld [vmem:[%s1 + $0x28] sm:$0xf]
      %v3321 = vld [vmem:[%s1 + $0x2c] sm:$0xf]
      %v3322 = vld [vmem:[%s1 + $0x30] sm:$0xf]
      %v3323 = vld [vmem:[%s1 + $0x34] sm:$0xf]
      %v3324 = vld [vmem:[%s1 + $0x38] sm:$0xf]
      %v3325 = vld [vmem:[%s1 + $0x3c] sm:$0xf]
      %3326 = vst [vmem:[#allocation3] sm:$0xff] -inf
      %3327 = vst [vmem:[#allocation3 + $0x8] sm:$0xff] -inf
      %s3328 = scalar_lea.vmem [#allocation3], 272
      %3329 = vst [vmem:[%s3328] sm:$0xff] -inf
      %3330 = vst [vmem:[%s3328 + $0x8] sm:$0xff] -inf
      %3331 = vst [vmem:[#allocation4] sm:$0x1] -inf
      %3332 = vst [vmem:[#allocation4 + $0x18] sm:$0x1] -inf
      %3333 = vst [vmem:[#allocation4 + $0x30] sm:$0x1] -inf
      %3334 = vst [vmem:[#allocation4 + $0x48] sm:$0x1] -inf
      %3335 = vst [vmem:[#allocation4 + $0x60] sm:$0x1] -inf
      %3336 = vst [vmem:[#allocation4 + $0x78] sm:$0x1] -inf
      %3337 = vst [vmem:[#allocation4 + $0x90] sm:$0x1] -inf
      %3338 = vst [vmem:[#allocation4 + $0xa8] sm:$0x1] -inf
      %3339 = vst [vmem:[#allocation4 + $0x11] sm:$0x1] -inf
      %3340 = vst [vmem:[#allocation4 + $0x29] sm:$0x1] -inf
      %3341 = vst [vmem:[#allocation4 + $0x41] sm:$0x1] -inf
      %3342 = vst [vmem:[#allocation4 + $0x59] sm:$0x1] -inf
      %3343 = vst [vmem:[#allocation4 + $0x71] sm:$0x1] -inf
      %3344 = vst [vmem:[#allocation4 + $0x89] sm:$0x1] -inf
      %3345 = vst [vmem:[#allocation4 + $0xa1] sm:$0x1] -inf
      %3346 = vst [vmem:[#allocation4 + $0xb9] sm:$0x1] -inf
      %v3347 = vld [vmem:[%s2] sm:$0x1]
      %v3349 = vlaneseq
      %v3350 = vshrl.u32 %v3349, 7
      %v3351 = vsub.s32 0, %v3350
      %v3352 = vrot.slane %v3347, %v3351
      %v3370 = vunpack.c.l.b16 %v3310
      %v3371 = vunpack.c.l.b16 %v3311
      %v3372 = vunpack.c.l.b16 %v3312
      %v3373 = vunpack.c.l.b16 %v3313
      %v3374 = vunpack.c.l.b16 %v3314
      %v3375 = vunpack.c.l.b16 %v3315
      %v3376 = vunpack.c.l.b16 %v3316
      %v3377 = vunpack.c.l.b16 %v3317
      %v3378 = vunpack.c.l.b16 %v3318
      %v3379 = vunpack.c.l.b16 %v3319
      %v3380 = vunpack.c.l.b16 %v3320
      %v3381 = vunpack.c.l.b16 %v3321
      %v3382 = vunpack.c.l.b16 %v3322
      %v3383 = vunpack.c.l.b16 %v3323
      %v3384 = vunpack.c.l.b16 %v3324
      %v3385 = vunpack.c.l.b16 %v3325
      %v3386 = vpack.c.b16 %v3371, %v3370
      %v3387 = vpack.c.b16 %v3373, %v3372
      %v3388 = vpack.c.b16 %v3375, %v3374
      %v3389 = vpack.c.b16 %v3377, %v3376
      %v3390 = vpack.c.b16 %v3379, %v3378
      %v3391 = vpack.c.b16 %v3381, %v3380
      %v3392 = vpack.c.b16 %v3383, %v3382
      %v3393 = vpack.c.b16 %v3385, %v3384
      %3402 = vmatprep.subr.bf16.mxu0 0
      %3403 = vmatpush1.bf16.msra.mxu0 %v3386
      %3404 = vmatprep.subr.bf16.mxu0 0
      %3405 = vmatpush1.bf16.msra.mxu0 %v3387
      %3406 = vmatprep.subr.bf16.mxu0 0
      %3407 = vmatpush1.bf16.msra.mxu0 %v3388
      %3408 = vmatprep.subr.bf16.mxu0 0
      %3409 = vmatpush1.bf16.msra.mxu0 %v3389
      %3410 = vmatprep.subr.bf16.mxu0 0
      %3411 = vmatpush1.bf16.msra.mxu0 %v3390
      %3412 = vmatprep.subr.bf16.mxu0 0
      %3413 = vmatpush1.bf16.msra.mxu0 %v3391
      %3414 = vmatprep.subr.bf16.mxu0 0
      %3415 = vmatpush1.bf16.msra.mxu0 %v3392
      %3416 = vmatprep.subr.bf16.mxu0 0
      %3417 = vmatpush1.bf16.msra.mxu0 %v3393
      %3418 = vmatprep.subr.bf16.mxu0 0
      %3419 = vmatpush1.bf16.msra.mxu0 0
      %3420 = vmatprep.subr.bf16.mxu0 0
      %3421 = vmatpush1.bf16.msra.mxu0 0
      %3422 = vmatprep.subr.bf16.mxu0 0
      %3423 = vmatpush1.bf16.msra.mxu0 0
      %3424 = vmatprep.subr.bf16.mxu0 0
      %3425 = vmatpush1.bf16.msra.mxu0 0
      %3426 = vmatprep.subr.bf16.mxu0 0
      %3427 = vmatpush1.bf16.msra.mxu0 0
      %3428 = vmatprep.subr.bf16.mxu0 0
      %3429 = vmatpush1.bf16.msra.mxu0 0
      %3430 = vmatprep.subr.bf16.mxu0 0
      %3431 = vmatpush1.bf16.msra.mxu0 0
      %3432 = vmatprep.subr.bf16.mxu0 0
      %3433 = vmatpush1.bf16.msra.mxu0 0
      %3434 = vmatprep.mubr.bf16.mxu0 0
      %3435 = vmatmul.mubr.bf16.gmra.mrb[0].mxu0 %v3294
      %v3436 = vpop.f32.mrb[0].mxu0
      %v3437 = vadd.f32 %v3352, %v3436
      %v3438 = vpop.f32.mrb[0].mxu0
      %v3439 = vpop.f32.mrb[0].mxu0
      %v3440 = vadd.f32 %v3352, %v3439
      %v3441 = vpop.f32.mrb[0].mxu0
      %3442 = vmatprep.mubr.bf16.mxu0 0
      %3443 = vmatmul.mubr.bf16.gmra.mrb[0].mxu0 %v3295
      %v3444 = vpop.f32.mrb[0].mxu0
      %v3445 = vadd.f32 %v3352, %v3444
      %v3446 = vpop.f32.mrb[0].mxu0
      %v3447 = vpop.f32.mrb[0].mxu0
      %v3448 = vadd.f32 %v3352, %v3447
      %v3449 = vpop.f32.mrb[0].mxu0
      %3450 = vmatprep.mubr.bf16.mxu0 0
      %3451 = vmatmul.mubr.bf16.gmra.mrb[0].mxu0 %v3296
      %v3452 = vpop.f32.mrb[0].mxu0
      %v3453 = vadd.f32 %v3352, %v3452
      %v3454 = vpop.f32.mrb[0].mxu0
      %v3455 = vpop.f32.mrb[0].mxu0
      %v3456 = vadd.f32 %v3352, %v3455
      %v3457 = vpop.f32.mrb[0].mxu0
      %3458 = vmatprep.mubr.bf16.mxu0 0
      %3459 = vmatmul.mubr.bf16.gmra.mrb[0].mxu0 %v3297
      %v3460 = vpop.f32.mrb[0].mxu0
      %v3461 = vadd.f32 %v3352, %v3460
      %v3462 = vpop.f32.mrb[0].mxu0
      %v3463 = vpop.f32.mrb[0].mxu0
      %v3464 = vadd.f32 %v3352, %v3463
      %v3465 = vpop.f32.mrb[0].mxu0
      %3466 = vmatprep.mubr.bf16.mxu0 0
      %3467 = vmatmul.mubr.bf16.gmra.mrb[0].mxu0 %v3298
      %v3468 = vpop.f32.mrb[0].mxu0
      %v3469 = vadd.f32 %v3352, %v3468
      %v3470 = vpop.f32.mrb[0].mxu0
      %v3471 = vpop.f32.mrb[0].mxu0
      %v3472 = vadd.f32 %v3352, %v3471
      %v3473 = vpop.f32.mrb[0].mxu0
      %3474 = vmatprep.mubr.bf16.mxu0 0
      %3475 = vmatmul.mubr.bf16.gmra.mrb[0].mxu0 %v3299
      %v3476 = vpop.f32.mrb[0].mxu0
      %v3477 = vadd.f32 %v3352, %v3476
      %v3478 = vpop.f32.mrb[0].mxu0
      %v3479 = vpop.f32.mrb[0].mxu0
      %v3480 = vadd.f32 %v3352, %v3479
      %v3481 = vpop.f32.mrb[0].mxu0
      %3482 = vmatprep.mubr.bf16.mxu0 0
      %3483 = vmatmul.mubr.bf16.gmra.mrb[0].mxu0 %v3300
      %v3484 = vpop.f32.mrb[0].mxu0
      %v3485 = vadd.f32 %v3352, %v3484
      %v3486 = vpop.f32.mrb[0].mxu0
      %v3487 = vpop.f32.mrb[0].mxu0
      %v3488 = vadd.f32 %v3352, %v3487
      %v3489 = vpop.f32.mrb[0].mxu0
      %3490 = vmatprep.mubr.bf16.mxu0 0
      %3491 = vmatmul.mubr.bf16.gmra.mrb[0].mxu0 %v3301
      %v3492 = vpop.f32.mrb[0].mxu0
      %v3493 = vadd.f32 %v3352, %v3492
      %v3494 = vpop.f32.mrb[0].mxu0
      %v3495 = vpop.f32.mrb[0].mxu0
      %v3496 = vadd.f32 %v3352, %v3495
      %v3497 = vpop.f32.mrb[0].mxu0
      %3498 = vmatprep.mubr.bf16.mxu0 0
      %3499 = vmatmul.mubr.bf16.gmra.mrb[0].mxu0 %v3302
      %v3500 = vpop.f32.mrb[0].mxu0
      %v3501 = vadd.f32 %v3352, %v3500
      %v3502 = vpop.f32.mrb[0].mxu0
      %v3503 = vpop.f32.mrb[0].mxu0
      %v3504 = vadd.f32 %v3352, %v3503
      %v3505 = vpop.f32.mrb[0].mxu0
      %3506 = vmatprep.mubr.bf16.mxu0 0
      %3507 = vmatmul.mubr.bf16.gmra.mrb[0].mxu0 %v3303
      %v3508 = vpop.f32.mrb[0].mxu0
      %v3509 = vadd.f32 %v3352, %v3508
      %v3510 = vpop.f32.mrb[0].mxu0
      %v3511 = vpop.f32.mrb[0].mxu0
      %v3512 = vadd.f32 %v3352, %v3511
      %v3513 = vpop.f32.mrb[0].mxu0
      %3514 = vmatprep.mubr.bf16.mxu0 0
      %3515 = vmatmul.mubr.bf16.gmra.mrb[0].mxu0 %v3304
      %v3516 = vpop.f32.mrb[0].mxu0
      %v3517 = vadd.f32 %v3352, %v3516
      %v3518 = vpop.f32.mrb[0].mxu0
      %v3519 = vpop.f32.mrb[0].mxu0
      %v3520 = vadd.f32 %v3352, %v3519
      %v3521 = vpop.f32.mrb[0].mxu0
      %3522 = vmatprep.mubr.bf16.mxu0 0
      %3523 = vmatmul.mubr.bf16.gmra.mrb[0].mxu0 %v3305
      %v3524 = vpop.f32.mrb[0].mxu0
      %v3525 = vadd.f32 %v3352, %v3524
      %v3526 = vpop.f32.mrb[0].mxu0
      %v3527 = vpop.f32.mrb[0].mxu0
      %v3528 = vadd.f32 %v3352, %v3527
      %v3529 = vpop.f32.mrb[0].mxu0
      %3530 = vmatprep.mubr.bf16.mxu0 0
      %3531 = vmatmul.mubr.bf16.gmra.mrb[0].mxu0 %v3306
      %v3532 = vpop.f32.mrb[0].mxu0
      %v3533 = vadd.f32 %v3352, %v3532
      %v3534 = vpop.f32.mrb[0].mxu0
      %v3535 = vpop.f32.mrb[0].mxu0
      %v3536 = vadd.f32 %v3352, %v3535
      %v3537 = vpop.f32.mrb[0].mxu0
      %3538 = vmatprep.mubr.bf16.mxu0 0
      %3539 = vmatmul.mubr.bf16.gmra.mrb[0].mxu0 %v3307
      %v3540 = vpop.f32.mrb[0].mxu0
      %v3541 = vadd.f32 %v3352, %v3540
      %v3542 = vpop.f32.mrb[0].mxu0
      %v3543 = vpop.f32.mrb[0].mxu0
      %v3544 = vadd.f32 %v3352, %v3543
      %v3545 = vpop.f32.mrb[0].mxu0
      %3546 = vmatprep.mubr.bf16.mxu0 0
      %3547 = vmatmul.mubr.bf16.gmra.mrb[0].mxu0 %v3308
      %v3548 = vpop.f32.mrb[0].mxu0
      %v3549 = vadd.f32 %v3352, %v3548
      %v3550 = vpop.f32.mrb[0].mxu0
      %v3551 = vpop.f32.mrb[0].mxu0
      %v3552 = vadd.f32 %v3352, %v3551
      %v3553 = vpop.f32.mrb[0].mxu0
      %3554 = vmatprep.mubr.bf16.mxu0 0
      %3555 = vmatmul.mubr.bf16.gmra.mrb[0].mxu0 %v3309
      %v3556 = vpop.f32.mrb[0].mxu0
      %v3557 = vadd.f32 %v3352, %v3556
      %v3558 = vpop.f32.mrb[0].mxu0
      %v3559 = vpop.f32.mrb[0].mxu0
      %v3560 = vadd.f32 %v3352, %v3559
      %v3561 = vpop.f32.mrb[0].mxu0
      %3562 = vdwg.mxu0
      %v3563 = vmax.f32 %v3437, 0.0
      %v3564 = vmax.f32 %v3440, 0.0
      %v3565 = vmax.f32 %v3445, 0.0
      %v3566 = vmax.f32 %v3448, 0.0
      %v3567 = vmax.f32 %v3453, 0.0
      %v3568 = vmax.f32 %v3456, 0.0
      %v3569 = vmax.f32 %v3461, 0.0
      %v3570 = vmax.f32 %v3464, 0.0
      %v3571 = vmax.f32 %v3469, 0.0
      %v3572 = vmax.f32 %v3472, 0.0
      %v3573 = vmax.f32 %v3477, 0.0
      %v3574 = vmax.f32 %v3480, 0.0
      %v3575 = vmax.f32 %v3485, 0.0
      %v3576 = vmax.f32 %v3488, 0.0
      %v3577 = vmax.f32 %v3493, 0.0
      %v3578 = vmax.f32 %v3496, 0.0
      %v3579 = vmax.f32 %v3501, 0.0
      %v3580 = vmax.f32 %v3504, 0.0
      %v3581 = vmax.f32 %v3509, 0.0
      %v3582 = vmax.f32 %v3512, 0.0
      %v3583 = vmax.f32 %v3517, 0.0
      %v3584 = vmax.f32 %v3520, 0.0
      %v3585 = vmax.f32 %v3525, 0.0
      %v3586 = vmax.f32 %v3528, 0.0
      %v3587 = vmax.f32 %v3533, 0.0
      %v3588 = vmax.f32 %v3536, 0.0
      %v3589 = vmax.f32 %v3541, 0.0
      %v3590 = vmax.f32 %v3544, 0.0
      %v3591 = vmax.f32 %v3549, 0.0
      %v3592 = vmax.f32 %v3552, 0.0
      %v3593 = vmax.f32 %v3557, 0.0
      %v3594 = vmax.f32 %v3560, 0.0
      %s3595 = scalar_lea.vmem [#allocation3], 16
      %3596 = vst [vmem:[%s3595] sm:$0xff] %v3563
      %3597 = vst [vmem:[%s3595 + $0x8] sm:$0xff] %v3564
      %3598 = vst [vmem:[%s3595 + $0x10] sm:$0xff] %v3565
      %3599 = vst [vmem:[%s3595 + $0x18] sm:$0xff] %v3566
      %3600 = vst [vmem:[%s3595 + $0x20] sm:$0xff] %v3567
      %3601 = vst [vmem:[%s3595 + $0x28] sm:$0xff] %v3568
      %3602 = vst [vmem:[%s3595 + $0x30] sm:$0xff] %v3569
      %3603 = vst [vmem:[%s3595 + $0x38] sm:$0xff] %v3570
      %3604 = vst [vmem:[%s3595 + $0x40] sm:$0xff] %v3571
      %3605 = vst [vmem:[%s3595 + $0x48] sm:$0xff] %v3572
      %3606 = vst [vmem:[%s3595 + $0x50] sm:$0xff] %v3573
      %3607 = vst [vmem:[%s3595 + $0x58] sm:$0xff] %v3574
      %3608 = vst [vmem:[%s3595 + $0x60] sm:$0xff] %v3575
      %3609 = vst [vmem:[%s3595 + $0x68] sm:$0xff] %v3576
      %3610 = vst [vmem:[%s3595 + $0x70] sm:$0xff] %v3577
      %3611 = vst [vmem:[%s3595 + $0x78] sm:$0xff] %v3578
      %3612 = vst [vmem:[%s3595 + $0x80] sm:$0xff] %v3579
      %3613 = vst [vmem:[%s3595 + $0x88] sm:$0xff] %v3580
      %3614 = vst [vmem:[%s3595 + $0x90] sm:$0xff] %v3581
      %3615 = vst [vmem:[%s3595 + $0x98] sm:$0xff] %v3582
      %3616 = vst [vmem:[%s3595 + $0xa0] sm:$0xff] %v3583
      %3617 = vst [vmem:[%s3595 + $0xa8] sm:$0xff] %v3584
      %3618 = vst [vmem:[%s3595 + $0xb0] sm:$0xff] %v3585
      %3619 = vst [vmem:[%s3595 + $0xb8] sm:$0xff] %v3586
      %3620 = vst [vmem:[%s3595 + $0xc0] sm:$0xff] %v3587
      %3621 = vst [vmem:[%s3595 + $0xc8] sm:$0xff] %v3588
      %3622 = vst [vmem:[%s3595 + $0xd0] sm:$0xff] %v3589
      %3623 = vst [vmem:[%s3595 + $0xd8] sm:$0xff] %v3590
      %3624 = vst [vmem:[%s3595 + $0xe0] sm:$0xff] %v3591
      %3625 = vst [vmem:[%s3595 + $0xe8] sm:$0xff] %v3592
      %3626 = vst [vmem:[%s3595 + $0xf0] sm:$0xff] %v3593
      %3627 = vst [vmem:[%s3595 + $0xf8] sm:$0xff] %v3594
      %v3628 = vld [vmem:[#allocation3] sm:$0xff]
      %v3629 = vld [vmem:[#allocation3 + $0x8] sm:$0xff]
      %v3630 = vld [vmem:[#allocation3 + $0x20] sm:$0xff]
      %v3631 = vld [vmem:[#allocation3 + $0x28] sm:$0xff]
      %v3632 = vld [vmem:[#allocation3 + $0x40] sm:$0xff]
      %v3633 = vld [vmem:[#allocation3 + $0x48] sm:$0xff]
      %v3634 = vld [vmem:[#allocation3 + $0x60] sm:$0xff]
      %v3635 = vld [vmem:[#allocation3 + $0x68] sm:$0xff]
      %v3636 = vld [vmem:[#allocation3 + $0x80] sm:$0xff]
      %v3637 = vld [vmem:[#allocation3 + $0x88] sm:$0xff]
      %v3638 = vld [vmem:[#allocation3 + $0xa0] sm:$0xff]
      %v3639 = vld [vmem:[#allocation3 + $0xa8] sm:$0xff]
      %v3640 = vld [vmem:[#allocation3 + $0xc0] sm:$0xff]
      %v3641 = vld [vmem:[#allocation3 + $0xc8] sm:$0xff]
      %v3642 = vld [vmem:[#allocation3 + $0xe0] sm:$0xff]
      %v3643 = vld [vmem:[#allocation3 + $0xe8] sm:$0xff]
      %v3644 = vld [vmem:[%s3595] sm:$0xff]
      %v3645 = vld [vmem:[%s3595 + $0x8] sm:$0xff]
      %v3646 = vld [vmem:[%s3595 + $0x20] sm:$0xff]
      %v3647 = vld [vmem:[%s3595 + $0x28] sm:$0xff]
      %v3648 = vld [vmem:[%s3595 + $0x40] sm:$0xff]
      %v3649 = vld [vmem:[%s3595 + $0x48] sm:$0xff]
      %v3650 = vld [vmem:[%s3595 + $0x60] sm:$0xff]
      %v3651 = vld [vmem:[%s3595 + $0x68] sm:$0xff]
      %v3652 = vld [vmem:[%s3595 + $0x80] sm:$0xff]
      %v3653 = vld [vmem:[%s3595 + $0x88] sm:$0xff]
      %v3654 = vld [vmem:[%s3595 + $0xa0] sm:$0xff]
      %v3655 = vld [vmem:[%s3595 + $0xa8] sm:$0xff]
      %v3656 = vld [vmem:[%s3595 + $0xc0] sm:$0xff]
      %v3657 = vld [vmem:[%s3595 + $0xc8] sm:$0xff]
      %v3658 = vld [vmem:[%s3595 + $0xe0] sm:$0xff]
      %v3659 = vld [vmem:[%s3595 + $0xe8] sm:$0xff]
      %v3660 = vmax.f32 %v3628, %v3644
      %v3661 = vmax.f32 %v3629, %v3645
      %v3662 = vmax.f32 %v3630, %v3646
      %v3663 = vmax.f32 %v3631, %v3647
      %v3664 = vmax.f32 %v3632, %v3648
      %v3665 = vmax.f32 %v3633, %v3649
      %v3666 = vmax.f32 %v3634, %v3650
      %v3667 = vmax.f32 %v3635, %v3651
      %v3668 = vmax.f32 %v3636, %v3652
      %v3669 = vmax.f32 %v3637, %v3653
      %v3670 = vmax.f32 %v3638, %v3654
      %v3671 = vmax.f32 %v3639, %v3655
      %v3672 = vmax.f32 %v3640, %v3656
      %v3673 = vmax.f32 %v3641, %v3657
      %v3674 = vmax.f32 %v3642, %v3658
      %v3675 = vmax.f32 %v3643, %v3659
      %s3676 = scalar_lea.vmem [#allocation3], 32
      %v3677 = vld [vmem:[%s3676] sm:$0xff]
      %v3678 = vld [vmem:[%s3676 + $0x8] sm:$0xff]
      %v3679 = vld [vmem:[%s3676 + $0x20] sm:$0xff]
      %v3680 = vld [vmem:[%s3676 + $0x28] sm:$0xff]
      %v3681 = vld [vmem:[%s3676 + $0x40] sm:$0xff]
      %v3682 = vld [vmem:[%s3676 + $0x48] sm:$0xff]
      %v3683 = vld [vmem:[%s3676 + $0x60] sm:$0xff]
      %v3684 = vld [vmem:[%s3676 + $0x68] sm:$0xff]
      %v3685 = vld [vmem:[%s3676 + $0x80] sm:$0xff]
      %v3686 = vld [vmem:[%s3676 + $0x88] sm:$0xff]
      %v3687 = vld [vmem:[%s3676 + $0xa0] sm:$0xff]
      %v3688 = vld [vmem:[%s3676 + $0xa8] sm:$0xff]
      %v3689 = vld [vmem:[%s3676 + $0xc0] sm:$0xff]
      %v3690 = vld [vmem:[%s3676 + $0xc8] sm:$0xff]
      %v3691 = vld [vmem:[%s3676 + $0xe0] sm:$0xff]
      %v3692 = vld [vmem:[%s3676 + $0xe8] sm:$0xff]
      %v3693 = vmax.f32 %v3660, %v3677
      %v3694 = vmax.f32 %v3661, %v3678
      %v3695 = vmax.f32 %v3662, %v3679
      %v3696 = vmax.f32 %v3663, %v3680
      %v3697 = vmax.f32 %v3664, %v3681
      %v3698 = vmax.f32 %v3665, %v3682
      %v3699 = vmax.f32 %v3666, %v3683
      %v3700 = vmax.f32 %v3667, %v3684
      %v3701 = vmax.f32 %v3668, %v3685
      %v3702 = vmax.f32 %v3669, %v3686
      %v3703 = vmax.f32 %v3670, %v3687
      %v3704 = vmax.f32 %v3671, %v3688
      %v3705 = vmax.f32 %v3672, %v3689
      %v3706 = vmax.f32 %v3673, %v3690
      %v3707 = vmax.f32 %v3674, %v3691
      %v3708 = vmax.f32 %v3675, %v3692
      %3709 = vst [vmem:[#allocation4 + $0x1] sm:$0xff] %v3693
      %3710 = vst [vmem:[#allocation4 + $0x9] sm:$0xff] %v3694
      %3711 = vst [vmem:[#allocation4 + $0x19] sm:$0xff] %v3695
      %3712 = vst [vmem:[#allocation4 + $0x21] sm:$0xff] %v3696
      %3713 = vst [vmem:[#allocation4 + $0x31] sm:$0xff] %v3697
      %3714 = vst [vmem:[#allocation4 + $0x39] sm:$0xff] %v3698
      %3715 = vst [vmem:[#allocation4 + $0x49] sm:$0xff] %v3699
      %3716 = vst [vmem:[#allocation4 + $0x51] sm:$0xff] %v3700
      %3717 = vst [vmem:[#allocation4 + $0x61] sm:$0xff] %v3701
      %3718 = vst [vmem:[#allocation4 + $0x69] sm:$0xff] %v3702
      %3719 = vst [vmem:[#allocation4 + $0x79] sm:$0xff] %v3703
      %3720 = vst [vmem:[#allocation4 + $0x81] sm:$0xff] %v3704
      %3721 = vst [vmem:[#allocation4 + $0x91] sm:$0xff] %v3705
      %3722 = vst [vmem:[#allocation4 + $0x99] sm:$0xff] %v3706
      %3723 = vst [vmem:[#allocation4 + $0xa9] sm:$0xff] %v3707
      %3724 = vst [vmem:[#allocation4 + $0xb1] sm:$0xff] %v3708
      %v3725 = vld [vmem:[#allocation4] sm:$0xff]
      %v3726 = vld [vmem:[#allocation4 + $0x8] sm:$0xff]
      %v3727 = vld [vmem:[#allocation4 + $0x18] sm:$0xff]
      %v3728 = vld [vmem:[#allocation4 + $0x20] sm:$0xff]
      %v3729 = vld [vmem:[#allocation4 + $0x30] sm:$0xff]
      %v3730 = vld [vmem:[#allocation4 + $0x38] sm:$0xff]
      %v3731 = vld [vmem:[#allocation4 + $0x48] sm:$0xff]
      %v3732 = vld [vmem:[#allocation4 + $0x50] sm:$0xff]
      %v3733 = vld [vmem:[#allocation4 + $0x60] sm:$0xff]
      %v3734 = vld [vmem:[#allocation4 + $0x68] sm:$0xff]
      %v3735 = vld [vmem:[#allocation4 + $0x78] sm:$0xff]
      %v3736 = vld [vmem:[#allocation4 + $0x80] sm:$0xff]
      %v3737 = vld [vmem:[#allocation4 + $0x90] sm:$0xff]
      %v3738 = vld [vmem:[#allocation4 + $0x98] sm:$0xff]
      %v3739 = vld [vmem:[#allocation4 + $0xa8] sm:$0xff]
      %v3740 = vld [vmem:[#allocation4 + $0xb0] sm:$0xff]
      %v3741 = vld [vmem:[#allocation4 + $0x1] sm:$0xff]
      %v3742 = vld [vmem:[#allocation4 + $0x9] sm:$0xff]
      %v3743 = vld [vmem:[#allocation4 + $0x19] sm:$0xff]
      %v3744 = vld [vmem:[#allocation4 + $0x21] sm:$0xff]
      %v3745 = vld [vmem:[#allocation4 + $0x31] sm:$0xff]
      %v3746 = vld [vmem:[#allocation4 + $0x39] sm:$0xff]
      %v3747 = vld [vmem:[#allocation4 + $0x49] sm:$0xff]
      %v3748 = vld [vmem:[#allocation4 + $0x51] sm:$0xff]
      %v3749 = vld [vmem:[#allocation4 + $0x61] sm:$0xff]
      %v3750 = vld [vmem:[#allocation4 + $0x69] sm:$0xff]
      %v3751 = vld [vmem:[#allocation4 + $0x79] sm:$0xff]
      %v3752 = vld [vmem:[#allocation4 + $0x81] sm:$0xff]
      %v3753 = vld [vmem:[#allocation4 + $0x91] sm:$0xff]
      %v3754 = vld [vmem:[#allocation4 + $0x99] sm:$0xff]
      %v3755 = vld [vmem:[#allocation4 + $0xa9] sm:$0xff]
      %v3756 = vld [vmem:[#allocation4 + $0xb1] sm:$0xff]
      %v3757 = vmax.f32 %v3725, %v3741
      %v3758 = vmax.f32 %v3726, %v3742
      %v3759 = vmax.f32 %v3727, %v3743
      %v3760 = vmax.f32 %v3728, %v3744
      %v3761 = vmax.f32 %v3729, %v3745
      %v3762 = vmax.f32 %v3730, %v3746
      %v3763 = vmax.f32 %v3731, %v3747
      %v3764 = vmax.f32 %v3732, %v3748
      %v3765 = vmax.f32 %v3733, %v3749
      %v3766 = vmax.f32 %v3734, %v3750
      %v3767 = vmax.f32 %v3735, %v3751
      %v3768 = vmax.f32 %v3736, %v3752
      %v3769 = vmax.f32 %v3737, %v3753
      %v3770 = vmax.f32 %v3738, %v3754
      %v3771 = vmax.f32 %v3739, %v3755
      %v3772 = vmax.f32 %v3740, %v3756
      %v3773 = vld [vmem:[#allocation4 + $0x2] sm:$0xff]
      %v3774 = vld [vmem:[#allocation4 + $0xa] sm:$0xff]
      %v3775 = vld [vmem:[#allocation4 + $0x1a] sm:$0xff]
      %v3776 = vld [vmem:[#allocation4 + $0x22] sm:$0xff]
      %v3777 = vld [vmem:[#allocation4 + $0x32] sm:$0xff]
      %v3778 = vld [vmem:[#allocation4 + $0x3a] sm:$0xff]
      %v3779 = vld [vmem:[#allocation4 + $0x4a] sm:$0xff]
      %v3780 = vld [vmem:[#allocation4 + $0x52] sm:$0xff]
      %v3781 = vld [vmem:[#allocation4 + $0x62] sm:$0xff]
      %v3782 = vld [vmem:[#allocation4 + $0x6a] sm:$0xff]
      %v3783 = vld [vmem:[#allocation4 + $0x7a] sm:$0xff]
      %v3784 = vld [vmem:[#allocation4 + $0x82] sm:$0xff]
      %v3785 = vld [vmem:[#allocation4 + $0x92] sm:$0xff]
      %v3786 = vld [vmem:[#allocation4 + $0x9a] sm:$0xff]
      %v3787 = vld [vmem:[#allocation4 + $0xaa] sm:$0xff]
      %v3788 = vld [vmem:[#allocation4 + $0xb2] sm:$0xff]
      %v3789 = vmax.f32 %v3757, %v3773
      %v3790 = vmax.f32 %v3758, %v3774
      %v3791 = vmax.f32 %v3759, %v3775
      %v3792 = vmax.f32 %v3760, %v3776
      %v3793 = vmax.f32 %v3761, %v3777
      %v3794 = vmax.f32 %v3762, %v3778
      %v3795 = vmax.f32 %v3763, %v3779
      %v3796 = vmax.f32 %v3764, %v3780
      %v3797 = vmax.f32 %v3765, %v3781
      %v3798 = vmax.f32 %v3766, %v3782
      %v3799 = vmax.f32 %v3767, %v3783
      %v3800 = vmax.f32 %v3768, %v3784
      %v3801 = vmax.f32 %v3769, %v3785
      %v3802 = vmax.f32 %v3770, %v3786
      %v3803 = vmax.f32 %v3771, %v3787
      %v3804 = vmax.f32 %v3772, %v3788
      %3805 = vst [vmem:[%s170] sm:$0xff] %v3789
      %3806 = vst [vmem:[%s170 + $0x8] sm:$0xff] %v3790
      %3807 = vst [vmem:[%s170 + $0x10] sm:$0xff] %v3791
      %3808 = vst [vmem:[%s170 + $0x18] sm:$0xff] %v3792
      %3809 = vst [vmem:[%s170 + $0x20] sm:$0xff] %v3793
      %3810 = vst [vmem:[%s170 + $0x28] sm:$0xff] %v3794
      %3811 = vst [vmem:[%s170 + $0x30] sm:$0xff] %v3795
      %3812 = vst [vmem:[%s170 + $0x38] sm:$0xff] %v3796
      %3813 = vst [vmem:[%s170 + $0x40] sm:$0xff] %v3797
      %3814 = vst [vmem:[%s170 + $0x48] sm:$0xff] %v3798
      %3815 = vst [vmem:[%s170 + $0x50] sm:$0xff] %v3799
      %3816 = vst [vmem:[%s170 + $0x58] sm:$0xff] %v3800
      %3817 = vst [vmem:[%s170 + $0x60] sm:$0xff] %v3801
      %3818 = vst [vmem:[%s170 + $0x68] sm:$0xff] %v3802
      %3819 = vst [vmem:[%s170 + $0x70] sm:$0xff] %v3803
      %3820 = vst [vmem:[%s170 + $0x78] sm:$0xff] %v3804
      %p3821 = scmp.lt.s32.totalorder %s14, 1
      %s3822 = scalar_select %p3821, %s14, 1
      %s3823 = smul.addr %s3822, 16
      %s3824 = smul.addr %s3823, 8
      %s3825 = scalar_lea.vmem %s3, %s3824
      // Predicated region
      $region33: #{conv_layer_forward.1} parent=31 // pred_check
        %p3826 = pneg %p100
      $region34: #{conv_layer_forward.1} parent=31 // pred_check_branch
        %3828 = sbr.rel (%p3826) target = $region36
      $region35: #{conv_layer_forward.1} parent=31 // pred_region
        _
      $region36: #{conv_layer_forward.1} parent=31 // pred_fallthru
        _
    $region32: #{conv_layer_forward.1} parent=5 // pred_fallthru
      _
    %p3829 = scmp.le.s32.totalorder 2, %s9
    // Predicated region
    $region37: #{conv_layer_forward.1} parent=5 // pred_check
      %p3830 = pneg %p3829
    $region38: #{conv_layer_forward.1} parent=5 // pred_check_branch
      %3832 = sbr.rel (%p3830) target = $region40
    $region39: #{conv_layer_forward.1} parent=5 // pred_region
      %s3833 = ssub.s32 %s9, 2
      // Predicated region
      $region41: #{conv_layer_forward.1} parent=39 // pred_check
        %p3834 = pneg %p106
      $region42: #{conv_layer_forward.1} parent=39 // pred_check_branch
        %3836 = sbr.rel (%p3834) target = $region44
      $region43: #{conv_layer_forward.1} parent=39 // pred_region
        %p3837 = scmp.lt.s32.totalorder %s15, 1
        %s3838 = scalar_select %p3837, %s15, 1
        %s3839 = smul.addr %s3838, 16
        %s3840 = smul.addr %s3839, 8
        %s3841 = scalar_lea.vmem %s3, %s3840
      $region44: #{conv_layer_forward.1} parent=39 // pred_fallthru
        _
    $region40: #{conv_layer_forward.1} parent=5 // pred_fallthru
      _
  $region6: #{conv_layer_forward.1} parent=0 // loop_footer
    %s13 = sadd.s32 1, %s9
  $region7: #{conv_layer_forward.1} parent=0 // loop_footer_branch
    %8 = sbr.rel target = $region3
  $region8: #{conv_layer_forward.1} parent=0 // loop_exit
    _

</llo_original>
